<compile_context>
chip_gen: v7x
topology: tpu7x:2x2x1
jax: 0.10.0
libtpu: 0.0.40
codegen_flags: <defaults>
</compile_context>

<pallas_src>
import functools
import math

import jax
import jax.numpy as jnp
from jax.experimental import pallas as pl
from jax.experimental.pallas import tpu as pltpu

EMBED_DIM = 128
NUM_HEADS = 8
HEAD_DIM = EMBED_DIM // NUM_HEADS
FFN_DIM = 512
NUM_LAYERS = 2
LN_EPS = 1e-5


def _layernorm(x, gamma, beta):
    # x: (N, E) f32, gamma/beta: (1, E) f32 ; biased variance (matches PyTorch LN)
    mu = jnp.mean(x, axis=-1, keepdims=True)
    xc = x - mu
    var = jnp.mean(xc * xc, axis=-1, keepdims=True)
    return xc * jax.lax.rsqrt(var + LN_EPS) * gamma + beta


def encoder_kernel(x_ref, wqkv_ref, wo_ref, w1_ref, w2_ref, b1_ref, vec_ref,
                   o_ref, x_carry, *, batch_size):
    B = batch_size
    E = EMBED_DIM
    D = HEAD_DIM
    BS = x_ref.shape[0]
    S = BS // B

    layer = pl.program_id(0)

    @pl.when(layer == 0)
    def _():
        x_carry[...] = x_ref[...].astype(jnp.float32)

    x = x_carry[...]                                   # (B*S, E) f32 carry

    wqkv = wqkv_ref[...]      # (E, 3E) bf16 (1/sqrt(D) pre-folded into q cols)
    wo = wo_ref[...]          # (E, E)  bf16
    w1 = w1_ref[...]          # (E, F)  bf16
    w2 = w2_ref[...]          # (F, E)  bf16
    b1 = b1_ref[...]          # (1, F)  f32
    vecs = vec_ref[...]       # (9, E)  f32
    bq, bk, bv = vecs[0:1], vecs[1:2], vecs[2:3]
    bo, b2 = vecs[3:4], vecs[4:5]
    g1, be1 = vecs[5:6], vecs[6:7]
    g2, be2 = vecs[7:8], vecs[8:9]

    # --- multi-head self-attention ---------------------------------------
    xb = x.astype(jnp.bfloat16)
    qkv = jnp.dot(xb, wqkv, preferred_element_type=jnp.float32)   # (B*S, 3E)
    q = qkv[:, 0:E] + bq                    # attention scale already folded in
    k = qkv[:, E:2 * E] + bk
    v = qkv[:, 2 * E:3 * E] + bv

    # one cast + one reshape for the whole layer (not 24 of each per layer)
    qb = q.astype(jnp.bfloat16).reshape(B, S, E)
    kb = k.astype(jnp.bfloat16).reshape(B, S, E)
    vb = v.astype(jnp.bfloat16).reshape(B, S, E)

    heads = []
    for h in range(NUM_HEADS):              # static unroll; leading-batch einsums
        lo = h * D
        qh = qb[:, :, lo:lo + D]
        kh = kb[:, :, lo:lo + D]
        vh = vb[:, :, lo:lo + D]
        s = jnp.einsum('bsd,btd->bst', qh, kh,
                       preferred_element_type=jnp.float32)        # (B, S, S) f32
        s = s - jnp.max(s, axis=-1, keepdims=True)
        p = jnp.exp(s)
        p = p / jnp.sum(p, axis=-1, keepdims=True)                # exact softmax
        oh = jnp.einsum('bst,btd->bsd', p.astype(jnp.bfloat16), vh,
                        preferred_element_type=jnp.float32)       # (B, S, D) f32
        heads.append(oh)

    ctx = jnp.concatenate(heads, axis=-1).reshape(BS, E)          # (B*S, E) f32
    attn = jnp.dot(ctx.astype(jnp.bfloat16), wo,
                   preferred_element_type=jnp.float32) + bo

    # residual + LayerNorm 1 (post-norm; dropout = identity)
    x = _layernorm(x + attn, g1, be1)

    # --- feed-forward ------------------------------------------------------
    h1 = jnp.dot(x.astype(jnp.bfloat16), w1,
                 preferred_element_type=jnp.float32) + b1
    h1 = jnp.maximum(h1, 0.0)                                     # relu
    h2 = jnp.dot(h1.astype(jnp.bfloat16), w2,
                 preferred_element_type=jnp.float32) + b2

    # residual + LayerNorm 2
    x = _layernorm(x + h2, g2, be2)

    x_carry[...] = x
    o_ref[...] = x.astype(o_ref.dtype)


@jax.jit
def transformer_encoder(x, packed_params):
    # Mirrors: permute -> nn.TransformerEncoder(2 layers) -> permute
    # (net no-op on our batch-major layout).
    B, S, E = x.shape
    BS = B * S
    x2 = x.reshape(BS, E)
    wqkv, wo, w1, w2, b1, vecs = packed_params

    def per_layer_spec(arr):
        # block = one layer slice; layer dim squeezed out of the kernel ref
        return pl.BlockSpec((None,) + arr.shape[1:], lambda l: (l, 0, 0))

    out = pl.pallas_call(
        functools.partial(encoder_kernel, batch_size=B),
        out_shape=jax.ShapeDtypeStruct((BS, E), x.dtype),
        grid_spec=pltpu.PrefetchScalarGridSpec(
            num_scalar_prefetch=0,
            grid=(NUM_LAYERS,),
            in_specs=[
                pl.BlockSpec((BS, E), lambda l: (0, 0)),   # activations (resident)
                per_layer_spec(wqkv),
                per_layer_spec(wo),
                per_layer_spec(w1),
                per_layer_spec(w2),
                per_layer_spec(b1),
                per_layer_spec(vecs),
            ],
            out_specs=pl.BlockSpec((BS, E), lambda l: (0, 0)),
            scratch_shapes=[pltpu.VMEM((BS, E), jnp.float32)],
        ),
        compiler_params=pltpu.CompilerParams(
            dimension_semantics=("arbitrary",)),   # layers are sequential
    )(x2, wqkv, wo, w1, w2, b1, vecs)
    return out.reshape(B, S, E)


def init_layer_params(key):
    ks = jax.random.split(key, 6)
    scl = 0.05
    return {
        "wq": jax.random.normal(ks[0], (EMBED_DIM, EMBED_DIM), jnp.float32) * scl,
        "wk": jax.random.normal(ks[1], (EMBED_DIM, EMBED_DIM), jnp.float32) * scl,
        "wv": jax.random.normal(ks[2], (EMBED_DIM, EMBED_DIM), jnp.float32) * scl,
        "bq": jnp.zeros((1, EMBED_DIM), jnp.float32),
        "bk": jnp.zeros((1, EMBED_DIM), jnp.float32),
        "bv": jnp.zeros((1, EMBED_DIM), jnp.float32),
        "wo": jax.random.normal(ks[3], (EMBED_DIM, EMBED_DIM), jnp.float32) * scl,
        "bo": jnp.zeros((1, EMBED_DIM), jnp.float32),
        "w1": jax.random.normal(ks[4], (EMBED_DIM, FFN_DIM), jnp.float32) * scl,
        "b1": jnp.zeros((1, FFN_DIM), jnp.float32),
        "w2": jax.random.normal(ks[5], (FFN_DIM, EMBED_DIM), jnp.float32) * scl,
        "b2": jnp.zeros((1, EMBED_DIM), jnp.float32),
        "g1": jnp.ones((1, EMBED_DIM), jnp.float32),
        "be1": jnp.zeros((1, EMBED_DIM), jnp.float32),
        "g2": jnp.ones((1, EMBED_DIM), jnp.float32),
        "be2": jnp.zeros((1, EMBED_DIM), jnp.float32),
    }


def pack_params(layer_params_list):
    """Pack per-layer dicts into 6 stacked arrays (bf16 matmul weights).

    The 1/sqrt(head_dim) attention scale is folded into wq and bq here (host
    side, once) so the kernel never multiplies by it.
    """
    scale = 1.0 / math.sqrt(HEAD_DIM)
    wqkv = jnp.stack([jnp.concatenate(
        [p["wq"] * scale, p["wk"], p["wv"]], axis=1)
        for p in layer_params_list]).astype(jnp.bfloat16)              # (L, E, 3E)
    wo = jnp.stack([p["wo"] for p in layer_params_list]).astype(jnp.bfloat16)
    w1 = jnp.stack([p["w1"] for p in layer_params_list]).astype(jnp.bfloat16)
    w2 = jnp.stack([p["w2"] for p in layer_params_list]).astype(jnp.bfloat16)
    b1 = jnp.stack([p["b1"] for p in layer_params_list])               # (L, 1, F) f32
    vecs = jnp.stack([jnp.concatenate(
        [p["bq"] * scale, p["bk"], p["bv"], p["bo"], p["b2"],
         p["g1"], p["be1"], p["g2"], p["be2"]], axis=0)
        for p in layer_params_list])                                   # (L, 9, E) f32
    return (wqkv, wo, w1, w2, b1, vecs)


if __name__ == "__main__":
    key = jax.random.PRNGKey(0)
    k_x, k_p0, k_p1 = jax.random.split(key, 3)

    B, S = 2, 16
    x = jax.random.normal(k_x, (B, S, EMBED_DIM), jnp.float32)

    layer_params = [init_layer_params(k_p0), init_layer_params(k_p1)]
    packed = pack_params(layer_params)

    out = transformer_encoder(x, packed)
    out = jax.block_until_ready(out)
    assert out.shape == (B, S, EMBED_DIM)
    assert jnp.all(jnp.isfinite(out))
    print("KERNEL_OK")
</pallas_src>

<mosaic_0001>
module attributes {stable_mosaic.version = 11 : i64} {
  func.func @encoder_kernel(%arg0: i32, %arg1: memref<32x128xf32, #tpu.memory_space<vmem>>, %arg2: memref<1x128x384xbf16, #tpu.memory_space<vmem>>, %arg3: memref<1x128x128xbf16, #tpu.memory_space<vmem>>, %arg4: memref<1x128x512xbf16, #tpu.memory_space<vmem>>, %arg5: memref<1x512x128xbf16, #tpu.memory_space<vmem>>, %arg6: memref<1x1x512xf32, #tpu.memory_space<vmem>>, %arg7: memref<1x9x128xf32, #tpu.memory_space<vmem>>, %arg8: memref<32x128xf32, #tpu.memory_space<vmem>>, %arg9: memref<32x128xf32, #tpu.memory_space<vmem>>) attributes {dimension_semantics = [#tpu.dimension_semantics<arbitrary>], iteration_bounds = array<i64: 2>, scalar_prefetch = 0 : i64, scratch_operands = 1 : i64, tpu.core_type = #tpu.core_type<tc>, window_params = [{pipeline_mode = #tpu.pipeline_mode<synchronous>, transform_indices = @transform_0, window_bounds = array<i64: 32, 128>}, {transform_indices = @transform_1, window_bounds = array<i64: 1, 128, 384>}, {transform_indices = @transform_2, window_bounds = array<i64: 1, 128, 128>}, {transform_indices = @transform_3, window_bounds = array<i64: 1, 128, 512>}, {transform_indices = @transform_4, window_bounds = array<i64: 1, 512, 128>}, {transform_indices = @transform_5, window_bounds = array<i64: 1, 1, 512>}, {transform_indices = @transform_6, window_bounds = array<i64: 1, 9, 128>}, {pipeline_mode = #tpu.pipeline_mode<synchronous>, transform_indices = @transform_7, window_bounds = array<i64: 32, 128>}]} {
    %c0_i32 = arith.constant 0 : i32
    %0 = arith.cmpi eq, %arg0, %c0_i32 : i32
    %1 = arith.extui %0 : i1 to i32
    %c0_i32_0 = arith.constant 0 : i32
    %2 = arith.cmpi ne, %1, %c0_i32_0 : i32
    scf.if %2 {
      %c0_70 = arith.constant 0 : index
      %c0_71 = arith.constant 0 : index
      %222 = vector.load %arg1[%c0_70, %c0_71] : memref<32x128xf32, #tpu.memory_space<vmem>>, vector<32x128xf32>
      %c0_72 = arith.constant 0 : index
      %c0_73 = arith.constant 0 : index
      %223 = vector.load %arg9[%c0_72, %c0_73] : memref<32x128xf32, #tpu.memory_space<vmem>>, vector<32x128xf32>
      tpu.vector_store %arg9[%c0_72, %c0_73], %222 {strides = array<i32>} : memref<32x128xf32, #tpu.memory_space<vmem>>, vector<32x128xf32>,
    } else {
    }
    %c0 = arith.constant 0 : index
    %c0_1 = arith.constant 0 : index
    %3 = vector.load %arg9[%c0, %c0_1] : memref<32x128xf32, #tpu.memory_space<vmem>>, vector<32x128xf32>
    %c0_2 = arith.constant 0 : index
    %c0_3 = arith.constant 0 : index
    %c0_4 = arith.constant 0 : index
    %4 = vector.load %arg2[%c0_2, %c0_3, %c0_4] : memref<1x128x384xbf16, #tpu.memory_space<vmem>>, vector<1x128x384xbf16>
    %5 = vector.shape_cast %4 : vector<1x128x384xbf16> to vector<128x384xbf16>
    %c0_5 = arith.constant 0 : index
    %c0_6 = arith.constant 0 : index
    %c0_7 = arith.constant 0 : index
    %6 = vector.load %arg3[%c0_5, %c0_6, %c0_7] : memref<1x128x128xbf16, #tpu.memory_space<vmem>>, vector<1x128x128xbf16>
    %7 = vector.shape_cast %6 : vector<1x128x128xbf16> to vector<128x128xbf16>
    %c0_8 = arith.constant 0 : index
    %c0_9 = arith.constant 0 : index
    %c0_10 = arith.constant 0 : index
    %8 = vector.load %arg4[%c0_8, %c0_9, %c0_10] : memref<1x128x512xbf16, #tpu.memory_space<vmem>>, vector<1x128x512xbf16>
    %9 = vector.shape_cast %8 : vector<1x128x512xbf16> to vector<128x512xbf16>
    %c0_11 = arith.constant 0 : index
    %c0_12 = arith.constant 0 : index
    %c0_13 = arith.constant 0 : index
    %10 = vector.load %arg5[%c0_11, %c0_12, %c0_13] : memref<1x512x128xbf16, #tpu.memory_space<vmem>>, vector<1x512x128xbf16>
    %11 = vector.shape_cast %10 : vector<1x512x128xbf16> to vector<512x128xbf16>
    %c0_14 = arith.constant 0 : index
    %c0_15 = arith.constant 0 : index
    %c0_16 = arith.constant 0 : index
    %12 = vector.load %arg6[%c0_14, %c0_15, %c0_16] : memref<1x1x512xf32, #tpu.memory_space<vmem>>, vector<1x1x512xf32>
    %13 = vector.shape_cast %12 : vector<1x1x512xf32> to vector<1x512xf32>
    %c0_17 = arith.constant 0 : index
    %c0_18 = arith.constant 0 : index
    %c0_19 = arith.constant 0 : index
    %14 = vector.load %arg7[%c0_17, %c0_18, %c0_19] : memref<1x9x128xf32, #tpu.memory_space<vmem>>, vector<1x9x128xf32>
    %15 = vector.shape_cast %14 : vector<1x9x128xf32> to vector<9x128xf32>
    %16 = vector.extract_strided_slice %15 {offsets = [0, 0], sizes = [1, 128], strides = [1, 1]} : vector<9x128xf32> to vector<1x128xf32>
    %17 = vector.extract_strided_slice %15 {offsets = [1, 0], sizes = [1, 128], strides = [1, 1]} : vector<9x128xf32> to vector<1x128xf32>
    %18 = vector.extract_strided_slice %15 {offsets = [2, 0], sizes = [1, 128], strides = [1, 1]} : vector<9x128xf32> to vector<1x128xf32>
    %19 = vector.extract_strided_slice %15 {offsets = [3, 0], sizes = [1, 128], strides = [1, 1]} : vector<9x128xf32> to vector<1x128xf32>
    %20 = vector.extract_strided_slice %15 {offsets = [4, 0], sizes = [1, 128], strides = [1, 1]} : vector<9x128xf32> to vector<1x128xf32>
    %21 = vector.extract_strided_slice %15 {offsets = [5, 0], sizes = [1, 128], strides = [1, 1]} : vector<9x128xf32> to vector<1x128xf32>
    %22 = vector.extract_strided_slice %15 {offsets = [6, 0], sizes = [1, 128], strides = [1, 1]} : vector<9x128xf32> to vector<1x128xf32>
    %23 = vector.extract_strided_slice %15 {offsets = [7, 0], sizes = [1, 128], strides = [1, 1]} : vector<9x128xf32> to vector<1x128xf32>
    %24 = vector.extract_strided_slice %15 {offsets = [8, 0], sizes = [1, 128], strides = [1, 1]} : vector<9x128xf32> to vector<1x128xf32>
    %25 = arith.truncf %3 : vector<32x128xf32> to vector<32x128xbf16>
    %cst = arith.constant dense<0.000000e+00> : vector<32x384xf32>
    %26 = tpu.matmul %25, %5, %cst {dimension_numbers = #tpu.dot_dimension_numbers<[1], [0], [0], [1], [0, 0, 1, 1], [], []>} : vector<32x128xbf16>, vector<128x384xbf16>, vector<32x384xf32> -> vector<32x384xf32>
    %27 = vector.extract_strided_slice %26 {offsets = [0, 0], sizes = [32, 128], strides = [1, 1]} : vector<32x384xf32> to vector<32x128xf32>
    %28 = vector.broadcast %16 : vector<1x128xf32> to vector<32x128xf32>
    %29 = arith.addf %27, %28 : vector<32x128xf32>
    %30 = vector.extract_strided_slice %26 {offsets = [0, 128], sizes = [32, 128], strides = [1, 1]} : vector<32x384xf32> to vector<32x128xf32>
    %31 = vector.broadcast %17 : vector<1x128xf32> to vector<32x128xf32>
    %32 = arith.addf %30, %31 : vector<32x128xf32>
    %33 = vector.extract_strided_slice %26 {offsets = [0, 256], sizes = [32, 128], strides = [1, 1]} : vector<32x384xf32> to vector<32x128xf32>
    %34 = vector.broadcast %18 : vector<1x128xf32> to vector<32x128xf32>
    %35 = arith.addf %33, %34 : vector<32x128xf32>
    %36 = arith.truncf %29 : vector<32x128xf32> to vector<32x128xbf16>
    %37 = vector.shape_cast %36 : vector<32x128xbf16> to vector<2x16x128xbf16>
    %38 = arith.truncf %32 : vector<32x128xf32> to vector<32x128xbf16>
    %39 = vector.shape_cast %38 : vector<32x128xbf16> to vector<2x16x128xbf16>
    %40 = arith.truncf %35 : vector<32x128xf32> to vector<32x128xbf16>
    %41 = vector.shape_cast %40 : vector<32x128xbf16> to vector<2x16x128xbf16>
    %42 = vector.extract_strided_slice %37 {offsets = [0, 0, 0], sizes = [2, 16, 16], strides = [1, 1, 1]} : vector<2x16x128xbf16> to vector<2x16x16xbf16>
    %43 = vector.extract_strided_slice %39 {offsets = [0, 0, 0], sizes = [2, 16, 16], strides = [1, 1, 1]} : vector<2x16x128xbf16> to vector<2x16x16xbf16>
    %44 = vector.extract_strided_slice %41 {offsets = [0, 0, 0], sizes = [2, 16, 16], strides = [1, 1, 1]} : vector<2x16x128xbf16> to vector<2x16x16xbf16>
    "tpu.trace_start"() <{level = 10 : i32, message = "bsd,btd->bst"}> : () -> ()
    %cst_20 = arith.constant dense<0.000000e+00> : vector<2x16x16xf32>
    %45 = tpu.matmul %42, %43, %cst_20 {dimension_numbers = #tpu.dot_dimension_numbers<[2], [2], [1], [1], [0, 0, 0, 1, 1, 1], [0], [0]>} : vector<2x16x16xbf16>, vector<2x16x16xbf16>, vector<2x16x16xf32> -> vector<2x16x16xf32>
    "tpu.trace_stop"() : () -> ()
    %cst_21 = arith.constant dense<0xFF800000> : vector<2x16xf32>
    %46 = vector.multi_reduction <maximumf>, %45, %cst_21 [2] : vector<2x16x16xf32> to vector<2x16xf32>
    %47 = vector.shape_cast %46 : vector<2x16xf32> to vector<2x16x1xf32>
    %48 = vector.broadcast %47 : vector<2x16x1xf32> to vector<2x16x16xf32>
    %49 = arith.subf %45, %48 : vector<2x16x16xf32>
    %50 = math.exp %49 : vector<2x16x16xf32>
    %cst_22 = arith.constant dense<0.000000e+00> : vector<2x16xf32>
    %51 = vector.multi_reduction <add>, %50, %cst_22 [2] : vector<2x16x16xf32> to vector<2x16xf32>
    %52 = vector.shape_cast %51 : vector<2x16xf32> to vector<2x16x1xf32>
    %53 = vector.broadcast %52 : vector<2x16x1xf32> to vector<2x16x16xf32>
    %54 = arith.divf %50, %53 : vector<2x16x16xf32>
    %55 = arith.truncf %54 : vector<2x16x16xf32> to vector<2x16x16xbf16>
    "tpu.trace_start"() <{level = 10 : i32, message = "bst,btd->bsd"}> : () -> ()
    %cst_23 = arith.constant dense<0.000000e+00> : vector<2x16x16xf32>
    %56 = tpu.matmul %55, %44, %cst_23 {dimension_numbers = #tpu.dot_dimension_numbers<[2], [1], [1], [2], [0, 0, 0, 1, 1, 2], [0], [0]>} : vector<2x16x16xbf16>, vector<2x16x16xbf16>, vector<2x16x16xf32> -> vector<2x16x16xf32>
    "tpu.trace_stop"() : () -> ()
    %57 = vector.extract_strided_slice %37 {offsets = [0, 0, 16], sizes = [2, 16, 16], strides = [1, 1, 1]} : vector<2x16x128xbf16> to vector<2x16x16xbf16>
    %58 = vector.extract_strided_slice %39 {offsets = [0, 0, 16], sizes = [2, 16, 16], strides = [1, 1, 1]} : vector<2x16x128xbf16> to vector<2x16x16xbf16>
    %59 = vector.extract_strided_slice %41 {offsets = [0, 0, 16], sizes = [2, 16, 16], strides = [1, 1, 1]} : vector<2x16x128xbf16> to vector<2x16x16xbf16>
    "tpu.trace_start"() <{level = 10 : i32, message = "bsd,btd->bst"}> : () -> ()
    %cst_24 = arith.constant dense<0.000000e+00> : vector<2x16x16xf32>
    %60 = tpu.matmul %57, %58, %cst_24 {dimension_numbers = #tpu.dot_dimension_numbers<[2], [2], [1], [1], [0, 0, 0, 1, 1, 1], [0], [0]>} : vector<2x16x16xbf16>, vector<2x16x16xbf16>, vector<2x16x16xf32> -> vector<2x16x16xf32>
    "tpu.trace_stop"() : () -> ()
    %cst_25 = arith.constant dense<0xFF800000> : vector<2x16xf32>
    %61 = vector.multi_reduction <maximumf>, %60, %cst_25 [2] : vector<2x16x16xf32> to vector<2x16xf32>
    %62 = vector.shape_cast %61 : vector<2x16xf32> to vector<2x16x1xf32>
    %63 = vector.broadcast %62 : vector<2x16x1xf32> to vector<2x16x16xf32>
    %64 = arith.subf %60, %63 : vector<2x16x16xf32>
    %65 = math.exp %64 : vector<2x16x16xf32>
    %cst_26 = arith.constant dense<0.000000e+00> : vector<2x16xf32>
    %66 = vector.multi_reduction <add>, %65, %cst_26 [2] : vector<2x16x16xf32> to vector<2x16xf32>
    %67 = vector.shape_cast %66 : vector<2x16xf32> to vector<2x16x1xf32>
    %68 = vector.broadcast %67 : vector<2x16x1xf32> to vector<2x16x16xf32>
    %69 = arith.divf %65, %68 : vector<2x16x16xf32>
    %70 = arith.truncf %69 : vector<2x16x16xf32> to vector<2x16x16xbf16>
    "tpu.trace_start"() <{level = 10 : i32, message = "bst,btd->bsd"}> : () -> ()
    %cst_27 = arith.constant dense<0.000000e+00> : vector<2x16x16xf32>
    %71 = tpu.matmul %70, %59, %cst_27 {dimension_numbers = #tpu.dot_dimension_numbers<[2], [1], [1], [2], [0, 0, 0, 1, 1, 2], [0], [0]>} : vector<2x16x16xbf16>, vector<2x16x16xbf16>, vector<2x16x16xf32> -> vector<2x16x16xf32>
    "tpu.trace_stop"() : () -> ()
    %72 = vector.extract_strided_slice %37 {offsets = [0, 0, 32], sizes = [2, 16, 16], strides = [1, 1, 1]} : vector<2x16x128xbf16> to vector<2x16x16xbf16>
    %73 = vector.extract_strided_slice %39 {offsets = [0, 0, 32], sizes = [2, 16, 16], strides = [1, 1, 1]} : vector<2x16x128xbf16> to vector<2x16x16xbf16>
    %74 = vector.extract_strided_slice %41 {offsets = [0, 0, 32], sizes = [2, 16, 16], strides = [1, 1, 1]} : vector<2x16x128xbf16> to vector<2x16x16xbf16>
    "tpu.trace_start"() <{level = 10 : i32, message = "bsd,btd->bst"}> : () -> ()
    %cst_28 = arith.constant dense<0.000000e+00> : vector<2x16x16xf32>
    %75 = tpu.matmul %72, %73, %cst_28 {dimension_numbers = #tpu.dot_dimension_numbers<[2], [2], [1], [1], [0, 0, 0, 1, 1, 1], [0], [0]>} : vector<2x16x16xbf16>, vector<2x16x16xbf16>, vector<2x16x16xf32> -> vector<2x16x16xf32>
    "tpu.trace_stop"() : () -> ()
    %cst_29 = arith.constant dense<0xFF800000> : vector<2x16xf32>
    %76 = vector.multi_reduction <maximumf>, %75, %cst_29 [2] : vector<2x16x16xf32> to vector<2x16xf32>
    %77 = vector.shape_cast %76 : vector<2x16xf32> to vector<2x16x1xf32>
    %78 = vector.broadcast %77 : vector<2x16x1xf32> to vector<2x16x16xf32>
    %79 = arith.subf %75, %78 : vector<2x16x16xf32>
    %80 = math.exp %79 : vector<2x16x16xf32>
    %cst_30 = arith.constant dense<0.000000e+00> : vector<2x16xf32>
    %81 = vector.multi_reduction <add>, %80, %cst_30 [2] : vector<2x16x16xf32> to vector<2x16xf32>
    %82 = vector.shape_cast %81 : vector<2x16xf32> to vector<2x16x1xf32>
    %83 = vector.broadcast %82 : vector<2x16x1xf32> to vector<2x16x16xf32>
    %84 = arith.divf %80, %83 : vector<2x16x16xf32>
    %85 = arith.truncf %84 : vector<2x16x16xf32> to vector<2x16x16xbf16>
    "tpu.trace_start"() <{level = 10 : i32, message = "bst,btd->bsd"}> : () -> ()
    %cst_31 = arith.constant dense<0.000000e+00> : vector<2x16x16xf32>
    %86 = tpu.matmul %85, %74, %cst_31 {dimension_numbers = #tpu.dot_dimension_numbers<[2], [1], [1], [2], [0, 0, 0, 1, 1, 2], [0], [0]>} : vector<2x16x16xbf16>, vector<2x16x16xbf16>, vector<2x16x16xf32> -> vector<2x16x16xf32>
    "tpu.trace_stop"() : () -> ()
    %87 = vector.extract_strided_slice %37 {offsets = [0, 0, 48], sizes = [2, 16, 16], strides = [1, 1, 1]} : vector<2x16x128xbf16> to vector<2x16x16xbf16>
    %88 = vector.extract_strided_slice %39 {offsets = [0, 0, 48], sizes = [2, 16, 16], strides = [1, 1, 1]} : vector<2x16x128xbf16> to vector<2x16x16xbf16>
    %89 = vector.extract_strided_slice %41 {offsets = [0, 0, 48], sizes = [2, 16, 16], strides = [1, 1, 1]} : vector<2x16x128xbf16> to vector<2x16x16xbf16>
    "tpu.trace_start"() <{level = 10 : i32, message = "bsd,btd->bst"}> : () -> ()
    %cst_32 = arith.constant dense<0.000000e+00> : vector<2x16x16xf32>
    %90 = tpu.matmul %87, %88, %cst_32 {dimension_numbers = #tpu.dot_dimension_numbers<[2], [2], [1], [1], [0, 0, 0, 1, 1, 1], [0], [0]>} : vector<2x16x16xbf16>, vector<2x16x16xbf16>, vector<2x16x16xf32> -> vector<2x16x16xf32>
    "tpu.trace_stop"() : () -> ()
    %cst_33 = arith.constant dense<0xFF800000> : vector<2x16xf32>
    %91 = vector.multi_reduction <maximumf>, %90, %cst_33 [2] : vector<2x16x16xf32> to vector<2x16xf32>
    %92 = vector.shape_cast %91 : vector<2x16xf32> to vector<2x16x1xf32>
    %93 = vector.broadcast %92 : vector<2x16x1xf32> to vector<2x16x16xf32>
    %94 = arith.subf %90, %93 : vector<2x16x16xf32>
    %95 = math.exp %94 : vector<2x16x16xf32>
    %cst_34 = arith.constant dense<0.000000e+00> : vector<2x16xf32>
    %96 = vector.multi_reduction <add>, %95, %cst_34 [2] : vector<2x16x16xf32> to vector<2x16xf32>
    %97 = vector.shape_cast %96 : vector<2x16xf32> to vector<2x16x1xf32>
    %98 = vector.broadcast %97 : vector<2x16x1xf32> to vector<2x16x16xf32>
    %99 = arith.divf %95, %98 : vector<2x16x16xf32>
    %100 = arith.truncf %99 : vector<2x16x16xf32> to vector<2x16x16xbf16>
    "tpu.trace_start"() <{level = 10 : i32, message = "bst,btd->bsd"}> : () -> ()
    %cst_35 = arith.constant dense<0.000000e+00> : vector<2x16x16xf32>
    %101 = tpu.matmul %100, %89, %cst_35 {dimension_numbers = #tpu.dot_dimension_numbers<[2], [1], [1], [2], [0, 0, 0, 1, 1, 2], [0], [0]>} : vector<2x16x16xbf16>, vector<2x16x16xbf16>, vector<2x16x16xf32> -> vector<2x16x16xf32>
    "tpu.trace_stop"() : () -> ()
    %102 = vector.extract_strided_slice %37 {offsets = [0, 0, 64], sizes = [2, 16, 16], strides = [1, 1, 1]} : vector<2x16x128xbf16> to vector<2x16x16xbf16>
    %103 = vector.extract_strided_slice %39 {offsets = [0, 0, 64], sizes = [2, 16, 16], strides = [1, 1, 1]} : vector<2x16x128xbf16> to vector<2x16x16xbf16>
    %104 = vector.extract_strided_slice %41 {offsets = [0, 0, 64], sizes = [2, 16, 16], strides = [1, 1, 1]} : vector<2x16x128xbf16> to vector<2x16x16xbf16>
    "tpu.trace_start"() <{level = 10 : i32, message = "bsd,btd->bst"}> : () -> ()
    %cst_36 = arith.constant dense<0.000000e+00> : vector<2x16x16xf32>
    %105 = tpu.matmul %102, %103, %cst_36 {dimension_numbers = #tpu.dot_dimension_numbers<[2], [2], [1], [1], [0, 0, 0, 1, 1, 1], [0], [0]>} : vector<2x16x16xbf16>, vector<2x16x16xbf16>, vector<2x16x16xf32> -> vector<2x16x16xf32>
    "tpu.trace_stop"() : () -> ()
    %cst_37 = arith.constant dense<0xFF800000> : vector<2x16xf32>
    %106 = vector.multi_reduction <maximumf>, %105, %cst_37 [2] : vector<2x16x16xf32> to vector<2x16xf32>
    %107 = vector.shape_cast %106 : vector<2x16xf32> to vector<2x16x1xf32>
    %108 = vector.broadcast %107 : vector<2x16x1xf32> to vector<2x16x16xf32>
    %109 = arith.subf %105, %108 : vector<2x16x16xf32>
    %110 = math.exp %109 : vector<2x16x16xf32>
    %cst_38 = arith.constant dense<0.000000e+00> : vector<2x16xf32>
    %111 = vector.multi_reduction <add>, %110, %cst_38 [2] : vector<2x16x16xf32> to vector<2x16xf32>
    %112 = vector.shape_cast %111 : vector<2x16xf32> to vector<2x16x1xf32>
    %113 = vector.broadcast %112 : vector<2x16x1xf32> to vector<2x16x16xf32>
    %114 = arith.divf %110, %113 : vector<2x16x16xf32>
    %115 = arith.truncf %114 : vector<2x16x16xf32> to vector<2x16x16xbf16>
    "tpu.trace_start"() <{level = 10 : i32, message = "bst,btd->bsd"}> : () -> ()
    %cst_39 = arith.constant dense<0.000000e+00> : vector<2x16x16xf32>
    %116 = tpu.matmul %115, %104, %cst_39 {dimension_numbers = #tpu.dot_dimension_numbers<[2], [1], [1], [2], [0, 0, 0, 1, 1, 2], [0], [0]>} : vector<2x16x16xbf16>, vector<2x16x16xbf16>, vector<2x16x16xf32> -> vector<2x16x16xf32>
    "tpu.trace_stop"() : () -> ()
    %117 = vector.extract_strided_slice %37 {offsets = [0, 0, 80], sizes = [2, 16, 16], strides = [1, 1, 1]} : vector<2x16x128xbf16> to vector<2x16x16xbf16>
    %118 = vector.extract_strided_slice %39 {offsets = [0, 0, 80], sizes = [2, 16, 16], strides = [1, 1, 1]} : vector<2x16x128xbf16> to vector<2x16x16xbf16>
    %119 = vector.extract_strided_slice %41 {offsets = [0, 0, 80], sizes = [2, 16, 16], strides = [1, 1, 1]} : vector<2x16x128xbf16> to vector<2x16x16xbf16>
    "tpu.trace_start"() <{level = 10 : i32, message = "bsd,btd->bst"}> : () -> ()
    %cst_40 = arith.constant dense<0.000000e+00> : vector<2x16x16xf32>
    %120 = tpu.matmul %117, %118, %cst_40 {dimension_numbers = #tpu.dot_dimension_numbers<[2], [2], [1], [1], [0, 0, 0, 1, 1, 1], [0], [0]>} : vector<2x16x16xbf16>, vector<2x16x16xbf16>, vector<2x16x16xf32> -> vector<2x16x16xf32>
    "tpu.trace_stop"() : () -> ()
    %cst_41 = arith.constant dense<0xFF800000> : vector<2x16xf32>
    %121 = vector.multi_reduction <maximumf>, %120, %cst_41 [2] : vector<2x16x16xf32> to vector<2x16xf32>
    %122 = vector.shape_cast %121 : vector<2x16xf32> to vector<2x16x1xf32>
    %123 = vector.broadcast %122 : vector<2x16x1xf32> to vector<2x16x16xf32>
    %124 = arith.subf %120, %123 : vector<2x16x16xf32>
    %125 = math.exp %124 : vector<2x16x16xf32>
    %cst_42 = arith.constant dense<0.000000e+00> : vector<2x16xf32>
    %126 = vector.multi_reduction <add>, %125, %cst_42 [2] : vector<2x16x16xf32> to vector<2x16xf32>
    %127 = vector.shape_cast %126 : vector<2x16xf32> to vector<2x16x1xf32>
    %128 = vector.broadcast %127 : vector<2x16x1xf32> to vector<2x16x16xf32>
    %129 = arith.divf %125, %128 : vector<2x16x16xf32>
    %130 = arith.truncf %129 : vector<2x16x16xf32> to vector<2x16x16xbf16>
    "tpu.trace_start"() <{level = 10 : i32, message = "bst,btd->bsd"}> : () -> ()
    %cst_43 = arith.constant dense<0.000000e+00> : vector<2x16x16xf32>
    %131 = tpu.matmul %130, %119, %cst_43 {dimension_numbers = #tpu.dot_dimension_numbers<[2], [1], [1], [2], [0, 0, 0, 1, 1, 2], [0], [0]>} : vector<2x16x16xbf16>, vector<2x16x16xbf16>, vector<2x16x16xf32> -> vector<2x16x16xf32>
    "tpu.trace_stop"() : () -> ()
    %132 = vector.extract_strided_slice %37 {offsets = [0, 0, 96], sizes = [2, 16, 16], strides = [1, 1, 1]} : vector<2x16x128xbf16> to vector<2x16x16xbf16>
    %133 = vector.extract_strided_slice %39 {offsets = [0, 0, 96], sizes = [2, 16, 16], strides = [1, 1, 1]} : vector<2x16x128xbf16> to vector<2x16x16xbf16>
    %134 = vector.extract_strided_slice %41 {offsets = [0, 0, 96], sizes = [2, 16, 16], strides = [1, 1, 1]} : vector<2x16x128xbf16> to vector<2x16x16xbf16>
    "tpu.trace_start"() <{level = 10 : i32, message = "bsd,btd->bst"}> : () -> ()
    %cst_44 = arith.constant dense<0.000000e+00> : vector<2x16x16xf32>
    %135 = tpu.matmul %132, %133, %cst_44 {dimension_numbers = #tpu.dot_dimension_numbers<[2], [2], [1], [1], [0, 0, 0, 1, 1, 1], [0], [0]>} : vector<2x16x16xbf16>, vector<2x16x16xbf16>, vector<2x16x16xf32> -> vector<2x16x16xf32>
    "tpu.trace_stop"() : () -> ()
    %cst_45 = arith.constant dense<0xFF800000> : vector<2x16xf32>
    %136 = vector.multi_reduction <maximumf>, %135, %cst_45 [2] : vector<2x16x16xf32> to vector<2x16xf32>
    %137 = vector.shape_cast %136 : vector<2x16xf32> to vector<2x16x1xf32>
    %138 = vector.broadcast %137 : vector<2x16x1xf32> to vector<2x16x16xf32>
    %139 = arith.subf %135, %138 : vector<2x16x16xf32>
    %140 = math.exp %139 : vector<2x16x16xf32>
    %cst_46 = arith.constant dense<0.000000e+00> : vector<2x16xf32>
    %141 = vector.multi_reduction <add>, %140, %cst_46 [2] : vector<2x16x16xf32> to vector<2x16xf32>
    %142 = vector.shape_cast %141 : vector<2x16xf32> to vector<2x16x1xf32>
    %143 = vector.broadcast %142 : vector<2x16x1xf32> to vector<2x16x16xf32>
    %144 = arith.divf %140, %143 : vector<2x16x16xf32>
    %145 = arith.truncf %144 : vector<2x16x16xf32> to vector<2x16x16xbf16>
    "tpu.trace_start"() <{level = 10 : i32, message = "bst,btd->bsd"}> : () -> ()
    %cst_47 = arith.constant dense<0.000000e+00> : vector<2x16x16xf32>
    %146 = tpu.matmul %145, %134, %cst_47 {dimension_numbers = #tpu.dot_dimension_numbers<[2], [1], [1], [2], [0, 0, 0, 1, 1, 2], [0], [0]>} : vector<2x16x16xbf16>, vector<2x16x16xbf16>, vector<2x16x16xf32> -> vector<2x16x16xf32>
    "tpu.trace_stop"() : () -> ()
    %147 = vector.extract_strided_slice %37 {offsets = [0, 0, 112], sizes = [2, 16, 16], strides = [1, 1, 1]} : vector<2x16x128xbf16> to vector<2x16x16xbf16>
    %148 = vector.extract_strided_slice %39 {offsets = [0, 0, 112], sizes = [2, 16, 16], strides = [1, 1, 1]} : vector<2x16x128xbf16> to vector<2x16x16xbf16>
    %149 = vector.extract_strided_slice %41 {offsets = [0, 0, 112], sizes = [2, 16, 16], strides = [1, 1, 1]} : vector<2x16x128xbf16> to vector<2x16x16xbf16>
    "tpu.trace_start"() <{level = 10 : i32, message = "bsd,btd->bst"}> : () -> ()
    %cst_48 = arith.constant dense<0.000000e+00> : vector<2x16x16xf32>
    %150 = tpu.matmul %147, %148, %cst_48 {dimension_numbers = #tpu.dot_dimension_numbers<[2], [2], [1], [1], [0, 0, 0, 1, 1, 1], [0], [0]>} : vector<2x16x16xbf16>, vector<2x16x16xbf16>, vector<2x16x16xf32> -> vector<2x16x16xf32>
    "tpu.trace_stop"() : () -> ()
    %cst_49 = arith.constant dense<0xFF800000> : vector<2x16xf32>
    %151 = vector.multi_reduction <maximumf>, %150, %cst_49 [2] : vector<2x16x16xf32> to vector<2x16xf32>
    %152 = vector.shape_cast %151 : vector<2x16xf32> to vector<2x16x1xf32>
    %153 = vector.broadcast %152 : vector<2x16x1xf32> to vector<2x16x16xf32>
    %154 = arith.subf %150, %153 : vector<2x16x16xf32>
    %155 = math.exp %154 : vector<2x16x16xf32>
    %cst_50 = arith.constant dense<0.000000e+00> : vector<2x16xf32>
    %156 = vector.multi_reduction <add>, %155, %cst_50 [2] : vector<2x16x16xf32> to vector<2x16xf32>
    %157 = vector.shape_cast %156 : vector<2x16xf32> to vector<2x16x1xf32>
    %158 = vector.broadcast %157 : vector<2x16x1xf32> to vector<2x16x16xf32>
    %159 = arith.divf %155, %158 : vector<2x16x16xf32>
    %160 = arith.truncf %159 : vector<2x16x16xf32> to vector<2x16x16xbf16>
    "tpu.trace_start"() <{level = 10 : i32, message = "bst,btd->bsd"}> : () -> ()
    %cst_51 = arith.constant dense<0.000000e+00> : vector<2x16x16xf32>
    %161 = tpu.matmul %160, %149, %cst_51 {dimension_numbers = #tpu.dot_dimension_numbers<[2], [1], [1], [2], [0, 0, 0, 1, 1, 2], [0], [0]>} : vector<2x16x16xbf16>, vector<2x16x16xbf16>, vector<2x16x16xf32> -> vector<2x16x16xf32>
    "tpu.trace_stop"() : () -> ()
    %162 = tpu.concatenate %56, %71, %86, %101, %116, %131, %146, %161 in 2 : vector<2x16x16xf32>, vector<2x16x16xf32>, vector<2x16x16xf32>, vector<2x16x16xf32>, vector<2x16x16xf32>, vector<2x16x16xf32>, vector<2x16x16xf32>, vector<2x16x16xf32> -> vector<2x16x128xf32>
    %163 = vector.shape_cast %162 : vector<2x16x128xf32> to vector<32x128xf32>
    %164 = arith.truncf %163 : vector<32x128xf32> to vector<32x128xbf16>
    %cst_52 = arith.constant dense<0.000000e+00> : vector<32x128xf32>
    %165 = tpu.matmul %164, %7, %cst_52 {dimension_numbers = #tpu.dot_dimension_numbers<[1], [0], [0], [1], [0, 0, 1, 1], [], []>} : vector<32x128xbf16>, vector<128x128xbf16>, vector<32x128xf32> -> vector<32x128xf32>
    %166 = vector.broadcast %19 : vector<1x128xf32> to vector<32x128xf32>
    %167 = arith.addf %165, %166 : vector<32x128xf32>
    %168 = arith.addf %3, %167 : vector<32x128xf32>
    %cst_53 = arith.constant dense<0.000000e+00> : vector<32xf32>
    %169 = vector.multi_reduction <add>, %168, %cst_53 [1] : vector<32x128xf32> to vector<32xf32>
    %170 = vector.shape_cast %169 : vector<32xf32> to vector<32x1xf32>
    %cst_54 = arith.constant 1.280000e+02 : f32
    %171 = vector.broadcast %cst_54 : f32 to vector<32x1xf32>
    %172 = arith.divf %170, %171 : vector<32x1xf32>
    %173 = vector.broadcast %172 : vector<32x1xf32> to vector<32x128xf32>
    %174 = arith.subf %168, %173 : vector<32x128xf32>
    %175 = arith.mulf %174, %174 : vector<32x128xf32>
    %cst_55 = arith.constant dense<0.000000e+00> : vector<32xf32>
    %176 = vector.multi_reduction <add>, %175, %cst_55 [1] : vector<32x128xf32> to vector<32xf32>
    %177 = vector.shape_cast %176 : vector<32xf32> to vector<32x1xf32>
    %cst_56 = arith.constant 1.280000e+02 : f32
    %178 = vector.broadcast %cst_56 : f32 to vector<32x1xf32>
    %179 = arith.divf %177, %178 : vector<32x1xf32>
    %cst_57 = arith.constant 9.99999974E-6 : f32
    %180 = vector.broadcast %cst_57 : f32 to vector<32x1xf32>
    %181 = arith.addf %179, %180 : vector<32x1xf32>
    %182 = math.rsqrt %181 : vector<32x1xf32>
    %183 = vector.broadcast %182 : vector<32x1xf32> to vector<32x128xf32>
    %184 = arith.mulf %174, %183 : vector<32x128xf32>
    %185 = vector.broadcast %21 : vector<1x128xf32> to vector<32x128xf32>
    %186 = arith.mulf %184, %185 : vector<32x128xf32>
    %187 = vector.broadcast %22 : vector<1x128xf32> to vector<32x128xf32>
    %188 = arith.addf %186, %187 : vector<32x128xf32>
    %189 = arith.truncf %188 : vector<32x128xf32> to vector<32x128xbf16>
    %cst_58 = arith.constant dense<0.000000e+00> : vector<32x512xf32>
    %190 = tpu.matmul %189, %9, %cst_58 {dimension_numbers = #tpu.dot_dimension_numbers<[1], [0], [0], [1], [0, 0, 1, 1], [], []>} : vector<32x128xbf16>, vector<128x512xbf16>, vector<32x512xf32> -> vector<32x512xf32>
    %191 = vector.broadcast %13 : vector<1x512xf32> to vector<32x512xf32>
    %192 = arith.addf %190, %191 : vector<32x512xf32>
    %cst_59 = arith.constant 0.000000e+00 : f32
    %193 = vector.broadcast %cst_59 : f32 to vector<32x512xf32>
    %194 = arith.maximumf %192, %193 : vector<32x512xf32>
    %195 = arith.truncf %194 : vector<32x512xf32> to vector<32x512xbf16>
    %cst_60 = arith.constant dense<0.000000e+00> : vector<32x128xf32>
    %196 = tpu.matmul %195, %11, %cst_60 {dimension_numbers = #tpu.dot_dimension_numbers<[1], [0], [0], [1], [0, 0, 1, 1], [], []>} : vector<32x512xbf16>, vector<512x128xbf16>, vector<32x128xf32> -> vector<32x128xf32>
    %197 = vector.broadcast %20 : vector<1x128xf32> to vector<32x128xf32>
    %198 = arith.addf %196, %197 : vector<32x128xf32>
    %199 = arith.addf %188, %198 : vector<32x128xf32>
    %cst_61 = arith.constant dense<0.000000e+00> : vector<32xf32>
    %200 = vector.multi_reduction <add>, %199, %cst_61 [1] : vector<32x128xf32> to vector<32xf32>
    %201 = vector.shape_cast %200 : vector<32xf32> to vector<32x1xf32>
    %cst_62 = arith.constant 1.280000e+02 : f32
    %202 = vector.broadcast %cst_62 : f32 to vector<32x1xf32>
    %203 = arith.divf %201, %202 : vector<32x1xf32>
    %204 = vector.broadcast %203 : vector<32x1xf32> to vector<32x128xf32>
    %205 = arith.subf %199, %204 : vector<32x128xf32>
    %206 = arith.mulf %205, %205 : vector<32x128xf32>
    %cst_63 = arith.constant dense<0.000000e+00> : vector<32xf32>
    %207 = vector.multi_reduction <add>, %206, %cst_63 [1] : vector<32x128xf32> to vector<32xf32>
    %208 = vector.shape_cast %207 : vector<32xf32> to vector<32x1xf32>
    %cst_64 = arith.constant 1.280000e+02 : f32
    %209 = vector.broadcast %cst_64 : f32 to vector<32x1xf32>
    %210 = arith.divf %208, %209 : vector<32x1xf32>
    %cst_65 = arith.constant 9.99999974E-6 : f32
    %211 = vector.broadcast %cst_65 : f32 to vector<32x1xf32>
    %212 = arith.addf %210, %211 : vector<32x1xf32>
    %213 = math.rsqrt %212 : vector<32x1xf32>
    %214 = vector.broadcast %213 : vector<32x1xf32> to vector<32x128xf32>
    %215 = arith.mulf %205, %214 : vector<32x128xf32>
    %216 = vector.broadcast %23 : vector<1x128xf32> to vector<32x128xf32>
    %217 = arith.mulf %215, %216 : vector<32x128xf32>
    %218 = vector.broadcast %24 : vector<1x128xf32> to vector<32x128xf32>
    %219 = arith.addf %217, %218 : vector<32x128xf32>
    %c0_66 = arith.constant 0 : index
    %c0_67 = arith.constant 0 : index
    %220 = vector.load %arg9[%c0_66, %c0_67] : memref<32x128xf32, #tpu.memory_space<vmem>>, vector<32x128xf32>
    tpu.vector_store %arg9[%c0_66, %c0_67], %219 {strides = array<i32>} : memref<32x128xf32, #tpu.memory_space<vmem>>, vector<32x128xf32>,
    %c0_68 = arith.constant 0 : index
    %c0_69 = arith.constant 0 : index
    %221 = vector.load %arg8[%c0_68, %c0_69] : memref<32x128xf32, #tpu.memory_space<vmem>>, vector<32x128xf32>
    tpu.vector_store %arg8[%c0_68, %c0_69], %219 {strides = array<i32>} : memref<32x128xf32, #tpu.memory_space<vmem>>, vector<32x128xf32>,
    return
  }
  func.func @transform_0(%arg0: i32) -> (i32, i32) {
    %c0_i32 = arith.constant 0 : i32
    %c0_i32_0 = arith.constant 0 : i32
    %c0_i32_1 = arith.constant 0 : i32
    return %c0_i32, %c0_i32_0 : i32, i32
  }
  func.func @transform_1(%arg0: i32) -> (i32, i32, i32) {
    %c0_i32 = arith.constant 0 : i32
    %c0_i32_0 = arith.constant 0 : i32
    %c0_i32_1 = arith.constant 0 : i32
    return %arg0, %c0_i32, %c0_i32_0 : i32, i32, i32
  }
  func.func @transform_2(%arg0: i32) -> (i32, i32, i32) {
    %c0_i32 = arith.constant 0 : i32
    %c0_i32_0 = arith.constant 0 : i32
    %c0_i32_1 = arith.constant 0 : i32
    return %arg0, %c0_i32, %c0_i32_0 : i32, i32, i32
  }
  func.func @transform_3(%arg0: i32) -> (i32, i32, i32) {
    %c0_i32 = arith.constant 0 : i32
    %c0_i32_0 = arith.constant 0 : i32
    %c0_i32_1 = arith.constant 0 : i32
    return %arg0, %c0_i32, %c0_i32_0 : i32, i32, i32
  }
  func.func @transform_4(%arg0: i32) -> (i32, i32, i32) {
    %c0_i32 = arith.constant 0 : i32
    %c0_i32_0 = arith.constant 0 : i32
    %c0_i32_1 = arith.constant 0 : i32
    return %arg0, %c0_i32, %c0_i32_0 : i32, i32, i32
  }
  func.func @transform_5(%arg0: i32) -> (i32, i32, i32) {
    %c0_i32 = arith.constant 0 : i32
    %c0_i32_0 = arith.constant 0 : i32
    %c0_i32_1 = arith.constant 0 : i32
    return %arg0, %c0_i32, %c0_i32_0 : i32, i32, i32
  }
  func.func @transform_6(%arg0: i32) -> (i32, i32, i32) {
    %c0_i32 = arith.constant 0 : i32
    %c0_i32_0 = arith.constant 0 : i32
    %c0_i32_1 = arith.constant 0 : i32
    return %arg0, %c0_i32, %c0_i32_0 : i32, i32, i32
  }
  func.func @transform_7(%arg0: i32) -> (i32, i32) {
    %c0_i32 = arith.constant 0 : i32
    %c0_i32_0 = arith.constant 0 : i32
    %c0_i32_1 = arith.constant 0 : i32
    return %c0_i32, %c0_i32_0 : i32, i32
  }
}

</mosaic_0001>

<llo_original>
// kernel: transformer_encoder.1
$region0: #{transformer_encoder.1}
  #allocation0 [shape = 'u32[]', space=smem, size = 0x4, offset = 0x4, fixed_abs, tag = 'smem constant byte address 0x4 - core index']
  #allocation1 [shape = 'u32[144,128]{1,0:T(1,128)}', space=vmem, size = 0x12000, scoped, tag = 'internal scratch']
  #allocation2 [shape = 'f32[32,128]{1,0:T(8,128)}', space=vmem, size = 0x4000, scoped, tag = 'scratch operand']
  %s0 = inlined_call_operand.vmem [shape: f32[32,128], index: 0, kind: input, shape index: {}]
  %s1 = inlined_call_operand.hbm [shape: bf16[2,128,384], index: 1, kind: input, shape index: {}]
  %s2 = inlined_call_operand.hbm [shape: bf16[2,128,128], index: 2, kind: input, shape index: {}]
  %s3 = inlined_call_operand.hbm [shape: bf16[2,128,512], index: 3, kind: input, shape index: {}]
  %s4 = inlined_call_operand.hbm [shape: bf16[2,512,128], index: 4, kind: input, shape index: {}]
  %s5 = inlined_call_operand.vmem [shape: f32[2,1,512], index: 5, kind: input, shape index: {}]
  %s6 = inlined_call_operand.vmem [shape: f32[2,9,128], index: 6, kind: input, shape index: {}]
  %s7 = inlined_call_operand.hbm [shape: f32[32,128], index: 7, kind: output, shape index: {}]
  %s8 = sld [smem:[#allocation0]]
  $region81: #{transformer_encoder.1} parent=0
    _
  %s10 = ssub.s32 1, %s8
  %s11 = scalar_select 0, %s10, %s8
  $region1: #{transformer_encoder.1} parent=0
    #allocation3 [shape = 'u8[196608]{0}', space=vmem, size = 0x30000, scoped, tag = 'input window, operand 1']
    #allocation4 [shape = 's32[2]{0}', space=sflag, size = 0x8, scoped, tag = 'scoped memory for transformer_encoder.1']
    #allocation5 [shape = 's32[2]{0}', space=sflag, size = 0x8, scoped, tag = 'scoped memory for transformer_encoder.1']
    #allocation6 [shape = 'u8[65536]{0}', space=vmem, size = 0x10000, scoped, tag = 'input window, operand 2']
    #allocation7 [shape = 's32[2]{0}', space=sflag, size = 0x8, scoped, tag = 'scoped memory for transformer_encoder.1']
    #allocation8 [shape = 'u8[262144]{0}', space=vmem, size = 0x40000, scoped, tag = 'input window, operand 3']
    #allocation9 [shape = 'u8[262144]{0}', space=vmem, size = 0x40000, scoped, tag = 'input window, operand 4']
    #allocation10 [shape = 's32[2]{0}', space=sflag, size = 0x8, scoped, tag = 'scoped memory for transformer_encoder.1']
    #allocation11 [shape = 'u8[16384]{0}', space=vmem, size = 0x4000, scoped, tag = 'output window, operand 0, single buffered']
    %12 = vsyncpa [#allocation4], 0
    %s13 = scalar_lea.sflag [#allocation4], 1
    %14 = vsyncpa %s13, 0
    %15 = vsyncpa [#allocation7], 0
    %s16 = scalar_lea.sflag [#allocation7], 1
    %17 = vsyncpa %s16, 0
    %18 = vsyncpa [#allocation10], 0
    %s19 = scalar_lea.sflag [#allocation10], 1
    %20 = vsyncpa %s19, 0
    %21 = vsyncpa [#allocation5], 0
    loop: start=0, step=1, limit=4
    $region2: #{transformer_encoder.1} parent=1 // loop_pre_header
      _
    $region3: #{transformer_encoder.1} parent=1 // loop_header
      %s23 = sphi 0, %s27
      %p24 = scmp.ge.s32.totalorder %s23, 4
      %s31 = sphi 0, %s31
      %s33 = sphi 0, %s31
      %s34 = sphi 0, %s33
      %s48 = sphi 0, %s34
      %s54 = sphi 0, %s56
      %s57 = sphi 0, %s54
      %s58 = sphi 0, %s57
      %s74 = sphi 0, %s58
      %s80 = sphi 0, %s82
      %s83 = sphi 0, %s80
      %s84 = sphi 0, %s83
      %s100 = sphi 0, %s84
      %s106 = sphi 0, %s108
      %s109 = sphi 0, %s106
      %s110 = sphi 0, %s109
      %s126 = sphi 0, %s110
      %s132 = sphi 0, %s134
      %s135 = sphi 0, %s132
      %s136 = sphi 0, %s135
      %s152 = sphi 0, %s136
      %s158 = sphi 0, %s160
      %s161 = sphi 0, %s158
      %s162 = sphi 0, %s161
      %s178 = sphi 0, %s162
      %s184 = sphi 0, %s186
      %s187 = sphi 0, %s184
      %s188 = sphi 0, %s187
      %s204 = sphi 0, %s188
      %s208 = sphi 0, %s208
      %s210 = sphi 0, %s208
      %s211 = sphi 0, %s210
      %s225 = sphi 0, %s211
    $region4: #{transformer_encoder.1} parent=1 // loop_header_branch
      %26 = sbr.rel (%p24) target = $region8
    $region5: #{transformer_encoder.1} parent=1 // loop_body
      %s28 = ssub.s32 %s23, 1
      %s29 = ssub.s32 %s23, 2
      %s30 = sadd.s32 %s23, 1
      %s32 = sadd.s32 %s31, 1
      %p35 = scmp.eq.s32.totalorder %s23, 1
      %p36 = scmp.ne.s32.totalorder %s31, %s33
      %p37 = scmp.eq.s32.totalorder %s23, 0
      %p38 = por %p36, %p37
      %p39 = scmp.ne.s32.totalorder %s31, %s33
      %p40 = scmp.eq.s32.totalorder %s28, 1
      %p41 = por %p39, %p40
      %p42 = scmp.ne.s32.totalorder %s33, %s34
      %p43 = scmp.eq.s32.totalorder %s28, 0
      %p44 = por %p42, %p43
      %p45 = scmp.ne.s32.totalorder %s33, %s34
      %p46 = scmp.eq.s32.totalorder %s29, 1
      %p47 = por %p45, %p46
      %p49 = scmp.ne.s32.totalorder %s34, %s48
      %p50 = scmp.eq.s32.totalorder %s29, 0
      %p51 = por %p49, %p50
      %s52 = ssub.s32 %s23, %s30
      %p53 = scmp.eq.s32.totalorder %s52, 0
      %s55 = sadd.s32 %s54, 1
      %s56 = scalar_select %p53, %s54, %s55
      %p59 = pneg %p53
      %p60 = scmp.eq.s32.totalorder %s23, 1
      %p61 = por %p59, %p60
      %p62 = scmp.ne.s32.totalorder %s54, %s57
      %p63 = scmp.eq.s32.totalorder %s23, 0
      %p64 = por %p62, %p63
      %p65 = scmp.ne.s32.totalorder %s54, %s57
      %p66 = scmp.eq.s32.totalorder %s28, 1
      %p67 = por %p65, %p66
      %p68 = scmp.ne.s32.totalorder %s57, %s58
      %p69 = scmp.eq.s32.totalorder %s28, 0
      %p70 = por %p68, %p69
      %p71 = scmp.ne.s32.totalorder %s57, %s58
      %p72 = scmp.eq.s32.totalorder %s29, 1
      %p73 = por %p71, %p72
      %p75 = scmp.ne.s32.totalorder %s58, %s74
      %p76 = scmp.eq.s32.totalorder %s29, 0
      %p77 = por %p75, %p76
      %s78 = ssub.s32 %s23, %s30
      %p79 = scmp.eq.s32.totalorder %s78, 0
      %s81 = sadd.s32 %s80, 1
      %s82 = scalar_select %p79, %s80, %s81
      %p85 = pneg %p79
      %p86 = scmp.eq.s32.totalorder %s23, 1
      %p87 = por %p85, %p86
      %p88 = scmp.ne.s32.totalorder %s80, %s83
      %p89 = scmp.eq.s32.totalorder %s23, 0
      %p90 = por %p88, %p89
      %p91 = scmp.ne.s32.totalorder %s80, %s83
      %p92 = scmp.eq.s32.totalorder %s28, 1
      %p93 = por %p91, %p92
      %p94 = scmp.ne.s32.totalorder %s83, %s84
      %p95 = scmp.eq.s32.totalorder %s28, 0
      %p96 = por %p94, %p95
      %p97 = scmp.ne.s32.totalorder %s83, %s84
      %p98 = scmp.eq.s32.totalorder %s29, 1
      %p99 = por %p97, %p98
      %p101 = scmp.ne.s32.totalorder %s84, %s100
      %p102 = scmp.eq.s32.totalorder %s29, 0
      %p103 = por %p101, %p102
      %s104 = ssub.s32 %s23, %s30
      %p105 = scmp.eq.s32.totalorder %s104, 0
      %s107 = sadd.s32 %s106, 1
      %s108 = scalar_select %p105, %s106, %s107
      %p111 = pneg %p105
      %p112 = scmp.eq.s32.totalorder %s23, 1
      %p113 = por %p111, %p112
      %p114 = scmp.ne.s32.totalorder %s106, %s109
      %p115 = scmp.eq.s32.totalorder %s23, 0
      %p116 = por %p114, %p115
      %p117 = scmp.ne.s32.totalorder %s106, %s109
      %p118 = scmp.eq.s32.totalorder %s28, 1
      %p119 = por %p117, %p118
      %p120 = scmp.ne.s32.totalorder %s109, %s110
      %p121 = scmp.eq.s32.totalorder %s28, 0
      %p122 = por %p120, %p121
      %p123 = scmp.ne.s32.totalorder %s109, %s110
      %p124 = scmp.eq.s32.totalorder %s29, 1
      %p125 = por %p123, %p124
      %p127 = scmp.ne.s32.totalorder %s110, %s126
      %p128 = scmp.eq.s32.totalorder %s29, 0
      %p129 = por %p127, %p128
      %s130 = ssub.s32 %s23, %s30
      %p131 = scmp.eq.s32.totalorder %s130, 0
      %s133 = sadd.s32 %s132, 1
      %s134 = scalar_select %p131, %s132, %s133
      %p137 = pneg %p131
      %p138 = scmp.eq.s32.totalorder %s23, 1
      %p139 = por %p137, %p138
      %p140 = scmp.ne.s32.totalorder %s132, %s135
      %p141 = scmp.eq.s32.totalorder %s23, 0
      %p142 = por %p140, %p141
      %p143 = scmp.ne.s32.totalorder %s132, %s135
      %p144 = scmp.eq.s32.totalorder %s28, 1
      %p145 = por %p143, %p144
      %p146 = scmp.ne.s32.totalorder %s135, %s136
      %p147 = scmp.eq.s32.totalorder %s28, 0
      %p148 = por %p146, %p147
      %p149 = scmp.ne.s32.totalorder %s135, %s136
      %p150 = scmp.eq.s32.totalorder %s29, 1
      %p151 = por %p149, %p150
      %p153 = scmp.ne.s32.totalorder %s136, %s152
      %p154 = scmp.eq.s32.totalorder %s29, 0
      %p155 = por %p153, %p154
      %s156 = ssub.s32 %s23, %s30
      %p157 = scmp.eq.s32.totalorder %s156, 0
      %s159 = sadd.s32 %s158, 1
      %s160 = scalar_select %p157, %s158, %s159
      %p163 = pneg %p157
      %p164 = scmp.eq.s32.totalorder %s23, 1
      %p165 = por %p163, %p164
      %p166 = scmp.ne.s32.totalorder %s158, %s161
      %p167 = scmp.eq.s32.totalorder %s23, 0
      %p168 = por %p166, %p167
      %p169 = scmp.ne.s32.totalorder %s158, %s161
      %p170 = scmp.eq.s32.totalorder %s28, 1
      %p171 = por %p169, %p170
      %p172 = scmp.ne.s32.totalorder %s161, %s162
      %p173 = scmp.eq.s32.totalorder %s28, 0
      %p174 = por %p172, %p173
      %p175 = scmp.ne.s32.totalorder %s161, %s162
      %p176 = scmp.eq.s32.totalorder %s29, 1
      %p177 = por %p175, %p176
      %p179 = scmp.ne.s32.totalorder %s162, %s178
      %p180 = scmp.eq.s32.totalorder %s29, 0
      %p181 = por %p179, %p180
      %s182 = ssub.s32 %s23, %s30
      %p183 = scmp.eq.s32.totalorder %s182, 0
      %s185 = sadd.s32 %s184, 1
      %s186 = scalar_select %p183, %s184, %s185
      %p189 = pneg %p183
      %p190 = scmp.eq.s32.totalorder %s23, 1
      %p191 = por %p189, %p190
      %p192 = scmp.ne.s32.totalorder %s184, %s187
      %p193 = scmp.eq.s32.totalorder %s23, 0
      %p194 = por %p192, %p193
      %p195 = scmp.ne.s32.totalorder %s184, %s187
      %p196 = scmp.eq.s32.totalorder %s28, 1
      %p197 = por %p195, %p196
      %p198 = scmp.ne.s32.totalorder %s187, %s188
      %p199 = scmp.eq.s32.totalorder %s28, 0
      %p200 = por %p198, %p199
      %p201 = scmp.ne.s32.totalorder %s187, %s188
      %p202 = scmp.eq.s32.totalorder %s29, 1
      %p203 = por %p201, %p202
      %p205 = scmp.ne.s32.totalorder %s188, %s204
      %p206 = scmp.eq.s32.totalorder %s29, 0
      %p207 = por %p205, %p206
      %s209 = sadd.s32 %s208, 1
      %p212 = scmp.eq.s32.totalorder %s23, 1
      %p213 = scmp.ne.s32.totalorder %s208, %s210
      %p214 = scmp.eq.s32.totalorder %s23, 0
      %p215 = por %p213, %p214
      %p216 = scmp.ne.s32.totalorder %s208, %s210
      %p217 = scmp.eq.s32.totalorder %s28, 1
      %p218 = por %p216, %p217
      %p219 = scmp.ne.s32.totalorder %s210, %s211
      %p220 = scmp.eq.s32.totalorder %s28, 0
      %p221 = por %p219, %p220
      %p222 = scmp.ne.s32.totalorder %s210, %s211
      %p223 = scmp.eq.s32.totalorder %s29, 1
      %p224 = por %p222, %p223
      %p226 = scmp.ne.s32.totalorder %s211, %s225
      %p227 = scmp.eq.s32.totalorder %s29, 0
      %p228 = por %p226, %p227
      %p229 = scmp.le.s32.totalorder 1, %s23
      %p230 = scmp.lt.s32.totalorder %s23, 3
      %p231 = pnand %p229, %p230
      %p232 = pneg %p231
      // Predicated region
      $region9: #{transformer_encoder.1} parent=5 // pred_check
        _
      $region10: #{transformer_encoder.1} parent=5 // pred_check_branch
        %234 = sbr.rel (%p231) target = $region12
      $region11: #{transformer_encoder.1} parent=5 // pred_region
        %s235 = ssub.s32 %s23, 1
        // Predicated region
        $region13: #{transformer_encoder.1} parent=11 // pred_check
          %p236 = pneg %p44
        $region14: #{transformer_encoder.1} parent=11 // pred_check_branch
          %238 = sbr.rel (%p236) target = $region16
        $region15: #{transformer_encoder.1} parent=11 // pred_region
          _
        $region16: #{transformer_encoder.1} parent=11 // pred_fallthru
          _
      $region12: #{transformer_encoder.1} parent=5 // pred_fallthru
        _
      %p239 = scmp.lt.s32.totalorder %s23, 2
      // Predicated region
      $region17: #{transformer_encoder.1} parent=5 // pred_check
        %p240 = pneg %p239
      $region18: #{transformer_encoder.1} parent=5 // pred_check_branch
        %242 = sbr.rel (%p240) target = $region20
      $region19: #{transformer_encoder.1} parent=5 // pred_region
        // Predicated region
        $region21: #{transformer_encoder.1} parent=19 // pred_check
          %p243 = pneg %p64
        $region22: #{transformer_encoder.1} parent=19 // pred_check_branch
          %245 = sbr.rel (%p243) target = $region24
        $region23: #{transformer_encoder.1} parent=19 // pred_region
          %s246 = sand.u32 %s54, 1
          %s247 = scalar_lea.sflag [#allocation4], %s246
          %s248 = sand.u32 %s54, 1
          %s249 = smul.addr %s248, 192
          %s250 = scalar_lea.vmem [#allocation3], %s249
          %s252 = ssub.s32 3072, 3072
          %253 = vsyncadd %s247, %s252
          %s254 = smul.addr %s23, 48
          %s255 = smul.addr %s254, 64
          %s256 = scalar_lea.hbm %s1, %s255
          %s257 = sshll.u32 %s250, 4
          %s258 = int_to_ptr.vmem [resolvable:$true] %s257
          %263 = dma.hbm_to_vmem [thread:$0]  %s256, 3072, %s258, %s247, 192, 192, 12
        $region24: #{transformer_encoder.1} parent=19 // pred_fallthru
          _
        // Predicated region
        $region25: #{transformer_encoder.1} parent=19 // pred_check
          %p264 = pneg %p90
        $region26: #{transformer_encoder.1} parent=19 // pred_check_branch
          %266 = sbr.rel (%p264) target = $region28
        $region27: #{transformer_encoder.1} parent=19 // pred_region
          %s267 = sand.u32 %s23, 1
          %s268 = scalar_lea.sflag [#allocation7], %s267
          %s269 = sand.u32 %s80, 1
          %s270 = smul.addr %s269, 64
          %s271 = scalar_lea.vmem [#allocation6], %s270
          %s273 = ssub.s32 1024, 1024
          %274 = vsyncadd %s268, %s273
          %s275 = smul.addr %s23, 16
          %s276 = smul.addr %s275, 64
          %s277 = scalar_lea.hbm %s2, %s276
          %s278 = sshll.u32 %s271, 4
          %s279 = int_to_ptr.vmem [resolvable:$true] %s278
          %284 = dma.hbm_to_vmem [thread:$0]  %s277, 1024, %s279, %s268, 64, 64, 4
        $region28: #{transformer_encoder.1} parent=19 // pred_fallthru
          _
        // Predicated region
        $region29: #{transformer_encoder.1} parent=19 // pred_check
          %p285 = pneg %p116
        $region30: #{transformer_encoder.1} parent=19 // pred_check_branch
          %287 = sbr.rel (%p285) target = $region32
        $region31: #{transformer_encoder.1} parent=19 // pred_region
          %s288 = sand.u32 %s23, 1
          %s289 = scalar_lea.sflag [#allocation7], %s288
          %s290 = sand.u32 %s106, 1
          %s291 = smul.addr %s290, 256
          %s292 = scalar_lea.vmem [#allocation8], %s291
          %s294 = ssub.s32 4096, 4096
          %295 = vsyncadd %s289, %s294
          %s296 = smul.addr %s23, 64
          %s297 = smul.addr %s296, 64
          %s298 = scalar_lea.hbm %s3, %s297
          %s299 = sshll.u32 %s292, 4
          %s300 = int_to_ptr.vmem [resolvable:$true] %s299
          %305 = dma.hbm_to_vmem [thread:$0]  %s298, 4096, %s300, %s289, 256, 256, 16
        $region32: #{transformer_encoder.1} parent=19 // pred_fallthru
          _
        // Predicated region
        $region33: #{transformer_encoder.1} parent=19 // pred_check
          %p306 = pneg %p142
        $region34: #{transformer_encoder.1} parent=19 // pred_check_branch
          %308 = sbr.rel (%p306) target = $region36
        $region35: #{transformer_encoder.1} parent=19 // pred_region
          %s309 = sand.u32 %s132, 1
          %s310 = scalar_lea.sflag [#allocation10], %s309
          %s311 = sand.u32 %s132, 1
          %s312 = smul.addr %s311, 256
          %s313 = scalar_lea.vmem [#allocation9], %s312
          %s315 = ssub.s32 4096, 4096
          %316 = vsyncadd %s310, %s315
          %s317 = smul.addr %s23, 64
          %s318 = smul.addr %s317, 64
          %s319 = scalar_lea.hbm %s4, %s318
          %s320 = sshll.u32 %s313, 4
          %s321 = int_to_ptr.vmem [resolvable:$true] %s320
          %326 = dma.hbm_to_vmem [thread:$0]  %s319, 4096, %s321, %s310, 64, 64, 4
        $region36: #{transformer_encoder.1} parent=19 // pred_fallthru
          _
        // Predicated region
        $region37: #{transformer_encoder.1} parent=19 // pred_check
          %p327 = pneg %p168
        $region38: #{transformer_encoder.1} parent=19 // pred_check_branch
          %329 = sbr.rel (%p327) target = $region40
        $region39: #{transformer_encoder.1} parent=19 // pred_region
          %p330 = scmp.lt.s32.totalorder %s23, 1
          %s331 = scalar_select %p330, %s23, 1
          %s332 = smul.addr %s331, 4
          %s333 = scalar_lea.vmem %s5, %s332
        $region40: #{transformer_encoder.1} parent=19 // pred_fallthru
          _
        // Predicated region
        $region41: #{transformer_encoder.1} parent=19 // pred_check
          %p334 = pneg %p194
        $region42: #{transformer_encoder.1} parent=19 // pred_check_branch
          %336 = sbr.rel (%p334) target = $region44
        $region43: #{transformer_encoder.1} parent=19 // pred_region
          %p337 = scmp.lt.s32.totalorder %s23, 1
          %s338 = scalar_select %p337, %s23, 1
          %s339 = smul.addr %s338, 2
          %s340 = smul.addr %s339, 8
          %s341 = scalar_lea.vmem %s6, %s340
        $region44: #{transformer_encoder.1} parent=19 // pred_fallthru
          _
      $region20: #{transformer_encoder.1} parent=5 // pred_fallthru
        _
      %p342 = scmp.le.s32.totalorder 1, %s23
      %p343 = scmp.lt.s32.totalorder %s23, 3
      %p344 = pnand %p342, %p343
      %p345 = pneg %p344
      // Predicated region
      $region45: #{transformer_encoder.1} parent=5 // pred_check
        _
      $region46: #{transformer_encoder.1} parent=5 // pred_check_branch
        %347 = sbr.rel (%p344) target = $region48
      $region47: #{transformer_encoder.1} parent=5 // pred_region
        %s348 = ssub.s32 %s23, 1
        %s349 = sand.u32 %s57, 1
        %s350 = scalar_lea.sflag [#allocation4], %s349
        %s351 = sand.u32 %s57, 1
        %s352 = smul.addr %s351, 192
        %s353 = scalar_lea.vmem [#allocation3], %s352
        // Predicated region
        $region49: #{transformer_encoder.1} parent=47 // pred_check
          %p354 = pneg %p70
        $region50: #{transformer_encoder.1} parent=47 // pred_check_branch
          %356 = sbr.rel (%p354) target = $region52
        $region51: #{transformer_encoder.1} parent=47 // pred_region
          %357 = dma.done %s350, 3072
        $region52: #{transformer_encoder.1} parent=47 // pred_fallthru
          _
        %s358 = sand.u32 %s28, 1
        %s359 = scalar_lea.sflag [#allocation7], %s358
        %s360 = sand.u32 %s83, 1
        %s361 = smul.addr %s360, 64
        %s362 = scalar_lea.vmem [#allocation6], %s361
        // Predicated region
        $region53: #{transformer_encoder.1} parent=47 // pred_check
          %p363 = pneg %p96
        $region54: #{transformer_encoder.1} parent=47 // pred_check_branch
          %365 = sbr.rel (%p363) target = $region56
        $region55: #{transformer_encoder.1} parent=47 // pred_region
          %366 = dma.done %s359, 1024
        $region56: #{transformer_encoder.1} parent=47 // pred_fallthru
          _
        %s367 = sand.u32 %s28, 1
        %s368 = scalar_lea.sflag [#allocation7], %s367
        %s369 = sand.u32 %s109, 1
        %s370 = smul.addr %s369, 256
        %s371 = scalar_lea.vmem [#allocation8], %s370
        // Predicated region
        $region57: #{transformer_encoder.1} parent=47 // pred_check
          %p372 = pneg %p122
        $region58: #{transformer_encoder.1} parent=47 // pred_check_branch
          %374 = sbr.rel (%p372) target = $region60
        $region59: #{transformer_encoder.1} parent=47 // pred_region
          %375 = dma.done %s368, 4096
        $region60: #{transformer_encoder.1} parent=47 // pred_fallthru
          _
        %s376 = sand.u32 %s135, 1
        %s377 = scalar_lea.sflag [#allocation10], %s376
        %s378 = sand.u32 %s135, 1
        %s379 = smul.addr %s378, 256
        %s380 = scalar_lea.vmem [#allocation9], %s379
        // Predicated region
        $region61: #{transformer_encoder.1} parent=47 // pred_check
          %p381 = pneg %p148
        $region62: #{transformer_encoder.1} parent=47 // pred_check_branch
          %383 = sbr.rel (%p381) target = $region64
        $region63: #{transformer_encoder.1} parent=47 // pred_region
          %384 = dma.done %s377, 4096
        $region64: #{transformer_encoder.1} parent=47 // pred_fallthru
          _
        %p385 = pneg %p44
        %p386 = pneg %p41
        %s387 = sand.u32 %s57, 1
        %s388 = scalar_lea.sflag [#allocation4], %s387
        %s389 = sand.u32 %s57, 1
        %s390 = smul.addr %s389, 192
        %s391 = scalar_lea.vmem [#allocation3], %s390
        %p392 = pneg %p70
        %p393 = pneg %p67
        %s394 = sand.u32 %s28, 1
        %s395 = scalar_lea.sflag [#allocation7], %s394
        %s396 = sand.u32 %s83, 1
        %s397 = smul.addr %s396, 64
        %s398 = scalar_lea.vmem [#allocation6], %s397
        %p399 = pneg %p96
        %p400 = pneg %p93
        %s401 = sand.u32 %s28, 1
        %s402 = scalar_lea.sflag [#allocation7], %s401
        %s403 = sand.u32 %s109, 1
        %s404 = smul.addr %s403, 256
        %s405 = scalar_lea.vmem [#allocation8], %s404
        %p406 = pneg %p122
        %p407 = pneg %p119
        %s408 = sand.u32 %s135, 1
        %s409 = scalar_lea.sflag [#allocation10], %s408
        %s410 = sand.u32 %s135, 1
        %s411 = smul.addr %s410, 256
        %s412 = scalar_lea.vmem [#allocation9], %s411
        %p413 = pneg %p148
        %p414 = pneg %p145
        %p415 = scmp.lt.s32.totalorder %s28, 1
        %s416 = scalar_select %p415, %s28, 1
        %s417 = smul.addr %s416, 4
        %s418 = scalar_lea.vmem %s5, %s417
        %p419 = pneg %p174
        %p420 = pneg %p171
        %p421 = scmp.lt.s32.totalorder %s28, 1
        %s422 = scalar_select %p421, %s28, 1
        %s423 = smul.addr %s422, 2
        %s424 = smul.addr %s423, 8
        %s425 = scalar_lea.vmem %s6, %s424
        %p426 = pneg %p200
        %p427 = pneg %p197
        %p428 = pneg %p221
        %p429 = pneg %p218
        %p430 = scmp.lt.s32.totalorder %s28, 1
        %s431 = scalar_select %p430, %s28, 1
        %s432 = smul.addr %s431, 4
        %s433 = scalar_lea.vmem %s5, %s432
        %p434 = scmp.lt.s32.totalorder %s28, 1
        %s435 = scalar_select %p434, %s28, 1
        %s436 = smul.addr %s435, 2
        %s437 = smul.addr %s436, 8
        %s438 = scalar_lea.vmem %s6, %s437
        %p440 = scmp.eq.s32.totalorder %s28, 0
        // Predicated region
        $region65: #{transformer_encoder.1} parent=47 // pred_check
          %p441 = pneg %p440
        $region66: #{transformer_encoder.1} parent=47 // pred_check_branch
          %443 = sbr.rel (%p441) target = $region68
        $region67: #{transformer_encoder.1} parent=47 // pred_region
          %v444 = vld [vmem:[%s0] sm:$0xff]
          %v445 = vld [vmem:[%s0 + $0x8] sm:$0xff]
          %v446 = vld [vmem:[%s0 + $0x10] sm:$0xff]
          %v447 = vld [vmem:[%s0 + $0x18] sm:$0xff]
          %448 = vst [vmem:[#allocation2] sm:$0xff] %v444
          %449 = vst [vmem:[#allocation2 + $0x8] sm:$0xff] %v445
          %450 = vst [vmem:[#allocation2 + $0x10] sm:$0xff] %v446
          %451 = vst [vmem:[#allocation2 + $0x18] sm:$0xff] %v447
        $region68: #{transformer_encoder.1} parent=47 // pred_fallthru
          _
        %v452 = vld [vmem:[#allocation2] sm:$0xff]
        %v453 = vld [vmem:[#allocation2 + $0x8] sm:$0xff]
        %v454 = vld [vmem:[#allocation2 + $0x10] sm:$0xff]
        %v455 = vld [vmem:[#allocation2 + $0x18] sm:$0xff]
        %v456 = vld [vmem:[%s353] sm:$0xff]
        %v457 = vld [vmem:[%s353 + $0x8] sm:$0xf]
        %v458 = vld [vmem:[%s353 + $0xc] sm:$0xff]
        %v459 = vld [vmem:[%s353 + $0x14] sm:$0xf]
        %v460 = vld [vmem:[%s353 + $0x18] sm:$0xff]
        %v461 = vld [vmem:[%s353 + $0x20] sm:$0xf]
        %v462 = vld [vmem:[%s353 + $0x24] sm:$0xff]
        %v463 = vld [vmem:[%s353 + $0x2c] sm:$0xf]
        %v464 = vld [vmem:[%s353 + $0x30] sm:$0xff]
        %v465 = vld [vmem:[%s353 + $0x38] sm:$0xf]
        %v466 = vld [vmem:[%s353 + $0x3c] sm:$0xff]
        %v467 = vld [vmem:[%s353 + $0x44] sm:$0xf]
        %v468 = vld [vmem:[%s353 + $0x48] sm:$0xff]
        %v469 = vld [vmem:[%s353 + $0x50] sm:$0xf]
        %v470 = vld [vmem:[%s353 + $0x54] sm:$0xff]
        %v471 = vld [vmem:[%s353 + $0x5c] sm:$0xf]
        %v472 = vld [vmem:[%s353 + $0x60] sm:$0xff]
        %v473 = vld [vmem:[%s353 + $0x68] sm:$0xf]
        %v474 = vld [vmem:[%s353 + $0x6c] sm:$0xff]
        %v475 = vld [vmem:[%s353 + $0x74] sm:$0xf]
        %v476 = vld [vmem:[%s353 + $0x78] sm:$0xff]
        %v477 = vld [vmem:[%s353 + $0x80] sm:$0xf]
        %v478 = vld [vmem:[%s353 + $0x84] sm:$0xff]
        %v479 = vld [vmem:[%s353 + $0x8c] sm:$0xf]
        %v480 = vld [vmem:[%s353 + $0x90] sm:$0xff]
        %v481 = vld [vmem:[%s353 + $0x98] sm:$0xf]
        %v482 = vld [vmem:[%s353 + $0x9c] sm:$0xff]
        %v483 = vld [vmem:[%s353 + $0xa4] sm:$0xf]
        %v484 = vld [vmem:[%s353 + $0xa8] sm:$0xff]
        %v485 = vld [vmem:[%s353 + $0xb0] sm:$0xf]
        %v486 = vld [vmem:[%s353 + $0xb4] sm:$0xff]
        %v487 = vld [vmem:[%s353 + $0xbc] sm:$0xf]
        %v488 = vld [vmem:[%s362] sm:$0xf]
        %v489 = vld [vmem:[%s362 + $0x4] sm:$0xf]
        %v490 = vld [vmem:[%s362 + $0x8] sm:$0xf]
        %v491 = vld [vmem:[%s362 + $0xc] sm:$0xf]
        %v492 = vld [vmem:[%s362 + $0x10] sm:$0xf]
        %v493 = vld [vmem:[%s362 + $0x14] sm:$0xf]
        %v494 = vld [vmem:[%s362 + $0x18] sm:$0xf]
        %v495 = vld [vmem:[%s362 + $0x1c] sm:$0xf]
        %v496 = vld [vmem:[%s362 + $0x20] sm:$0xf]
        %v497 = vld [vmem:[%s362 + $0x24] sm:$0xf]
        %v498 = vld [vmem:[%s362 + $0x28] sm:$0xf]
        %v499 = vld [vmem:[%s362 + $0x2c] sm:$0xf]
        %v500 = vld [vmem:[%s362 + $0x30] sm:$0xf]
        %v501 = vld [vmem:[%s362 + $0x34] sm:$0xf]
        %v502 = vld [vmem:[%s362 + $0x38] sm:$0xf]
        %v503 = vld [vmem:[%s362 + $0x3c] sm:$0xf]
        %v504 = vld [vmem:[%s371] sm:$0xff]
        %v505 = vld [vmem:[%s371 + $0x8] sm:$0xff]
        %v506 = vld [vmem:[%s371 + $0x10] sm:$0xff]
        %v507 = vld [vmem:[%s371 + $0x18] sm:$0xff]
        %v508 = vld [vmem:[%s371 + $0x20] sm:$0xff]
        %v509 = vld [vmem:[%s371 + $0x28] sm:$0xff]
        %v510 = vld [vmem:[%s371 + $0x30] sm:$0xff]
        %v511 = vld [vmem:[%s371 + $0x38] sm:$0xff]
        %v512 = vld [vmem:[%s371 + $0x40] sm:$0xff]
        %v513 = vld [vmem:[%s371 + $0x48] sm:$0xff]
        %v514 = vld [vmem:[%s371 + $0x50] sm:$0xff]
        %v515 = vld [vmem:[%s371 + $0x58] sm:$0xff]
        %v516 = vld [vmem:[%s371 + $0x60] sm:$0xff]
        %v517 = vld [vmem:[%s371 + $0x68] sm:$0xff]
        %v518 = vld [vmem:[%s371 + $0x70] sm:$0xff]
        %v519 = vld [vmem:[%s371 + $0x78] sm:$0xff]
        %v520 = vld [vmem:[%s371 + $0x80] sm:$0xff]
        %v521 = vld [vmem:[%s371 + $0x88] sm:$0xff]
        %v522 = vld [vmem:[%s371 + $0x90] sm:$0xff]
        %v523 = vld [vmem:[%s371 + $0x98] sm:$0xff]
        %v524 = vld [vmem:[%s371 + $0xa0] sm:$0xff]
        %v525 = vld [vmem:[%s371 + $0xa8] sm:$0xff]
        %v526 = vld [vmem:[%s371 + $0xb0] sm:$0xff]
        %v527 = vld [vmem:[%s371 + $0xb8] sm:$0xff]
        %v528 = vld [vmem:[%s371 + $0xc0] sm:$0xff]
        %v529 = vld [vmem:[%s371 + $0xc8] sm:$0xff]
        %v530 = vld [vmem:[%s371 + $0xd0] sm:$0xff]
        %v531 = vld [vmem:[%s371 + $0xd8] sm:$0xff]
        %v532 = vld [vmem:[%s371 + $0xe0] sm:$0xff]
        %v533 = vld [vmem:[%s371 + $0xe8] sm:$0xff]
        %v534 = vld [vmem:[%s371 + $0xf0] sm:$0xff]
        %v535 = vld [vmem:[%s371 + $0xf8] sm:$0xff]
        %v536 = vld [vmem:[%s380] sm:$0xf]
        %v537 = vld [vmem:[%s380 + $0x4] sm:$0xf]
        %v538 = vld [vmem:[%s380 + $0x8] sm:$0xf]
        %v539 = vld [vmem:[%s380 + $0xc] sm:$0xf]
        %v540 = vld [vmem:[%s380 + $0x10] sm:$0xf]
        %v541 = vld [vmem:[%s380 + $0x14] sm:$0xf]
        %v542 = vld [vmem:[%s380 + $0x18] sm:$0xf]
        %v543 = vld [vmem:[%s380 + $0x1c] sm:$0xf]
        %v544 = vld [vmem:[%s380 + $0x20] sm:$0xf]
        %v545 = vld [vmem:[%s380 + $0x24] sm:$0xf]
        %v546 = vld [vmem:[%s380 + $0x28] sm:$0xf]
        %v547 = vld [vmem:[%s380 + $0x2c] sm:$0xf]
        %v548 = vld [vmem:[%s380 + $0x30] sm:$0xf]
        %v549 = vld [vmem:[%s380 + $0x34] sm:$0xf]
        %v550 = vld [vmem:[%s380 + $0x38] sm:$0xf]
        %v551 = vld [vmem:[%s380 + $0x3c] sm:$0xf]
        %v552 = vld [vmem:[%s380 + $0x40] sm:$0xf]
        %v553 = vld [vmem:[%s380 + $0x44] sm:$0xf]
        %v554 = vld [vmem:[%s380 + $0x48] sm:$0xf]
        %v555 = vld [vmem:[%s380 + $0x4c] sm:$0xf]
        %v556 = vld [vmem:[%s380 + $0x50] sm:$0xf]
        %v557 = vld [vmem:[%s380 + $0x54] sm:$0xf]
        %v558 = vld [vmem:[%s380 + $0x58] sm:$0xf]
        %v559 = vld [vmem:[%s380 + $0x5c] sm:$0xf]
        %v560 = vld [vmem:[%s380 + $0x60] sm:$0xf]
        %v561 = vld [vmem:[%s380 + $0x64] sm:$0xf]
        %v562 = vld [vmem:[%s380 + $0x68] sm:$0xf]
        %v563 = vld [vmem:[%s380 + $0x6c] sm:$0xf]
        %v564 = vld [vmem:[%s380 + $0x70] sm:$0xf]
        %v565 = vld [vmem:[%s380 + $0x74] sm:$0xf]
        %v566 = vld [vmem:[%s380 + $0x78] sm:$0xf]
        %v567 = vld [vmem:[%s380 + $0x7c] sm:$0xf]
        %v568 = vld [vmem:[%s380 + $0x80] sm:$0xf]
        %v569 = vld [vmem:[%s380 + $0x84] sm:$0xf]
        %v570 = vld [vmem:[%s380 + $0x88] sm:$0xf]
        %v571 = vld [vmem:[%s380 + $0x8c] sm:$0xf]
        %v572 = vld [vmem:[%s380 + $0x90] sm:$0xf]
        %v573 = vld [vmem:[%s380 + $0x94] sm:$0xf]
        %v574 = vld [vmem:[%s380 + $0x98] sm:$0xf]
        %v575 = vld [vmem:[%s380 + $0x9c] sm:$0xf]
        %v576 = vld [vmem:[%s380 + $0xa0] sm:$0xf]
        %v577 = vld [vmem:[%s380 + $0xa4] sm:$0xf]
        %v578 = vld [vmem:[%s380 + $0xa8] sm:$0xf]
        %v579 = vld [vmem:[%s380 + $0xac] sm:$0xf]
        %v580 = vld [vmem:[%s380 + $0xb0] sm:$0xf]
        %v581 = vld [vmem:[%s380 + $0xb4] sm:$0xf]
        %v582 = vld [vmem:[%s380 + $0xb8] sm:$0xf]
        %v583 = vld [vmem:[%s380 + $0xbc] sm:$0xf]
        %v584 = vld [vmem:[%s380 + $0xc0] sm:$0xf]
        %v585 = vld [vmem:[%s380 + $0xc4] sm:$0xf]
        %v586 = vld [vmem:[%s380 + $0xc8] sm:$0xf]
        %v587 = vld [vmem:[%s380 + $0xcc] sm:$0xf]
        %v588 = vld [vmem:[%s380 + $0xd0] sm:$0xf]
        %v589 = vld [vmem:[%s380 + $0xd4] sm:$0xf]
        %v590 = vld [vmem:[%s380 + $0xd8] sm:$0xf]
        %v591 = vld [vmem:[%s380 + $0xdc] sm:$0xf]
        %v592 = vld [vmem:[%s380 + $0xe0] sm:$0xf]
        %v593 = vld [vmem:[%s380 + $0xe4] sm:$0xf]
        %v594 = vld [vmem:[%s380 + $0xe8] sm:$0xf]
        %v595 = vld [vmem:[%s380 + $0xec] sm:$0xf]
        %v596 = vld [vmem:[%s380 + $0xf0] sm:$0xf]
        %v597 = vld [vmem:[%s380 + $0xf4] sm:$0xf]
        %v598 = vld [vmem:[%s380 + $0xf8] sm:$0xf]
        %v599 = vld [vmem:[%s380 + $0xfc] sm:$0xf]
        %v600 = vld [vmem:[%s433] sm:$0xf]
        %v601 = vld [vmem:[%s438] sm:$0xff]
        %v602 = vld [vmem:[%s438 + $0x8] sm:$0x1]
        %v603 = vpack.c.bf16 %v453, %v452
        %v604 = vpack.c.bf16 %v455, %v454
        %v637 = vunpack.c.l.b16 %v456
        %v638 = vunpack.c.h.b16 %v456
        %v639 = vunpack.c.l.b16 %v457
        %v640 = vunpack.c.l.b16 %v458
        %v641 = vunpack.c.h.b16 %v458
        %v642 = vunpack.c.l.b16 %v459
        %v643 = vunpack.c.l.b16 %v460
        %v644 = vunpack.c.h.b16 %v460
        %v645 = vunpack.c.l.b16 %v461
        %v646 = vunpack.c.l.b16 %v462
        %v647 = vunpack.c.h.b16 %v462
        %v648 = vunpack.c.l.b16 %v463
        %v649 = vunpack.c.l.b16 %v464
        %v650 = vunpack.c.h.b16 %v464
        %v651 = vunpack.c.l.b16 %v465
        %v652 = vunpack.c.l.b16 %v466
        %v653 = vunpack.c.h.b16 %v466
        %v654 = vunpack.c.l.b16 %v467
        %v655 = vunpack.c.l.b16 %v468
        %v656 = vunpack.c.h.b16 %v468
        %v657 = vunpack.c.l.b16 %v469
        %v658 = vunpack.c.l.b16 %v470
        %v659 = vunpack.c.h.b16 %v470
        %v660 = vunpack.c.l.b16 %v471
        %v661 = vunpack.c.l.b16 %v472
        %v662 = vunpack.c.h.b16 %v472
        %v663 = vunpack.c.l.b16 %v473
        %v664 = vunpack.c.l.b16 %v474
        %v665 = vunpack.c.h.b16 %v474
        %v666 = vunpack.c.l.b16 %v475
        %v667 = vunpack.c.l.b16 %v476
        %v668 = vunpack.c.h.b16 %v476
        %v669 = vunpack.c.l.b16 %v477
        %v670 = vunpack.c.l.b16 %v478
        %v671 = vunpack.c.h.b16 %v478
        %v672 = vunpack.c.l.b16 %v479
        %v673 = vunpack.c.l.b16 %v480
        %v674 = vunpack.c.h.b16 %v480
        %v675 = vunpack.c.l.b16 %v481
        %v676 = vunpack.c.l.b16 %v482
        %v677 = vunpack.c.h.b16 %v482
        %v678 = vunpack.c.l.b16 %v483
        %v679 = vunpack.c.l.b16 %v484
        %v680 = vunpack.c.h.b16 %v484
        %v681 = vunpack.c.l.b16 %v485
        %v682 = vunpack.c.l.b16 %v486
        %v683 = vunpack.c.h.b16 %v486
        %v684 = vunpack.c.l.b16 %v487
        %v685 = vpack.c.b16 %v640, %v637
        %v686 = vpack.c.b16 %v641, %v638
        %v687 = vpack.c.b16 %v642, %v639
        %v688 = vpack.c.b16 %v646, %v643
        %v689 = vpack.c.b16 %v647, %v644
        %v690 = vpack.c.b16 %v648, %v645
        %v691 = vpack.c.b16 %v652, %v649
        %v692 = vpack.c.b16 %v653, %v650
        %v693 = vpack.c.b16 %v654, %v651
        %v694 = vpack.c.b16 %v658, %v655
        %v695 = vpack.c.b16 %v659, %v656
        %v696 = vpack.c.b16 %v660, %v657
        %v697 = vpack.c.b16 %v664, %v661
        %v698 = vpack.c.b16 %v665, %v662
        %v699 = vpack.c.b16 %v666, %v663
        %v700 = vpack.c.b16 %v670, %v667
        %v701 = vpack.c.b16 %v671, %v668
        %v702 = vpack.c.b16 %v672, %v669
        %v703 = vpack.c.b16 %v676, %v673
        %v704 = vpack.c.b16 %v677, %v674
        %v705 = vpack.c.b16 %v678, %v675
        %v706 = vpack.c.b16 %v682, %v679
        %v707 = vpack.c.b16 %v683, %v680
        %v708 = vpack.c.b16 %v684, %v681
        %733 = vmatprep.subr.bf16.mxu0 %v686
        %734 = vmatpush1.bf16.msra.mxu0 %v685
        %735 = vmatprep.subr.bf16.mxu0 %v689
        %736 = vmatpush1.bf16.msra.mxu0 %v688
        %737 = vmatprep.subr.bf16.mxu0 %v692
        %738 = vmatpush1.bf16.msra.mxu0 %v691
        %739 = vmatprep.subr.bf16.mxu0 %v695
        %740 = vmatpush1.bf16.msra.mxu0 %v694
        %741 = vmatprep.subr.bf16.mxu0 %v698
        %742 = vmatpush1.bf16.msra.mxu0 %v697
        %743 = vmatprep.subr.bf16.mxu0 %v701
        %744 = vmatpush1.bf16.msra.mxu0 %v700
        %745 = vmatprep.subr.bf16.mxu0 %v704
        %746 = vmatpush1.bf16.msra.mxu0 %v703
        %747 = vmatprep.subr.bf16.mxu0 %v707
        %748 = vmatpush1.bf16.msra.mxu0 %v706
        %749 = vmatprep.subr.bf16.mxu0 0
        %750 = vmatpush1.bf16.msra.mxu0 0
        %751 = vmatprep.subr.bf16.mxu0 0
        %752 = vmatpush1.bf16.msra.mxu0 0
        %753 = vmatprep.subr.bf16.mxu0 0
        %754 = vmatpush1.bf16.msra.mxu0 0
        %755 = vmatprep.subr.bf16.mxu0 0
        %756 = vmatpush1.bf16.msra.mxu0 0
        %757 = vmatprep.subr.bf16.mxu0 0
        %758 = vmatpush1.bf16.msra.mxu0 0
        %759 = vmatprep.subr.bf16.mxu0 0
        %760 = vmatpush1.bf16.msra.mxu0 0
        %761 = vmatprep.subr.bf16.mxu0 0
        %762 = vmatpush1.bf16.msra.mxu0 0
        %763 = vmatprep.subr.bf16.mxu0 0
        %764 = vmatpush1.bf16.msra.mxu0 0
        %765 = vmatprep.mubr.bf16.mxu0 0
        %766 = vmatmul.mubr.bf16.gmra.mrb[0].mxu0 %v603
        %v767 = vpop.f32.mrb[0].mxu0
        %v768 = vadd.f32 0.0, %v767
        %v769 = vpop.f32.mrb[0].mxu0
        %v770 = vadd.f32 0.0, %v769
        %v771 = vpop.f32.mrb[0].mxu0
        %v772 = vadd.f32 0.0, %v771
        %v773 = vpop.f32.mrb[0].mxu0
        %v774 = vadd.f32 0.0, %v773
        %775 = vmatprep.mubr.bf16.mxu0 0
        %776 = vmatmul.mubr.bf16.gmra.mrb[0].mxu0 %v604
        %v777 = vpop.f32.mrb[0].mxu0
        %v778 = vadd.f32 0.0, %v777
        %v779 = vpop.f32.mrb[0].mxu0
        %v780 = vadd.f32 0.0, %v779
        %v781 = vpop.f32.mrb[0].mxu0
        %v782 = vadd.f32 0.0, %v781
        %v783 = vpop.f32.mrb[0].mxu0
        %v784 = vadd.f32 0.0, %v783
        %785 = vdwg.mxu0
        %786 = vmatprep.subr.bf16.mxu0 0
        %787 = vmatpush1.bf16.msra.mxu0 %v687
        %788 = vmatprep.subr.bf16.mxu0 0
        %789 = vmatpush1.bf16.msra.mxu0 %v690
        %790 = vmatprep.subr.bf16.mxu0 0
        %791 = vmatpush1.bf16.msra.mxu0 %v693
        %792 = vmatprep.subr.bf16.mxu0 0
        %793 = vmatpush1.bf16.msra.mxu0 %v696
        %794 = vmatprep.subr.bf16.mxu0 0
        %795 = vmatpush1.bf16.msra.mxu0 %v699
        %796 = vmatprep.subr.bf16.mxu0 0
        %797 = vmatpush1.bf16.msra.mxu0 %v702
        %798 = vmatprep.subr.bf16.mxu0 0
        %799 = vmatpush1.bf16.msra.mxu0 %v705
        %800 = vmatprep.subr.bf16.mxu0 0
        %801 = vmatpush1.bf16.msra.mxu0 %v708
        %802 = vmatprep.subr.bf16.mxu0 0
        %803 = vmatpush1.bf16.msra.mxu0 0
        %804 = vmatprep.subr.bf16.mxu0 0
        %805 = vmatpush1.bf16.msra.mxu0 0
        %806 = vmatprep.subr.bf16.mxu0 0
        %807 = vmatpush1.bf16.msra.mxu0 0
        %808 = vmatprep.subr.bf16.mxu0 0
        %809 = vmatpush1.bf16.msra.mxu0 0
        %810 = vmatprep.subr.bf16.mxu0 0
        %811 = vmatpush1.bf16.msra.mxu0 0
        %812 = vmatprep.subr.bf16.mxu0 0
        %813 = vmatpush1.bf16.msra.mxu0 0
        %814 = vmatprep.subr.bf16.mxu0 0
        %815 = vmatpush1.bf16.msra.mxu0 0
        %816 = vmatprep.subr.bf16.mxu0 0
        %817 = vmatpush1.bf16.msra.mxu0 0
        %818 = vmatprep.mubr.bf16.mxu0 0
        %819 = vmatmul.mubr.bf16.gmra.mrb[0].mxu0 %v603
        %v820 = vpop.f32.mrb[0].mxu0
        %v821 = vadd.f32 0.0, %v820
        %v822 = vpop.f32.mrb[0].mxu0
        %v823 = vpop.f32.mrb[0].mxu0
        %v824 = vadd.f32 0.0, %v823
        %v825 = vpop.f32.mrb[0].mxu0
        %826 = vmatprep.mubr.bf16.mxu0 0
        %827 = vmatmul.mubr.bf16.gmra.mrb[0].mxu0 %v604
        %v828 = vpop.f32.mrb[0].mxu0
        %v829 = vadd.f32 0.0, %v828
        %v830 = vpop.f32.mrb[0].mxu0
        %v831 = vpop.f32.mrb[0].mxu0
        %v832 = vadd.f32 0.0, %v831
        %v833 = vpop.f32.mrb[0].mxu0
        %834 = vdwg.mxu0
        %v835 = vlaneseq
        %v836 = vshrl.u32 %v835, 7
        %v837 = vsub.s32 0, %v836
        %v838 = vrot.slane %v601, %v837
        %v839 = vadd.f32 %v768, %v838
        %v840 = vadd.f32 %v772, %v838
        %v841 = vadd.f32 %v778, %v838
        %v842 = vadd.f32 %v782, %v838
        %v843 = vlaneseq
        %v844 = vshrl.u32 %v843, 7
        %v845 = vsub.s32 1, %v844
        %v846 = vrot.slane %v601, %v845
        %v847 = vadd.f32 %v770, %v846
        %v848 = vadd.f32 %v774, %v846
        %v849 = vadd.f32 %v780, %v846
        %v850 = vadd.f32 %v784, %v846
        %v851 = vlaneseq
        %v852 = vshrl.u32 %v851, 7
        %v853 = vsub.s32 2, %v852
        %v854 = vrot.slane %v601, %v853
        %v855 = vadd.f32 %v821, %v854
        %v856 = vadd.f32 %v824, %v854
        %v857 = vadd.f32 %v829, %v854
        %v858 = vadd.f32 %v832, %v854
        %v859 = vpack.c.bf16 %v840, %v839
        %v860 = vpack.c.bf16 %v842, %v841
        %v861 = vpack.c.bf16 %v848, %v847
        %v862 = vpack.c.bf16 %v850, %v849
        %v863 = vpack.c.bf16 %v856, %v855
        %v864 = vpack.c.bf16 %v858, %v857
        %vm865 = vcmask 130048
        %v867 = vsel %vm865, %v859, 0
        %v870 = vsel %vm865, %v861, 0
        %872 = vmatprep.subr.bf16.mxu0 0
        %873 = vmatpush1.bf16.xpose.msra.mxu0 %v870
        %874 = vmatprep.subr.bf16.mxu0 0
        %875 = vmatpush1.bf16.xpose.msra.mxu0 0
        %876 = vmatprep.subr.bf16.mxu0 0
        %877 = vmatpush1.bf16.xpose.msra.mxu0 0
        %878 = vmatprep.subr.bf16.mxu0 0
        %879 = vmatpush1.bf16.xpose.msra.mxu0 0
        %880 = vmatprep.subr.bf16.mxu0 0
        %881 = vmatpush1.bf16.xpose.msra.mxu0 0
        %882 = vmatprep.subr.bf16.mxu0 0
        %883 = vmatpush1.bf16.xpose.msra.mxu0 0
        %884 = vmatprep.subr.bf16.mxu0 0
        %885 = vmatpush1.bf16.xpose.msra.mxu0 0
        %886 = vmatprep.subr.bf16.mxu0 0
        %887 = vmatpush1.bf16.xpose.msra.mxu0 0
        %888 = vmatprep.subr.bf16.mxu0 0
        %889 = vmatpush1.bf16.xpose.msra.mxu0 0
        %890 = vmatprep.subr.bf16.mxu0 0
        %891 = vmatpush1.bf16.xpose.msra.mxu0 0
        %892 = vmatprep.subr.bf16.mxu0 0
        %893 = vmatpush1.bf16.xpose.msra.mxu0 0
        %894 = vmatprep.subr.bf16.mxu0 0
        %895 = vmatpush1.bf16.xpose.msra.mxu0 0
        %896 = vmatprep.subr.bf16.mxu0 0
        %897 = vmatpush1.bf16.xpose.msra.mxu0 0
        %898 = vmatprep.subr.bf16.mxu0 0
        %899 = vmatpush1.bf16.xpose.msra.mxu0 0
        %900 = vmatprep.subr.bf16.mxu0 0
        %901 = vmatpush1.bf16.xpose.msra.mxu0 0
        %902 = vmatprep.subr.bf16.mxu0 0
        %903 = vmatpush1.bf16.xpose.msra.mxu0 0
        %904 = vmatprep.mubr.bf16.mxu0 0
        %905 = vmatmul.mubr.bf16.gmra.mrb[0].mxu0 %v867
        %v906 = vpop.f32.mrb[0].mxu0
        %v907 = vadd.f32 0.0, %v906
        %v908 = vpop.f32.mrb[0].mxu0
        %v909 = vpop.f32.mrb[0].mxu0
        %v910 = vadd.f32 0.0, %v909
        %v911 = vpop.f32.mrb[0].mxu0
        %912 = vdwg.mxu0
        %v914 = vsel %vm865, %v860, 0
        %v917 = vsel %vm865, %v862, 0
        %919 = vmatprep.subr.bf16.mxu0 0
        %920 = vmatpush1.bf16.xpose.msra.mxu0 %v917
        %921 = vmatprep.subr.bf16.mxu0 0
        %922 = vmatpush1.bf16.xpose.msra.mxu0 0
        %923 = vmatprep.subr.bf16.mxu0 0
        %924 = vmatpush1.bf16.xpose.msra.mxu0 0
        %925 = vmatprep.subr.bf16.mxu0 0
        %926 = vmatpush1.bf16.xpose.msra.mxu0 0
        %927 = vmatprep.subr.bf16.mxu0 0
        %928 = vmatpush1.bf16.xpose.msra.mxu0 0
        %929 = vmatprep.subr.bf16.mxu0 0
        %930 = vmatpush1.bf16.xpose.msra.mxu0 0
        %931 = vmatprep.subr.bf16.mxu0 0
        %932 = vmatpush1.bf16.xpose.msra.mxu0 0
        %933 = vmatprep.subr.bf16.mxu0 0
        %934 = vmatpush1.bf16.xpose.msra.mxu0 0
        %935 = vmatprep.subr.bf16.mxu0 0
        %936 = vmatpush1.bf16.xpose.msra.mxu0 0
        %937 = vmatprep.subr.bf16.mxu0 0
        %938 = vmatpush1.bf16.xpose.msra.mxu0 0
        %939 = vmatprep.subr.bf16.mxu0 0
        %940 = vmatpush1.bf16.xpose.msra.mxu0 0
        %941 = vmatprep.subr.bf16.mxu0 0
        %942 = vmatpush1.bf16.xpose.msra.mxu0 0
        %943 = vmatprep.subr.bf16.mxu0 0
        %944 = vmatpush1.bf16.xpose.msra.mxu0 0
        %945 = vmatprep.subr.bf16.mxu0 0
        %946 = vmatpush1.bf16.xpose.msra.mxu0 0
        %947 = vmatprep.subr.bf16.mxu0 0
        %948 = vmatpush1.bf16.xpose.msra.mxu0 0
        %949 = vmatprep.subr.bf16.mxu0 0
        %950 = vmatpush1.bf16.xpose.msra.mxu0 0
        %951 = vmatprep.mubr.bf16.mxu0 0
        %952 = vmatmul.mubr.bf16.gmra.mrb[0].mxu0 %v914
        %v953 = vpop.f32.mrb[0].mxu0
        %v954 = vadd.f32 0.0, %v953
        %v955 = vpop.f32.mrb[0].mxu0
        %v956 = vpop.f32.mrb[0].mxu0
        %v957 = vadd.f32 0.0, %v956
        %v958 = vpop.f32.mrb[0].mxu0
        %959 = vdwg.mxu0
        %v960 = vsel %vm865, %v907, -inf
        %961 = vmax.xlane.f32.xlu0 %v960
        %v962 = vpop.xlane.xlu0 %961
        %v963 = vsel %vm865, %v910, -inf
        %964 = vmax.xlane.f32.xlu0 %v963
        %v965 = vpop.xlane.xlu0 %964
        %v966 = vsel %vm865, %v954, -inf
        %967 = vmax.xlane.f32.xlu0 %v966
        %v968 = vpop.xlane.xlu0 %967
        %v969 = vsel %vm865, %v957, -inf
        %970 = vmax.xlane.f32.xlu0 %v969
        %v971 = vpop.xlane.xlu0 %970
        %v972 = vsub.f32 %v907, %v962
        %v973 = vsub.f32 %v910, %v965
        %v974 = vsub.f32 %v954, %v968
        %v975 = vsub.f32 %v957, %v971
        %v976 = vmul.f32 %v972, 1.442695
        %v977 = vpow.pop %v976
        %v978 = vmul.f32 %v973, 1.442695
        %v979 = vpow.pop %v978
        %v980 = vmul.f32 %v974, 1.442695
        %v981 = vpow.pop %v980
        %v982 = vmul.f32 %v975, 1.442695
        %v983 = vpow.pop %v982
        %v984 = vsel %vm865, %v977, 0.0
        %985 = vadd.xlane.f32.xlu0 %v984
        %v986 = vpop.xlane.xlu0 %985
        %v987 = vsel %vm865, %v979, 0.0
        %988 = vadd.xlane.f32.xlu0 %v987
        %v989 = vpop.xlane.xlu0 %988
        %v990 = vsel %vm865, %v981, 0.0
        %991 = vadd.xlane.f32.xlu0 %v990
        %v992 = vpop.xlane.xlu0 %991
        %v993 = vsel %vm865, %v983, 0.0
        %994 = vadd.xlane.f32.xlu0 %v993
        %v995 = vpop.xlane.xlu0 %994
        %v996 = vrcp.pop %v986
        %v997 = vmul.f32 %v977, %v996
        %v998 = vrcp.pop %v989
        %v999 = vmul.f32 %v979, %v998
        %v1000 = vrcp.pop %v992
        %v1001 = vmul.f32 %v981, %v1000
        %v1002 = vrcp.pop %v995
        %v1003 = vmul.f32 %v983, %v1002
        %v1004 = vpack.c.bf16 %v999, %v997
        %v1005 = vpack.c.bf16 %v1003, %v1001
        %v1007 = vsel %vm865, %v1004, 0
        %1009 = vmatprep.subr.bf16.mxu0 0
        %1010 = vmatpush1.bf16.msra.mxu0 %v863
        %1011 = vmatprep.subr.bf16.mxu0 0
        %1012 = vmatpush1.bf16.msra.mxu0 0
        %1013 = vmatprep.subr.bf16.mxu0 0
        %1014 = vmatpush1.bf16.msra.mxu0 0
        %1015 = vmatprep.subr.bf16.mxu0 0
        %1016 = vmatpush1.bf16.msra.mxu0 0
        %1017 = vmatprep.subr.bf16.mxu0 0
        %1018 = vmatpush1.bf16.msra.mxu0 0
        %1019 = vmatprep.subr.bf16.mxu0 0
        %1020 = vmatpush1.bf16.msra.mxu0 0
        %1021 = vmatprep.subr.bf16.mxu0 0
        %1022 = vmatpush1.bf16.msra.mxu0 0
        %1023 = vmatprep.subr.bf16.mxu0 0
        %1024 = vmatpush1.bf16.msra.mxu0 0
        %1025 = vmatprep.subr.bf16.mxu0 0
        %1026 = vmatpush1.bf16.msra.mxu0 0
        %1027 = vmatprep.subr.bf16.mxu0 0
        %1028 = vmatpush1.bf16.msra.mxu0 0
        %1029 = vmatprep.subr.bf16.mxu0 0
        %1030 = vmatpush1.bf16.msra.mxu0 0
        %1031 = vmatprep.subr.bf16.mxu0 0
        %1032 = vmatpush1.bf16.msra.mxu0 0
        %1033 = vmatprep.subr.bf16.mxu0 0
        %1034 = vmatpush1.bf16.msra.mxu0 0
        %1035 = vmatprep.subr.bf16.mxu0 0
        %1036 = vmatpush1.bf16.msra.mxu0 0
        %1037 = vmatprep.subr.bf16.mxu0 0
        %1038 = vmatpush1.bf16.msra.mxu0 0
        %1039 = vmatprep.subr.bf16.mxu0 0
        %1040 = vmatpush1.bf16.msra.mxu0 0
        %1041 = vmatprep.mubr.bf16.mxu0 0
        %1042 = vmatmul.mubr.bf16.gmra.mrb[0].mxu0 %v1007
        %v1043 = vpop.f32.mrb[0].mxu0
        %v1044 = vadd.f32 0.0, %v1043
        %v1045 = vpop.f32.mrb[0].mxu0
        %v1046 = vpop.f32.mrb[0].mxu0
        %v1047 = vadd.f32 0.0, %v1046
        %v1048 = vpop.f32.mrb[0].mxu0
        %1049 = vdwg.mxu0
        %v1051 = vsel %vm865, %v1005, 0
        %1053 = vmatprep.subr.bf16.mxu0 0
        %1054 = vmatpush1.bf16.msra.mxu0 %v864
        %1055 = vmatprep.subr.bf16.mxu0 0
        %1056 = vmatpush1.bf16.msra.mxu0 0
        %1057 = vmatprep.subr.bf16.mxu0 0
        %1058 = vmatpush1.bf16.msra.mxu0 0
        %1059 = vmatprep.subr.bf16.mxu0 0
        %1060 = vmatpush1.bf16.msra.mxu0 0
        %1061 = vmatprep.subr.bf16.mxu0 0
        %1062 = vmatpush1.bf16.msra.mxu0 0
        %1063 = vmatprep.subr.bf16.mxu0 0
        %1064 = vmatpush1.bf16.msra.mxu0 0
        %1065 = vmatprep.subr.bf16.mxu0 0
        %1066 = vmatpush1.bf16.msra.mxu0 0
        %1067 = vmatprep.subr.bf16.mxu0 0
        %1068 = vmatpush1.bf16.msra.mxu0 0
        %1069 = vmatprep.subr.bf16.mxu0 0
        %1070 = vmatpush1.bf16.msra.mxu0 0
        %1071 = vmatprep.subr.bf16.mxu0 0
        %1072 = vmatpush1.bf16.msra.mxu0 0
        %1073 = vmatprep.subr.bf16.mxu0 0
        %1074 = vmatpush1.bf16.msra.mxu0 0
        %1075 = vmatprep.subr.bf16.mxu0 0
        %1076 = vmatpush1.bf16.msra.mxu0 0
        %1077 = vmatprep.subr.bf16.mxu0 0
        %1078 = vmatpush1.bf16.msra.mxu0 0
        %1079 = vmatprep.subr.bf16.mxu0 0
        %1080 = vmatpush1.bf16.msra.mxu0 0
        %1081 = vmatprep.subr.bf16.mxu0 0
        %1082 = vmatpush1.bf16.msra.mxu0 0
        %1083 = vmatprep.subr.bf16.mxu0 0
        %1084 = vmatpush1.bf16.msra.mxu0 0
        %1085 = vmatprep.mubr.bf16.mxu0 0
        %1086 = vmatmul.mubr.bf16.gmra.mrb[0].mxu0 %v1051
        %v1087 = vpop.f32.mrb[0].mxu0
        %v1088 = vadd.f32 0.0, %v1087
        %v1089 = vpop.f32.mrb[0].mxu0
        %v1090 = vpop.f32.mrb[0].mxu0
        %v1091 = vadd.f32 0.0, %v1090
        %v1092 = vpop.f32.mrb[0].mxu0
        %1093 = vdwg.mxu0
        %1095 = vrot.lane.b32.xlu0 %v859, 112
        %v1096 = vpop.permute.xlu0 %1095
        %1098 = vrot.lane.b32.xlu0 %v861, 112
        %v1099 = vpop.permute.xlu0 %1098
        %v1101 = vsel %vm865, %v1096, 0
        %v1104 = vsel %vm865, %v1099, 0
        %1106 = vmatprep.subr.bf16.mxu0 0
        %1107 = vmatpush1.bf16.xpose.msra.mxu0 %v1104
        %1108 = vmatprep.subr.bf16.mxu0 0
        %1109 = vmatpush1.bf16.xpose.msra.mxu0 0
        %1110 = vmatprep.subr.bf16.mxu0 0
        %1111 = vmatpush1.bf16.xpose.msra.mxu0 0
        %1112 = vmatprep.subr.bf16.mxu0 0
        %1113 = vmatpush1.bf16.xpose.msra.mxu0 0
        %1114 = vmatprep.subr.bf16.mxu0 0
        %1115 = vmatpush1.bf16.xpose.msra.mxu0 0
        %1116 = vmatprep.subr.bf16.mxu0 0
        %1117 = vmatpush1.bf16.xpose.msra.mxu0 0
        %1118 = vmatprep.subr.bf16.mxu0 0
        %1119 = vmatpush1.bf16.xpose.msra.mxu0 0
        %1120 = vmatprep.subr.bf16.mxu0 0
        %1121 = vmatpush1.bf16.xpose.msra.mxu0 0
        %1122 = vmatprep.subr.bf16.mxu0 0
        %1123 = vmatpush1.bf16.xpose.msra.mxu0 0
        %1124 = vmatprep.subr.bf16.mxu0 0
        %1125 = vmatpush1.bf16.xpose.msra.mxu0 0
        %1126 = vmatprep.subr.bf16.mxu0 0
        %1127 = vmatpush1.bf16.xpose.msra.mxu0 0
        %1128 = vmatprep.subr.bf16.mxu0 0
        %1129 = vmatpush1.bf16.xpose.msra.mxu0 0
        %1130 = vmatprep.subr.bf16.mxu0 0
        %1131 = vmatpush1.bf16.xpose.msra.mxu0 0
        %1132 = vmatprep.subr.bf16.mxu0 0
        %1133 = vmatpush1.bf16.xpose.msra.mxu0 0
        %1134 = vmatprep.subr.bf16.mxu0 0
        %1135 = vmatpush1.bf16.xpose.msra.mxu0 0
        %1136 = vmatprep.subr.bf16.mxu0 0
        %1137 = vmatpush1.bf16.xpose.msra.mxu0 0
        %1138 = vmatprep.mubr.bf16.mxu0 0
        %1139 = vmatmul.mubr.bf16.gmra.mrb[0].mxu0 %v1101
        %v1140 = vpop.f32.mrb[0].mxu0
        %v1141 = vadd.f32 0.0, %v1140
        %v1142 = vpop.f32.mrb[0].mxu0
        %v1143 = vpop.f32.mrb[0].mxu0
        %v1144 = vadd.f32 0.0, %v1143
        %v1145 = vpop.f32.mrb[0].mxu0
        %1146 = vdwg.mxu0
        %1148 = vrot.lane.b32.xlu0 %v860, 112
        %v1149 = vpop.permute.xlu0 %1148
        %1151 = vrot.lane.b32.xlu0 %v862, 112
        %v1152 = vpop.permute.xlu0 %1151
        %v1154 = vsel %vm865, %v1149, 0
        %v1157 = vsel %vm865, %v1152, 0
        %1159 = vmatprep.subr.bf16.mxu0 0
        %1160 = vmatpush1.bf16.xpose.msra.mxu0 %v1157
        %1161 = vmatprep.subr.bf16.mxu0 0
        %1162 = vmatpush1.bf16.xpose.msra.mxu0 0
        %1163 = vmatprep.subr.bf16.mxu0 0
        %1164 = vmatpush1.bf16.xpose.msra.mxu0 0
        %1165 = vmatprep.subr.bf16.mxu0 0
        %1166 = vmatpush1.bf16.xpose.msra.mxu0 0
        %1167 = vmatprep.subr.bf16.mxu0 0
        %1168 = vmatpush1.bf16.xpose.msra.mxu0 0
        %1169 = vmatprep.subr.bf16.mxu0 0
        %1170 = vmatpush1.bf16.xpose.msra.mxu0 0
        %1171 = vmatprep.subr.bf16.mxu0 0
        %1172 = vmatpush1.bf16.xpose.msra.mxu0 0
        %1173 = vmatprep.subr.bf16.mxu0 0
        %1174 = vmatpush1.bf16.xpose.msra.mxu0 0
        %1175 = vmatprep.subr.bf16.mxu0 0
        %1176 = vmatpush1.bf16.xpose.msra.mxu0 0
        %1177 = vmatprep.subr.bf16.mxu0 0
        %1178 = vmatpush1.bf16.xpose.msra.mxu0 0
        %1179 = vmatprep.subr.bf16.mxu0 0
        %1180 = vmatpush1.bf16.xpose.msra.mxu0 0
        %1181 = vmatprep.subr.bf16.mxu0 0
        %1182 = vmatpush1.bf16.xpose.msra.mxu0 0
        %1183 = vmatprep.subr.bf16.mxu0 0
        %1184 = vmatpush1.bf16.xpose.msra.mxu0 0
        %1185 = vmatprep.subr.bf16.mxu0 0
        %1186 = vmatpush1.bf16.xpose.msra.mxu0 0
        %1187 = vmatprep.subr.bf16.mxu0 0
        %1188 = vmatpush1.bf16.xpose.msra.mxu0 0
        %1189 = vmatprep.subr.bf16.mxu0 0
        %1190 = vmatpush1.bf16.xpose.msra.mxu0 0
        %1191 = vmatprep.mubr.bf16.mxu0 0
        %1192 = vmatmul.mubr.bf16.gmra.mrb[0].mxu0 %v1154
        %v1193 = vpop.f32.mrb[0].mxu0
        %v1194 = vadd.f32 0.0, %v1193
        %v1195 = vpop.f32.mrb[0].mxu0
        %v1196 = vpop.f32.mrb[0].mxu0
        %v1197 = vadd.f32 0.0, %v1196
        %v1198 = vpop.f32.mrb[0].mxu0
        %1199 = vdwg.mxu0
        %v1200 = vsel %vm865, %v1141, -inf
        %1201 = vmax.xlane.f32.xlu0 %v1200
        %v1202 = vpop.xlane.xlu0 %1201
        %v1203 = vsel %vm865, %v1144, -inf
        %1204 = vmax.xlane.f32.xlu0 %v1203
        %v1205 = vpop.xlane.xlu0 %1204
        %v1206 = vsel %vm865, %v1194, -inf
        %1207 = vmax.xlane.f32.xlu0 %v1206
        %v1208 = vpop.xlane.xlu0 %1207
        %v1209 = vsel %vm865, %v1197, -inf
        %1210 = vmax.xlane.f32.xlu0 %v1209
        %v1211 = vpop.xlane.xlu0 %1210
        %v1212 = vsub.f32 %v1141, %v1202
        %v1213 = vsub.f32 %v1144, %v1205
        %v1214 = vsub.f32 %v1194, %v1208
        %v1215 = vsub.f32 %v1197, %v1211
        %v1216 = vmul.f32 %v1212, 1.442695
        %v1217 = vpow.pop %v1216
        %v1218 = vmul.f32 %v1213, 1.442695
        %v1219 = vpow.pop %v1218
        %v1220 = vmul.f32 %v1214, 1.442695
        %v1221 = vpow.pop %v1220
        %v1222 = vmul.f32 %v1215, 1.442695
        %v1223 = vpow.pop %v1222
        %v1224 = vsel %vm865, %v1217, 0.0
        %1225 = vadd.xlane.f32.xlu0 %v1224
        %v1226 = vpop.xlane.xlu0 %1225
        %v1227 = vsel %vm865, %v1219, 0.0
        %1228 = vadd.xlane.f32.xlu0 %v1227
        %v1229 = vpop.xlane.xlu0 %1228
        %v1230 = vsel %vm865, %v1221, 0.0
        %1231 = vadd.xlane.f32.xlu0 %v1230
        %v1232 = vpop.xlane.xlu0 %1231
        %v1233 = vsel %vm865, %v1223, 0.0
        %1234 = vadd.xlane.f32.xlu0 %v1233
        %v1235 = vpop.xlane.xlu0 %1234
        %v1236 = vrcp.pop %v1226
        %v1237 = vmul.f32 %v1217, %v1236
        %v1238 = vrcp.pop %v1229
        %v1239 = vmul.f32 %v1219, %v1238
        %v1240 = vrcp.pop %v1232
        %v1241 = vmul.f32 %v1221, %v1240
        %v1242 = vrcp.pop %v1235
        %v1243 = vmul.f32 %v1223, %v1242
        %v1244 = vpack.c.bf16 %v1239, %v1237
        %v1245 = vpack.c.bf16 %v1243, %v1241
        %1247 = vrot.lane.b32.xlu0 %v863, 112
        %v1248 = vpop.permute.xlu0 %1247
        %v1251 = vsel %vm865, %v1244, 0
        %1253 = vmatprep.subr.bf16.mxu0 0
        %1254 = vmatpush1.bf16.msra.mxu0 %v1248
        %1255 = vmatprep.subr.bf16.mxu0 0
        %1256 = vmatpush1.bf16.msra.mxu0 0
        %1257 = vmatprep.subr.bf16.mxu0 0
        %1258 = vmatpush1.bf16.msra.mxu0 0
        %1259 = vmatprep.subr.bf16.mxu0 0
        %1260 = vmatpush1.bf16.msra.mxu0 0
        %1261 = vmatprep.subr.bf16.mxu0 0
        %1262 = vmatpush1.bf16.msra.mxu0 0
        %1263 = vmatprep.subr.bf16.mxu0 0
        %1264 = vmatpush1.bf16.msra.mxu0 0
        %1265 = vmatprep.subr.bf16.mxu0 0
        %1266 = vmatpush1.bf16.msra.mxu0 0
        %1267 = vmatprep.subr.bf16.mxu0 0
        %1268 = vmatpush1.bf16.msra.mxu0 0
        %1269 = vmatprep.subr.bf16.mxu0 0
        %1270 = vmatpush1.bf16.msra.mxu0 0
        %1271 = vmatprep.subr.bf16.mxu0 0
        %1272 = vmatpush1.bf16.msra.mxu0 0
        %1273 = vmatprep.subr.bf16.mxu0 0
        %1274 = vmatpush1.bf16.msra.mxu0 0
        %1275 = vmatprep.subr.bf16.mxu0 0
        %1276 = vmatpush1.bf16.msra.mxu0 0
        %1277 = vmatprep.subr.bf16.mxu0 0
        %1278 = vmatpush1.bf16.msra.mxu0 0
        %1279 = vmatprep.subr.bf16.mxu0 0
        %1280 = vmatpush1.bf16.msra.mxu0 0
        %1281 = vmatprep.subr.bf16.mxu0 0
        %1282 = vmatpush1.bf16.msra.mxu0 0
        %1283 = vmatprep.subr.bf16.mxu0 0
        %1284 = vmatpush1.bf16.msra.mxu0 0
        %1285 = vmatprep.mubr.bf16.mxu0 0
        %1286 = vmatmul.mubr.bf16.gmra.mrb[0].mxu0 %v1251
        %v1287 = vpop.f32.mrb[0].mxu0
        %v1288 = vadd.f32 0.0, %v1287
        %v1289 = vpop.f32.mrb[0].mxu0
        %v1290 = vpop.f32.mrb[0].mxu0
        %v1291 = vadd.f32 0.0, %v1290
        %v1292 = vpop.f32.mrb[0].mxu0
        %1293 = vdwg.mxu0
        %1295 = vrot.lane.b32.xlu0 %v864, 112
        %v1296 = vpop.permute.xlu0 %1295
        %v1299 = vsel %vm865, %v1245, 0
        %1301 = vmatprep.subr.bf16.mxu0 0
        %1302 = vmatpush1.bf16.msra.mxu0 %v1296
        %1303 = vmatprep.subr.bf16.mxu0 0
        %1304 = vmatpush1.bf16.msra.mxu0 0
        %1305 = vmatprep.subr.bf16.mxu0 0
        %1306 = vmatpush1.bf16.msra.mxu0 0
        %1307 = vmatprep.subr.bf16.mxu0 0
        %1308 = vmatpush1.bf16.msra.mxu0 0
        %1309 = vmatprep.subr.bf16.mxu0 0
        %1310 = vmatpush1.bf16.msra.mxu0 0
        %1311 = vmatprep.subr.bf16.mxu0 0
        %1312 = vmatpush1.bf16.msra.mxu0 0
        %1313 = vmatprep.subr.bf16.mxu0 0
        %1314 = vmatpush1.bf16.msra.mxu0 0
        %1315 = vmatprep.subr.bf16.mxu0 0
        %1316 = vmatpush1.bf16.msra.mxu0 0
        %1317 = vmatprep.subr.bf16.mxu0 0
        %1318 = vmatpush1.bf16.msra.mxu0 0
        %1319 = vmatprep.subr.bf16.mxu0 0
        %1320 = vmatpush1.bf16.msra.mxu0 0
        %1321 = vmatprep.subr.bf16.mxu0 0
        %1322 = vmatpush1.bf16.msra.mxu0 0
        %1323 = vmatprep.subr.bf16.mxu0 0
        %1324 = vmatpush1.bf16.msra.mxu0 0
        %1325 = vmatprep.subr.bf16.mxu0 0
        %1326 = vmatpush1.bf16.msra.mxu0 0
        %1327 = vmatprep.subr.bf16.mxu0 0
        %1328 = vmatpush1.bf16.msra.mxu0 0
        %1329 = vmatprep.subr.bf16.mxu0 0
        %1330 = vmatpush1.bf16.msra.mxu0 0
        %1331 = vmatprep.subr.bf16.mxu0 0
        %1332 = vmatpush1.bf16.msra.mxu0 0
        %1333 = vmatprep.mubr.bf16.mxu0 0
        %1334 = vmatmul.mubr.bf16.gmra.mrb[0].mxu0 %v1299
        %v1335 = vpop.f32.mrb[0].mxu0
        %v1336 = vadd.f32 0.0, %v1335
        %v1337 = vpop.f32.mrb[0].mxu0
        %v1338 = vpop.f32.mrb[0].mxu0
        %v1339 = vadd.f32 0.0, %v1338
        %v1340 = vpop.f32.mrb[0].mxu0
        %1341 = vdwg.mxu0
        %1342 = vrot.lane.b32.xlu0 %v859, 96
        %v1343 = vpop.permute.xlu0 %1342
        %1344 = vrot.lane.b32.xlu0 %v861, 96
        %v1345 = vpop.permute.xlu0 %1344
        %v1347 = vsel %vm865, %v1343, 0
        %v1350 = vsel %vm865, %v1345, 0
        %1352 = vmatprep.subr.bf16.mxu0 0
        %1353 = vmatpush1.bf16.xpose.msra.mxu0 %v1350
        %1354 = vmatprep.subr.bf16.mxu0 0
        %1355 = vmatpush1.bf16.xpose.msra.mxu0 0
        %1356 = vmatprep.subr.bf16.mxu0 0
        %1357 = vmatpush1.bf16.xpose.msra.mxu0 0
        %1358 = vmatprep.subr.bf16.mxu0 0
        %1359 = vmatpush1.bf16.xpose.msra.mxu0 0
        %1360 = vmatprep.subr.bf16.mxu0 0
        %1361 = vmatpush1.bf16.xpose.msra.mxu0 0
        %1362 = vmatprep.subr.bf16.mxu0 0
        %1363 = vmatpush1.bf16.xpose.msra.mxu0 0
        %1364 = vmatprep.subr.bf16.mxu0 0
        %1365 = vmatpush1.bf16.xpose.msra.mxu0 0
        %1366 = vmatprep.subr.bf16.mxu0 0
        %1367 = vmatpush1.bf16.xpose.msra.mxu0 0
        %1368 = vmatprep.subr.bf16.mxu0 0
        %1369 = vmatpush1.bf16.xpose.msra.mxu0 0
        %1370 = vmatprep.subr.bf16.mxu0 0
        %1371 = vmatpush1.bf16.xpose.msra.mxu0 0
        %1372 = vmatprep.subr.bf16.mxu0 0
        %1373 = vmatpush1.bf16.xpose.msra.mxu0 0
        %1374 = vmatprep.subr.bf16.mxu0 0
        %1375 = vmatpush1.bf16.xpose.msra.mxu0 0
        %1376 = vmatprep.subr.bf16.mxu0 0
        %1377 = vmatpush1.bf16.xpose.msra.mxu0 0
        %1378 = vmatprep.subr.bf16.mxu0 0
        %1379 = vmatpush1.bf16.xpose.msra.mxu0 0
        %1380 = vmatprep.subr.bf16.mxu0 0
        %1381 = vmatpush1.bf16.xpose.msra.mxu0 0
        %1382 = vmatprep.subr.bf16.mxu0 0
        %1383 = vmatpush1.bf16.xpose.msra.mxu0 0
        %1384 = vmatprep.mubr.bf16.mxu0 0
        %1385 = vmatmul.mubr.bf16.gmra.mrb[0].mxu0 %v1347
        %v1386 = vpop.f32.mrb[0].mxu0
        %v1387 = vadd.f32 0.0, %v1386
        %v1388 = vpop.f32.mrb[0].mxu0
        %v1389 = vpop.f32.mrb[0].mxu0
        %v1390 = vadd.f32 0.0, %v1389
        %v1391 = vpop.f32.mrb[0].mxu0
        %1392 = vdwg.mxu0
        %1393 = vrot.lane.b32.xlu0 %v860, 96
        %v1394 = vpop.permute.xlu0 %1393
        %1395 = vrot.lane.b32.xlu0 %v862, 96
        %v1396 = vpop.permute.xlu0 %1395
        %v1398 = vsel %vm865, %v1394, 0
        %v1401 = vsel %vm865, %v1396, 0
        %1403 = vmatprep.subr.bf16.mxu0 0
        %1404 = vmatpush1.bf16.xpose.msra.mxu0 %v1401
        %1405 = vmatprep.subr.bf16.mxu0 0
        %1406 = vmatpush1.bf16.xpose.msra.mxu0 0
        %1407 = vmatprep.subr.bf16.mxu0 0
        %1408 = vmatpush1.bf16.xpose.msra.mxu0 0
        %1409 = vmatprep.subr.bf16.mxu0 0
        %1410 = vmatpush1.bf16.xpose.msra.mxu0 0
        %1411 = vmatprep.subr.bf16.mxu0 0
        %1412 = vmatpush1.bf16.xpose.msra.mxu0 0
        %1413 = vmatprep.subr.bf16.mxu0 0
        %1414 = vmatpush1.bf16.xpose.msra.mxu0 0
        %1415 = vmatprep.subr.bf16.mxu0 0
        %1416 = vmatpush1.bf16.xpose.msra.mxu0 0
        %1417 = vmatprep.subr.bf16.mxu0 0
        %1418 = vmatpush1.bf16.xpose.msra.mxu0 0
        %1419 = vmatprep.subr.bf16.mxu0 0
        %1420 = vmatpush1.bf16.xpose.msra.mxu0 0
        %1421 = vmatprep.subr.bf16.mxu0 0
        %1422 = vmatpush1.bf16.xpose.msra.mxu0 0
        %1423 = vmatprep.subr.bf16.mxu0 0
        %1424 = vmatpush1.bf16.xpose.msra.mxu0 0
        %1425 = vmatprep.subr.bf16.mxu0 0
        %1426 = vmatpush1.bf16.xpose.msra.mxu0 0
        %1427 = vmatprep.subr.bf16.mxu0 0
        %1428 = vmatpush1.bf16.xpose.msra.mxu0 0
        %1429 = vmatprep.subr.bf16.mxu0 0
        %1430 = vmatpush1.bf16.xpose.msra.mxu0 0
        %1431 = vmatprep.subr.bf16.mxu0 0
        %1432 = vmatpush1.bf16.xpose.msra.mxu0 0
        %1433 = vmatprep.subr.bf16.mxu0 0
        %1434 = vmatpush1.bf16.xpose.msra.mxu0 0
        %1435 = vmatprep.mubr.bf16.mxu0 0
        %1436 = vmatmul.mubr.bf16.gmra.mrb[0].mxu0 %v1398
        %v1437 = vpop.f32.mrb[0].mxu0
        %v1438 = vadd.f32 0.0, %v1437
        %v1439 = vpop.f32.mrb[0].mxu0
        %v1440 = vpop.f32.mrb[0].mxu0
        %v1441 = vadd.f32 0.0, %v1440
        %v1442 = vpop.f32.mrb[0].mxu0
        %1443 = vdwg.mxu0
        %v1444 = vsel %vm865, %v1387, -inf
        %1445 = vmax.xlane.f32.xlu0 %v1444
        %v1446 = vpop.xlane.xlu0 %1445
        %v1447 = vsel %vm865, %v1390, -inf
        %1448 = vmax.xlane.f32.xlu0 %v1447
        %v1449 = vpop.xlane.xlu0 %1448
        %v1450 = vsel %vm865, %v1438, -inf
        %1451 = vmax.xlane.f32.xlu0 %v1450
        %v1452 = vpop.xlane.xlu0 %1451
        %v1453 = vsel %vm865, %v1441, -inf
        %1454 = vmax.xlane.f32.xlu0 %v1453
        %v1455 = vpop.xlane.xlu0 %1454
        %v1456 = vsub.f32 %v1387, %v1446
        %v1457 = vsub.f32 %v1390, %v1449
        %v1458 = vsub.f32 %v1438, %v1452
        %v1459 = vsub.f32 %v1441, %v1455
        %v1460 = vmul.f32 %v1456, 1.442695
        %v1461 = vpow.pop %v1460
        %v1462 = vmul.f32 %v1457, 1.442695
        %v1463 = vpow.pop %v1462
        %v1464 = vmul.f32 %v1458, 1.442695
        %v1465 = vpow.pop %v1464
        %v1466 = vmul.f32 %v1459, 1.442695
        %v1467 = vpow.pop %v1466
        %v1468 = vsel %vm865, %v1461, 0.0
        %1469 = vadd.xlane.f32.xlu0 %v1468
        %v1470 = vpop.xlane.xlu0 %1469
        %v1471 = vsel %vm865, %v1463, 0.0
        %1472 = vadd.xlane.f32.xlu0 %v1471
        %v1473 = vpop.xlane.xlu0 %1472
        %v1474 = vsel %vm865, %v1465, 0.0
        %1475 = vadd.xlane.f32.xlu0 %v1474
        %v1476 = vpop.xlane.xlu0 %1475
        %v1477 = vsel %vm865, %v1467, 0.0
        %1478 = vadd.xlane.f32.xlu0 %v1477
        %v1479 = vpop.xlane.xlu0 %1478
        %v1480 = vrcp.pop %v1470
        %v1481 = vmul.f32 %v1461, %v1480
        %v1482 = vrcp.pop %v1473
        %v1483 = vmul.f32 %v1463, %v1482
        %v1484 = vrcp.pop %v1476
        %v1485 = vmul.f32 %v1465, %v1484
        %v1486 = vrcp.pop %v1479
        %v1487 = vmul.f32 %v1467, %v1486
        %v1488 = vpack.c.bf16 %v1483, %v1481
        %v1489 = vpack.c.bf16 %v1487, %v1485
        %1490 = vrot.lane.b32.xlu0 %v863, 96
        %v1491 = vpop.permute.xlu0 %1490
        %v1494 = vsel %vm865, %v1488, 0
        %1496 = vmatprep.subr.bf16.mxu0 0
        %1497 = vmatpush1.bf16.msra.mxu0 %v1491
        %1498 = vmatprep.subr.bf16.mxu0 0
        %1499 = vmatpush1.bf16.msra.mxu0 0
        %1500 = vmatprep.subr.bf16.mxu0 0
        %1501 = vmatpush1.bf16.msra.mxu0 0
        %1502 = vmatprep.subr.bf16.mxu0 0
        %1503 = vmatpush1.bf16.msra.mxu0 0
        %1504 = vmatprep.subr.bf16.mxu0 0
        %1505 = vmatpush1.bf16.msra.mxu0 0
        %1506 = vmatprep.subr.bf16.mxu0 0
        %1507 = vmatpush1.bf16.msra.mxu0 0
        %1508 = vmatprep.subr.bf16.mxu0 0
        %1509 = vmatpush1.bf16.msra.mxu0 0
        %1510 = vmatprep.subr.bf16.mxu0 0
        %1511 = vmatpush1.bf16.msra.mxu0 0
        %1512 = vmatprep.subr.bf16.mxu0 0
        %1513 = vmatpush1.bf16.msra.mxu0 0
        %1514 = vmatprep.subr.bf16.mxu0 0
        %1515 = vmatpush1.bf16.msra.mxu0 0
        %1516 = vmatprep.subr.bf16.mxu0 0
        %1517 = vmatpush1.bf16.msra.mxu0 0
        %1518 = vmatprep.subr.bf16.mxu0 0
        %1519 = vmatpush1.bf16.msra.mxu0 0
        %1520 = vmatprep.subr.bf16.mxu0 0
        %1521 = vmatpush1.bf16.msra.mxu0 0
        %1522 = vmatprep.subr.bf16.mxu0 0
        %1523 = vmatpush1.bf16.msra.mxu0 0
        %1524 = vmatprep.subr.bf16.mxu0 0
        %1525 = vmatpush1.bf16.msra.mxu0 0
        %1526 = vmatprep.subr.bf16.mxu0 0
        %1527 = vmatpush1.bf16.msra.mxu0 0
        %1528 = vmatprep.mubr.bf16.mxu0 0
        %1529 = vmatmul.mubr.bf16.gmra.mrb[0].mxu0 %v1494
        %v1530 = vpop.f32.mrb[0].mxu0
        %v1531 = vadd.f32 0.0, %v1530
        %v1532 = vpop.f32.mrb[0].mxu0
        %v1533 = vpop.f32.mrb[0].mxu0
        %v1534 = vadd.f32 0.0, %v1533
        %v1535 = vpop.f32.mrb[0].mxu0
        %1536 = vdwg.mxu0
        %1537 = vrot.lane.b32.xlu0 %v864, 96
        %v1538 = vpop.permute.xlu0 %1537
        %v1541 = vsel %vm865, %v1489, 0
        %1543 = vmatprep.subr.bf16.mxu0 0
        %1544 = vmatpush1.bf16.msra.mxu0 %v1538
        %1545 = vmatprep.subr.bf16.mxu0 0
        %1546 = vmatpush1.bf16.msra.mxu0 0
        %1547 = vmatprep.subr.bf16.mxu0 0
        %1548 = vmatpush1.bf16.msra.mxu0 0
        %1549 = vmatprep.subr.bf16.mxu0 0
        %1550 = vmatpush1.bf16.msra.mxu0 0
        %1551 = vmatprep.subr.bf16.mxu0 0
        %1552 = vmatpush1.bf16.msra.mxu0 0
        %1553 = vmatprep.subr.bf16.mxu0 0
        %1554 = vmatpush1.bf16.msra.mxu0 0
        %1555 = vmatprep.subr.bf16.mxu0 0
        %1556 = vmatpush1.bf16.msra.mxu0 0
        %1557 = vmatprep.subr.bf16.mxu0 0
        %1558 = vmatpush1.bf16.msra.mxu0 0
        %1559 = vmatprep.subr.bf16.mxu0 0
        %1560 = vmatpush1.bf16.msra.mxu0 0
        %1561 = vmatprep.subr.bf16.mxu0 0
        %1562 = vmatpush1.bf16.msra.mxu0 0
        %1563 = vmatprep.subr.bf16.mxu0 0
        %1564 = vmatpush1.bf16.msra.mxu0 0
        %1565 = vmatprep.subr.bf16.mxu0 0
        %1566 = vmatpush1.bf16.msra.mxu0 0
        %1567 = vmatprep.subr.bf16.mxu0 0
        %1568 = vmatpush1.bf16.msra.mxu0 0
        %1569 = vmatprep.subr.bf16.mxu0 0
        %1570 = vmatpush1.bf16.msra.mxu0 0
        %1571 = vmatprep.subr.bf16.mxu0 0
        %1572 = vmatpush1.bf16.msra.mxu0 0
        %1573 = vmatprep.subr.bf16.mxu0 0
        %1574 = vmatpush1.bf16.msra.mxu0 0
        %1575 = vmatprep.mubr.bf16.mxu0 0
        %1576 = vmatmul.mubr.bf16.gmra.mrb[0].mxu0 %v1541
        %v1577 = vpop.f32.mrb[0].mxu0
        %v1578 = vadd.f32 0.0, %v1577
        %v1579 = vpop.f32.mrb[0].mxu0
        %v1580 = vpop.f32.mrb[0].mxu0
        %v1581 = vadd.f32 0.0, %v1580
        %v1582 = vpop.f32.mrb[0].mxu0
        %1583 = vdwg.mxu0
        %1584 = vrot.lane.b32.xlu0 %v859, 80
        %v1585 = vpop.permute.xlu0 %1584
        %1586 = vrot.lane.b32.xlu0 %v861, 80
        %v1587 = vpop.permute.xlu0 %1586
        %v1589 = vsel %vm865, %v1585, 0
        %v1592 = vsel %vm865, %v1587, 0
        %1594 = vmatprep.subr.bf16.mxu0 0
        %1595 = vmatpush1.bf16.xpose.msra.mxu0 %v1592
        %1596 = vmatprep.subr.bf16.mxu0 0
        %1597 = vmatpush1.bf16.xpose.msra.mxu0 0
        %1598 = vmatprep.subr.bf16.mxu0 0
        %1599 = vmatpush1.bf16.xpose.msra.mxu0 0
        %1600 = vmatprep.subr.bf16.mxu0 0
        %1601 = vmatpush1.bf16.xpose.msra.mxu0 0
        %1602 = vmatprep.subr.bf16.mxu0 0
        %1603 = vmatpush1.bf16.xpose.msra.mxu0 0
        %1604 = vmatprep.subr.bf16.mxu0 0
        %1605 = vmatpush1.bf16.xpose.msra.mxu0 0
        %1606 = vmatprep.subr.bf16.mxu0 0
        %1607 = vmatpush1.bf16.xpose.msra.mxu0 0
        %1608 = vmatprep.subr.bf16.mxu0 0
        %1609 = vmatpush1.bf16.xpose.msra.mxu0 0
        %1610 = vmatprep.subr.bf16.mxu0 0
        %1611 = vmatpush1.bf16.xpose.msra.mxu0 0
        %1612 = vmatprep.subr.bf16.mxu0 0
        %1613 = vmatpush1.bf16.xpose.msra.mxu0 0
        %1614 = vmatprep.subr.bf16.mxu0 0
        %1615 = vmatpush1.bf16.xpose.msra.mxu0 0
        %1616 = vmatprep.subr.bf16.mxu0 0
        %1617 = vmatpush1.bf16.xpose.msra.mxu0 0
        %1618 = vmatprep.subr.bf16.mxu0 0
        %1619 = vmatpush1.bf16.xpose.msra.mxu0 0
        %1620 = vmatprep.subr.bf16.mxu0 0
        %1621 = vmatpush1.bf16.xpose.msra.mxu0 0
        %1622 = vmatprep.subr.bf16.mxu0 0
        %1623 = vmatpush1.bf16.xpose.msra.mxu0 0
        %1624 = vmatprep.subr.bf16.mxu0 0
        %1625 = vmatpush1.bf16.xpose.msra.mxu0 0
        %1626 = vmatprep.mubr.bf16.mxu0 0
        %1627 = vmatmul.mubr.bf16.gmra.mrb[0].mxu0 %v1589
        %v1628 = vpop.f32.mrb[0].mxu0
        %v1629 = vadd.f32 0.0, %v1628
        %v1630 = vpop.f32.mrb[0].mxu0
        %v1631 = vpop.f32.mrb[0].mxu0
        %v1632 = vadd.f32 0.0, %v1631
        %v1633 = vpop.f32.mrb[0].mxu0
        %1634 = vdwg.mxu0
        %1635 = vrot.lane.b32.xlu0 %v860, 80
        %v1636 = vpop.permute.xlu0 %1635
        %1637 = vrot.lane.b32.xlu0 %v862, 80
        %v1638 = vpop.permute.xlu0 %1637
        %v1640 = vsel %vm865, %v1636, 0
        %v1643 = vsel %vm865, %v1638, 0
        %1645 = vmatprep.subr.bf16.mxu0 0
        %1646 = vmatpush1.bf16.xpose.msra.mxu0 %v1643
        %1647 = vmatprep.subr.bf16.mxu0 0
        %1648 = vmatpush1.bf16.xpose.msra.mxu0 0
        %1649 = vmatprep.subr.bf16.mxu0 0
        %1650 = vmatpush1.bf16.xpose.msra.mxu0 0
        %1651 = vmatprep.subr.bf16.mxu0 0
        %1652 = vmatpush1.bf16.xpose.msra.mxu0 0
        %1653 = vmatprep.subr.bf16.mxu0 0
        %1654 = vmatpush1.bf16.xpose.msra.mxu0 0
        %1655 = vmatprep.subr.bf16.mxu0 0
        %1656 = vmatpush1.bf16.xpose.msra.mxu0 0
        %1657 = vmatprep.subr.bf16.mxu0 0
        %1658 = vmatpush1.bf16.xpose.msra.mxu0 0
        %1659 = vmatprep.subr.bf16.mxu0 0
        %1660 = vmatpush1.bf16.xpose.msra.mxu0 0
        %1661 = vmatprep.subr.bf16.mxu0 0
        %1662 = vmatpush1.bf16.xpose.msra.mxu0 0
        %1663 = vmatprep.subr.bf16.mxu0 0
        %1664 = vmatpush1.bf16.xpose.msra.mxu0 0
        %1665 = vmatprep.subr.bf16.mxu0 0
        %1666 = vmatpush1.bf16.xpose.msra.mxu0 0
        %1667 = vmatprep.subr.bf16.mxu0 0
        %1668 = vmatpush1.bf16.xpose.msra.mxu0 0
        %1669 = vmatprep.subr.bf16.mxu0 0
        %1670 = vmatpush1.bf16.xpose.msra.mxu0 0
        %1671 = vmatprep.subr.bf16.mxu0 0
        %1672 = vmatpush1.bf16.xpose.msra.mxu0 0
        %1673 = vmatprep.subr.bf16.mxu0 0
        %1674 = vmatpush1.bf16.xpose.msra.mxu0 0
        %1675 = vmatprep.subr.bf16.mxu0 0
        %1676 = vmatpush1.bf16.xpose.msra.mxu0 0
        %1677 = vmatprep.mubr.bf16.mxu0 0
        %1678 = vmatmul.mubr.bf16.gmra.mrb[0].mxu0 %v1640
        %v1679 = vpop.f32.mrb[0].mxu0
        %v1680 = vadd.f32 0.0, %v1679
        %v1681 = vpop.f32.mrb[0].mxu0
        %v1682 = vpop.f32.mrb[0].mxu0
        %v1683 = vadd.f32 0.0, %v1682
        %v1684 = vpop.f32.mrb[0].mxu0
        %1685 = vdwg.mxu0
        %v1686 = vsel %vm865, %v1629, -inf
        %1687 = vmax.xlane.f32.xlu0 %v1686
        %v1688 = vpop.xlane.xlu0 %1687
        %v1689 = vsel %vm865, %v1632, -inf
        %1690 = vmax.xlane.f32.xlu0 %v1689
        %v1691 = vpop.xlane.xlu0 %1690
        %v1692 = vsel %vm865, %v1680, -inf
        %1693 = vmax.xlane.f32.xlu0 %v1692
        %v1694 = vpop.xlane.xlu0 %1693
        %v1695 = vsel %vm865, %v1683, -inf
        %1696 = vmax.xlane.f32.xlu0 %v1695
        %v1697 = vpop.xlane.xlu0 %1696
        %v1698 = vsub.f32 %v1629, %v1688
        %v1699 = vsub.f32 %v1632, %v1691
        %v1700 = vsub.f32 %v1680, %v1694
        %v1701 = vsub.f32 %v1683, %v1697
        %v1702 = vmul.f32 %v1698, 1.442695
        %v1703 = vpow.pop %v1702
        %v1704 = vmul.f32 %v1699, 1.442695
        %v1705 = vpow.pop %v1704
        %v1706 = vmul.f32 %v1700, 1.442695
        %v1707 = vpow.pop %v1706
        %v1708 = vmul.f32 %v1701, 1.442695
        %v1709 = vpow.pop %v1708
        %v1710 = vsel %vm865, %v1703, 0.0
        %1711 = vadd.xlane.f32.xlu0 %v1710
        %v1712 = vpop.xlane.xlu0 %1711
        %v1713 = vsel %vm865, %v1705, 0.0
        %1714 = vadd.xlane.f32.xlu0 %v1713
        %v1715 = vpop.xlane.xlu0 %1714
        %v1716 = vsel %vm865, %v1707, 0.0
        %1717 = vadd.xlane.f32.xlu0 %v1716
        %v1718 = vpop.xlane.xlu0 %1717
        %v1719 = vsel %vm865, %v1709, 0.0
        %1720 = vadd.xlane.f32.xlu0 %v1719
        %v1721 = vpop.xlane.xlu0 %1720
        %v1722 = vrcp.pop %v1712
        %v1723 = vmul.f32 %v1703, %v1722
        %v1724 = vrcp.pop %v1715
        %v1725 = vmul.f32 %v1705, %v1724
        %v1726 = vrcp.pop %v1718
        %v1727 = vmul.f32 %v1707, %v1726
        %v1728 = vrcp.pop %v1721
        %v1729 = vmul.f32 %v1709, %v1728
        %v1730 = vpack.c.bf16 %v1725, %v1723
        %v1731 = vpack.c.bf16 %v1729, %v1727
        %1732 = vrot.lane.b32.xlu0 %v863, 80
        %v1733 = vpop.permute.xlu0 %1732
        %v1736 = vsel %vm865, %v1730, 0
        %1738 = vmatprep.subr.bf16.mxu0 0
        %1739 = vmatpush1.bf16.msra.mxu0 %v1733
        %1740 = vmatprep.subr.bf16.mxu0 0
        %1741 = vmatpush1.bf16.msra.mxu0 0
        %1742 = vmatprep.subr.bf16.mxu0 0
        %1743 = vmatpush1.bf16.msra.mxu0 0
        %1744 = vmatprep.subr.bf16.mxu0 0
        %1745 = vmatpush1.bf16.msra.mxu0 0
        %1746 = vmatprep.subr.bf16.mxu0 0
        %1747 = vmatpush1.bf16.msra.mxu0 0
        %1748 = vmatprep.subr.bf16.mxu0 0
        %1749 = vmatpush1.bf16.msra.mxu0 0
        %1750 = vmatprep.subr.bf16.mxu0 0
        %1751 = vmatpush1.bf16.msra.mxu0 0
        %1752 = vmatprep.subr.bf16.mxu0 0
        %1753 = vmatpush1.bf16.msra.mxu0 0
        %1754 = vmatprep.subr.bf16.mxu0 0
        %1755 = vmatpush1.bf16.msra.mxu0 0
        %1756 = vmatprep.subr.bf16.mxu0 0
        %1757 = vmatpush1.bf16.msra.mxu0 0
        %1758 = vmatprep.subr.bf16.mxu0 0
        %1759 = vmatpush1.bf16.msra.mxu0 0
        %1760 = vmatprep.subr.bf16.mxu0 0
        %1761 = vmatpush1.bf16.msra.mxu0 0
        %1762 = vmatprep.subr.bf16.mxu0 0
        %1763 = vmatpush1.bf16.msra.mxu0 0
        %1764 = vmatprep.subr.bf16.mxu0 0
        %1765 = vmatpush1.bf16.msra.mxu0 0
        %1766 = vmatprep.subr.bf16.mxu0 0
        %1767 = vmatpush1.bf16.msra.mxu0 0
        %1768 = vmatprep.subr.bf16.mxu0 0
        %1769 = vmatpush1.bf16.msra.mxu0 0
        %1770 = vmatprep.mubr.bf16.mxu0 0
        %1771 = vmatmul.mubr.bf16.gmra.mrb[0].mxu0 %v1736
        %v1772 = vpop.f32.mrb[0].mxu0
        %v1773 = vadd.f32 0.0, %v1772
        %v1774 = vpop.f32.mrb[0].mxu0
        %v1775 = vpop.f32.mrb[0].mxu0
        %v1776 = vadd.f32 0.0, %v1775
        %v1777 = vpop.f32.mrb[0].mxu0
        %1778 = vdwg.mxu0
        %1779 = vrot.lane.b32.xlu0 %v864, 80
        %v1780 = vpop.permute.xlu0 %1779
        %v1783 = vsel %vm865, %v1731, 0
        %1785 = vmatprep.subr.bf16.mxu0 0
        %1786 = vmatpush1.bf16.msra.mxu0 %v1780
        %1787 = vmatprep.subr.bf16.mxu0 0
        %1788 = vmatpush1.bf16.msra.mxu0 0
        %1789 = vmatprep.subr.bf16.mxu0 0
        %1790 = vmatpush1.bf16.msra.mxu0 0
        %1791 = vmatprep.subr.bf16.mxu0 0
        %1792 = vmatpush1.bf16.msra.mxu0 0
        %1793 = vmatprep.subr.bf16.mxu0 0
        %1794 = vmatpush1.bf16.msra.mxu0 0
        %1795 = vmatprep.subr.bf16.mxu0 0
        %1796 = vmatpush1.bf16.msra.mxu0 0
        %1797 = vmatprep.subr.bf16.mxu0 0
        %1798 = vmatpush1.bf16.msra.mxu0 0
        %1799 = vmatprep.subr.bf16.mxu0 0
        %1800 = vmatpush1.bf16.msra.mxu0 0
        %1801 = vmatprep.subr.bf16.mxu0 0
        %1802 = vmatpush1.bf16.msra.mxu0 0
        %1803 = vmatprep.subr.bf16.mxu0 0
        %1804 = vmatpush1.bf16.msra.mxu0 0
        %1805 = vmatprep.subr.bf16.mxu0 0
        %1806 = vmatpush1.bf16.msra.mxu0 0
        %1807 = vmatprep.subr.bf16.mxu0 0
        %1808 = vmatpush1.bf16.msra.mxu0 0
        %1809 = vmatprep.subr.bf16.mxu0 0
        %1810 = vmatpush1.bf16.msra.mxu0 0
        %1811 = vmatprep.subr.bf16.mxu0 0
        %1812 = vmatpush1.bf16.msra.mxu0 0
        %1813 = vmatprep.subr.bf16.mxu0 0
        %1814 = vmatpush1.bf16.msra.mxu0 0
        %1815 = vmatprep.subr.bf16.mxu0 0
        %1816 = vmatpush1.bf16.msra.mxu0 0
        %1817 = vmatprep.mubr.bf16.mxu0 0
        %1818 = vmatmul.mubr.bf16.gmra.mrb[0].mxu0 %v1783
        %v1819 = vpop.f32.mrb[0].mxu0
        %v1820 = vadd.f32 0.0, %v1819
        %v1821 = vpop.f32.mrb[0].mxu0
        %v1822 = vpop.f32.mrb[0].mxu0
        %v1823 = vadd.f32 0.0, %v1822
        %v1824 = vpop.f32.mrb[0].mxu0
        %1825 = vdwg.mxu0
        %1826 = vrot.lane.b32.xlu0 %v859, 64
        %v1827 = vpop.permute.xlu0 %1826
        %1828 = vrot.lane.b32.xlu0 %v861, 64
        %v1829 = vpop.permute.xlu0 %1828
        %v1831 = vsel %vm865, %v1827, 0
        %v1834 = vsel %vm865, %v1829, 0
        %1836 = vmatprep.subr.bf16.mxu0 0
        %1837 = vmatpush1.bf16.xpose.msra.mxu0 %v1834
        %1838 = vmatprep.subr.bf16.mxu0 0
        %1839 = vmatpush1.bf16.xpose.msra.mxu0 0
        %1840 = vmatprep.subr.bf16.mxu0 0
        %1841 = vmatpush1.bf16.xpose.msra.mxu0 0
        %1842 = vmatprep.subr.bf16.mxu0 0
        %1843 = vmatpush1.bf16.xpose.msra.mxu0 0
        %1844 = vmatprep.subr.bf16.mxu0 0
        %1845 = vmatpush1.bf16.xpose.msra.mxu0 0
        %1846 = vmatprep.subr.bf16.mxu0 0
        %1847 = vmatpush1.bf16.xpose.msra.mxu0 0
        %1848 = vmatprep.subr.bf16.mxu0 0
        %1849 = vmatpush1.bf16.xpose.msra.mxu0 0
        %1850 = vmatprep.subr.bf16.mxu0 0
        %1851 = vmatpush1.bf16.xpose.msra.mxu0 0
        %1852 = vmatprep.subr.bf16.mxu0 0
        %1853 = vmatpush1.bf16.xpose.msra.mxu0 0
        %1854 = vmatprep.subr.bf16.mxu0 0
        %1855 = vmatpush1.bf16.xpose.msra.mxu0 0
        %1856 = vmatprep.subr.bf16.mxu0 0
        %1857 = vmatpush1.bf16.xpose.msra.mxu0 0
        %1858 = vmatprep.subr.bf16.mxu0 0
        %1859 = vmatpush1.bf16.xpose.msra.mxu0 0
        %1860 = vmatprep.subr.bf16.mxu0 0
        %1861 = vmatpush1.bf16.xpose.msra.mxu0 0
        %1862 = vmatprep.subr.bf16.mxu0 0
        %1863 = vmatpush1.bf16.xpose.msra.mxu0 0
        %1864 = vmatprep.subr.bf16.mxu0 0
        %1865 = vmatpush1.bf16.xpose.msra.mxu0 0
        %1866 = vmatprep.subr.bf16.mxu0 0
        %1867 = vmatpush1.bf16.xpose.msra.mxu0 0
        %1868 = vmatprep.mubr.bf16.mxu0 0
        %1869 = vmatmul.mubr.bf16.gmra.mrb[0].mxu0 %v1831
        %v1870 = vpop.f32.mrb[0].mxu0
        %v1871 = vadd.f32 0.0, %v1870
        %v1872 = vpop.f32.mrb[0].mxu0
        %v1873 = vpop.f32.mrb[0].mxu0
        %v1874 = vadd.f32 0.0, %v1873
        %v1875 = vpop.f32.mrb[0].mxu0
        %1876 = vdwg.mxu0
        %1877 = vrot.lane.b32.xlu0 %v860, 64
        %v1878 = vpop.permute.xlu0 %1877
        %1879 = vrot.lane.b32.xlu0 %v862, 64
        %v1880 = vpop.permute.xlu0 %1879
        %v1882 = vsel %vm865, %v1878, 0
        %v1885 = vsel %vm865, %v1880, 0
        %1887 = vmatprep.subr.bf16.mxu0 0
        %1888 = vmatpush1.bf16.xpose.msra.mxu0 %v1885
        %1889 = vmatprep.subr.bf16.mxu0 0
        %1890 = vmatpush1.bf16.xpose.msra.mxu0 0
        %1891 = vmatprep.subr.bf16.mxu0 0
        %1892 = vmatpush1.bf16.xpose.msra.mxu0 0
        %1893 = vmatprep.subr.bf16.mxu0 0
        %1894 = vmatpush1.bf16.xpose.msra.mxu0 0
        %1895 = vmatprep.subr.bf16.mxu0 0
        %1896 = vmatpush1.bf16.xpose.msra.mxu0 0
        %1897 = vmatprep.subr.bf16.mxu0 0
        %1898 = vmatpush1.bf16.xpose.msra.mxu0 0
        %1899 = vmatprep.subr.bf16.mxu0 0
        %1900 = vmatpush1.bf16.xpose.msra.mxu0 0
        %1901 = vmatprep.subr.bf16.mxu0 0
        %1902 = vmatpush1.bf16.xpose.msra.mxu0 0
        %1903 = vmatprep.subr.bf16.mxu0 0
        %1904 = vmatpush1.bf16.xpose.msra.mxu0 0
        %1905 = vmatprep.subr.bf16.mxu0 0
        %1906 = vmatpush1.bf16.xpose.msra.mxu0 0
        %1907 = vmatprep.subr.bf16.mxu0 0
        %1908 = vmatpush1.bf16.xpose.msra.mxu0 0
        %1909 = vmatprep.subr.bf16.mxu0 0
        %1910 = vmatpush1.bf16.xpose.msra.mxu0 0
        %1911 = vmatprep.subr.bf16.mxu0 0
        %1912 = vmatpush1.bf16.xpose.msra.mxu0 0
        %1913 = vmatprep.subr.bf16.mxu0 0
        %1914 = vmatpush1.bf16.xpose.msra.mxu0 0
        %1915 = vmatprep.subr.bf16.mxu0 0
        %1916 = vmatpush1.bf16.xpose.msra.mxu0 0
        %1917 = vmatprep.subr.bf16.mxu0 0
        %1918 = vmatpush1.bf16.xpose.msra.mxu0 0
        %1919 = vmatprep.mubr.bf16.mxu0 0
        %1920 = vmatmul.mubr.bf16.gmra.mrb[0].mxu0 %v1882
        %v1921 = vpop.f32.mrb[0].mxu0
        %v1922 = vadd.f32 0.0, %v1921
        %v1923 = vpop.f32.mrb[0].mxu0
        %v1924 = vpop.f32.mrb[0].mxu0
        %v1925 = vadd.f32 0.0, %v1924
        %v1926 = vpop.f32.mrb[0].mxu0
        %1927 = vdwg.mxu0
        %v1928 = vsel %vm865, %v1871, -inf
        %1929 = vmax.xlane.f32.xlu0 %v1928
        %v1930 = vpop.xlane.xlu0 %1929
        %v1931 = vsel %vm865, %v1874, -inf
        %1932 = vmax.xlane.f32.xlu0 %v1931
        %v1933 = vpop.xlane.xlu0 %1932
        %v1934 = vsel %vm865, %v1922, -inf
        %1935 = vmax.xlane.f32.xlu0 %v1934
        %v1936 = vpop.xlane.xlu0 %1935
        %v1937 = vsel %vm865, %v1925, -inf
        %1938 = vmax.xlane.f32.xlu0 %v1937
        %v1939 = vpop.xlane.xlu0 %1938
        %v1940 = vsub.f32 %v1871, %v1930
        %v1941 = vsub.f32 %v1874, %v1933
        %v1942 = vsub.f32 %v1922, %v1936
        %v1943 = vsub.f32 %v1925, %v1939
        %v1944 = vmul.f32 %v1940, 1.442695
        %v1945 = vpow.pop %v1944
        %v1946 = vmul.f32 %v1941, 1.442695
        %v1947 = vpow.pop %v1946
        %v1948 = vmul.f32 %v1942, 1.442695
        %v1949 = vpow.pop %v1948
        %v1950 = vmul.f32 %v1943, 1.442695
        %v1951 = vpow.pop %v1950
        %v1952 = vsel %vm865, %v1945, 0.0
        %1953 = vadd.xlane.f32.xlu0 %v1952
        %v1954 = vpop.xlane.xlu0 %1953
        %v1955 = vsel %vm865, %v1947, 0.0
        %1956 = vadd.xlane.f32.xlu0 %v1955
        %v1957 = vpop.xlane.xlu0 %1956
        %v1958 = vsel %vm865, %v1949, 0.0
        %1959 = vadd.xlane.f32.xlu0 %v1958
        %v1960 = vpop.xlane.xlu0 %1959
        %v1961 = vsel %vm865, %v1951, 0.0
        %1962 = vadd.xlane.f32.xlu0 %v1961
        %v1963 = vpop.xlane.xlu0 %1962
        %v1964 = vrcp.pop %v1954
        %v1965 = vmul.f32 %v1945, %v1964
        %v1966 = vrcp.pop %v1957
        %v1967 = vmul.f32 %v1947, %v1966
        %v1968 = vrcp.pop %v1960
        %v1969 = vmul.f32 %v1949, %v1968
        %v1970 = vrcp.pop %v1963
        %v1971 = vmul.f32 %v1951, %v1970
        %v1972 = vpack.c.bf16 %v1967, %v1965
        %v1973 = vpack.c.bf16 %v1971, %v1969
        %1974 = vrot.lane.b32.xlu0 %v863, 64
        %v1975 = vpop.permute.xlu0 %1974
        %v1978 = vsel %vm865, %v1972, 0
        %1980 = vmatprep.subr.bf16.mxu0 0
        %1981 = vmatpush1.bf16.msra.mxu0 %v1975
        %1982 = vmatprep.subr.bf16.mxu0 0
        %1983 = vmatpush1.bf16.msra.mxu0 0
        %1984 = vmatprep.subr.bf16.mxu0 0
        %1985 = vmatpush1.bf16.msra.mxu0 0
        %1986 = vmatprep.subr.bf16.mxu0 0
        %1987 = vmatpush1.bf16.msra.mxu0 0
        %1988 = vmatprep.subr.bf16.mxu0 0
        %1989 = vmatpush1.bf16.msra.mxu0 0
        %1990 = vmatprep.subr.bf16.mxu0 0
        %1991 = vmatpush1.bf16.msra.mxu0 0
        %1992 = vmatprep.subr.bf16.mxu0 0
        %1993 = vmatpush1.bf16.msra.mxu0 0
        %1994 = vmatprep.subr.bf16.mxu0 0
        %1995 = vmatpush1.bf16.msra.mxu0 0
        %1996 = vmatprep.subr.bf16.mxu0 0
        %1997 = vmatpush1.bf16.msra.mxu0 0
        %1998 = vmatprep.subr.bf16.mxu0 0
        %1999 = vmatpush1.bf16.msra.mxu0 0
        %2000 = vmatprep.subr.bf16.mxu0 0
        %2001 = vmatpush1.bf16.msra.mxu0 0
        %2002 = vmatprep.subr.bf16.mxu0 0
        %2003 = vmatpush1.bf16.msra.mxu0 0
        %2004 = vmatprep.subr.bf16.mxu0 0
        %2005 = vmatpush1.bf16.msra.mxu0 0
        %2006 = vmatprep.subr.bf16.mxu0 0
        %2007 = vmatpush1.bf16.msra.mxu0 0
        %2008 = vmatprep.subr.bf16.mxu0 0
        %2009 = vmatpush1.bf16.msra.mxu0 0
        %2010 = vmatprep.subr.bf16.mxu0 0
        %2011 = vmatpush1.bf16.msra.mxu0 0
        %2012 = vmatprep.mubr.bf16.mxu0 0
        %2013 = vmatmul.mubr.bf16.gmra.mrb[0].mxu0 %v1978
        %v2014 = vpop.f32.mrb[0].mxu0
        %v2015 = vadd.f32 0.0, %v2014
        %v2016 = vpop.f32.mrb[0].mxu0
        %v2017 = vpop.f32.mrb[0].mxu0
        %v2018 = vadd.f32 0.0, %v2017
        %v2019 = vpop.f32.mrb[0].mxu0
        %2020 = vdwg.mxu0
        %2021 = vrot.lane.b32.xlu0 %v864, 64
        %v2022 = vpop.permute.xlu0 %2021
        %v2025 = vsel %vm865, %v1973, 0
        %2027 = vmatprep.subr.bf16.mxu0 0
        %2028 = vmatpush1.bf16.msra.mxu0 %v2022
        %2029 = vmatprep.subr.bf16.mxu0 0
        %2030 = vmatpush1.bf16.msra.mxu0 0
        %2031 = vmatprep.subr.bf16.mxu0 0
        %2032 = vmatpush1.bf16.msra.mxu0 0
        %2033 = vmatprep.subr.bf16.mxu0 0
        %2034 = vmatpush1.bf16.msra.mxu0 0
        %2035 = vmatprep.subr.bf16.mxu0 0
        %2036 = vmatpush1.bf16.msra.mxu0 0
        %2037 = vmatprep.subr.bf16.mxu0 0
        %2038 = vmatpush1.bf16.msra.mxu0 0
        %2039 = vmatprep.subr.bf16.mxu0 0
        %2040 = vmatpush1.bf16.msra.mxu0 0
        %2041 = vmatprep.subr.bf16.mxu0 0
        %2042 = vmatpush1.bf16.msra.mxu0 0
        %2043 = vmatprep.subr.bf16.mxu0 0
        %2044 = vmatpush1.bf16.msra.mxu0 0
        %2045 = vmatprep.subr.bf16.mxu0 0
        %2046 = vmatpush1.bf16.msra.mxu0 0
        %2047 = vmatprep.subr.bf16.mxu0 0
        %2048 = vmatpush1.bf16.msra.mxu0 0
        %2049 = vmatprep.subr.bf16.mxu0 0
        %2050 = vmatpush1.bf16.msra.mxu0 0
        %2051 = vmatprep.subr.bf16.mxu0 0
        %2052 = vmatpush1.bf16.msra.mxu0 0
        %2053 = vmatprep.subr.bf16.mxu0 0
        %2054 = vmatpush1.bf16.msra.mxu0 0
        %2055 = vmatprep.subr.bf16.mxu0 0
        %2056 = vmatpush1.bf16.msra.mxu0 0
        %2057 = vmatprep.subr.bf16.mxu0 0
        %2058 = vmatpush1.bf16.msra.mxu0 0
        %2059 = vmatprep.mubr.bf16.mxu0 0
        %2060 = vmatmul.mubr.bf16.gmra.mrb[0].mxu0 %v2025
        %v2061 = vpop.f32.mrb[0].mxu0
        %v2062 = vadd.f32 0.0, %v2061
        %v2063 = vpop.f32.mrb[0].mxu0
        %v2064 = vpop.f32.mrb[0].mxu0
        %v2065 = vadd.f32 0.0, %v2064
        %v2066 = vpop.f32.mrb[0].mxu0
        %2067 = vdwg.mxu0
        %2068 = vrot.lane.b32.xlu0 %v859, 48
        %v2069 = vpop.permute.xlu0 %2068
        %2070 = vrot.lane.b32.xlu0 %v861, 48
        %v2071 = vpop.permute.xlu0 %2070
        %v2073 = vsel %vm865, %v2069, 0
        %v2076 = vsel %vm865, %v2071, 0
        %2078 = vmatprep.subr.bf16.mxu0 0
        %2079 = vmatpush1.bf16.xpose.msra.mxu0 %v2076
        %2080 = vmatprep.subr.bf16.mxu0 0
        %2081 = vmatpush1.bf16.xpose.msra.mxu0 0
        %2082 = vmatprep.subr.bf16.mxu0 0
        %2083 = vmatpush1.bf16.xpose.msra.mxu0 0
        %2084 = vmatprep.subr.bf16.mxu0 0
        %2085 = vmatpush1.bf16.xpose.msra.mxu0 0
        %2086 = vmatprep.subr.bf16.mxu0 0
        %2087 = vmatpush1.bf16.xpose.msra.mxu0 0
        %2088 = vmatprep.subr.bf16.mxu0 0
        %2089 = vmatpush1.bf16.xpose.msra.mxu0 0
        %2090 = vmatprep.subr.bf16.mxu0 0
        %2091 = vmatpush1.bf16.xpose.msra.mxu0 0
        %2092 = vmatprep.subr.bf16.mxu0 0
        %2093 = vmatpush1.bf16.xpose.msra.mxu0 0
        %2094 = vmatprep.subr.bf16.mxu0 0
        %2095 = vmatpush1.bf16.xpose.msra.mxu0 0
        %2096 = vmatprep.subr.bf16.mxu0 0
        %2097 = vmatpush1.bf16.xpose.msra.mxu0 0
        %2098 = vmatprep.subr.bf16.mxu0 0
        %2099 = vmatpush1.bf16.xpose.msra.mxu0 0
        %2100 = vmatprep.subr.bf16.mxu0 0
        %2101 = vmatpush1.bf16.xpose.msra.mxu0 0
        %2102 = vmatprep.subr.bf16.mxu0 0
        %2103 = vmatpush1.bf16.xpose.msra.mxu0 0
        %2104 = vmatprep.subr.bf16.mxu0 0
        %2105 = vmatpush1.bf16.xpose.msra.mxu0 0
        %2106 = vmatprep.subr.bf16.mxu0 0
        %2107 = vmatpush1.bf16.xpose.msra.mxu0 0
        %2108 = vmatprep.subr.bf16.mxu0 0
        %2109 = vmatpush1.bf16.xpose.msra.mxu0 0
        %2110 = vmatprep.mubr.bf16.mxu0 0
        %2111 = vmatmul.mubr.bf16.gmra.mrb[0].mxu0 %v2073
        %v2112 = vpop.f32.mrb[0].mxu0
        %v2113 = vadd.f32 0.0, %v2112
        %v2114 = vpop.f32.mrb[0].mxu0
        %v2115 = vpop.f32.mrb[0].mxu0
        %v2116 = vadd.f32 0.0, %v2115
        %v2117 = vpop.f32.mrb[0].mxu0
        %2118 = vdwg.mxu0
        %2119 = vrot.lane.b32.xlu0 %v860, 48
        %v2120 = vpop.permute.xlu0 %2119
        %2121 = vrot.lane.b32.xlu0 %v862, 48
        %v2122 = vpop.permute.xlu0 %2121
        %v2124 = vsel %vm865, %v2120, 0
        %v2127 = vsel %vm865, %v2122, 0
        %2129 = vmatprep.subr.bf16.mxu0 0
        %2130 = vmatpush1.bf16.xpose.msra.mxu0 %v2127
        %2131 = vmatprep.subr.bf16.mxu0 0
        %2132 = vmatpush1.bf16.xpose.msra.mxu0 0
        %2133 = vmatprep.subr.bf16.mxu0 0
        %2134 = vmatpush1.bf16.xpose.msra.mxu0 0
        %2135 = vmatprep.subr.bf16.mxu0 0
        %2136 = vmatpush1.bf16.xpose.msra.mxu0 0
        %2137 = vmatprep.subr.bf16.mxu0 0
        %2138 = vmatpush1.bf16.xpose.msra.mxu0 0
        %2139 = vmatprep.subr.bf16.mxu0 0
        %2140 = vmatpush1.bf16.xpose.msra.mxu0 0
        %2141 = vmatprep.subr.bf16.mxu0 0
        %2142 = vmatpush1.bf16.xpose.msra.mxu0 0
        %2143 = vmatprep.subr.bf16.mxu0 0
        %2144 = vmatpush1.bf16.xpose.msra.mxu0 0
        %2145 = vmatprep.subr.bf16.mxu0 0
        %2146 = vmatpush1.bf16.xpose.msra.mxu0 0
        %2147 = vmatprep.subr.bf16.mxu0 0
        %2148 = vmatpush1.bf16.xpose.msra.mxu0 0
        %2149 = vmatprep.subr.bf16.mxu0 0
        %2150 = vmatpush1.bf16.xpose.msra.mxu0 0
        %2151 = vmatprep.subr.bf16.mxu0 0
        %2152 = vmatpush1.bf16.xpose.msra.mxu0 0
        %2153 = vmatprep.subr.bf16.mxu0 0
        %2154 = vmatpush1.bf16.xpose.msra.mxu0 0
        %2155 = vmatprep.subr.bf16.mxu0 0
        %2156 = vmatpush1.bf16.xpose.msra.mxu0 0
        %2157 = vmatprep.subr.bf16.mxu0 0
        %2158 = vmatpush1.bf16.xpose.msra.mxu0 0
        %2159 = vmatprep.subr.bf16.mxu0 0
        %2160 = vmatpush1.bf16.xpose.msra.mxu0 0
        %2161 = vmatprep.mubr.bf16.mxu0 0
        %2162 = vmatmul.mubr.bf16.gmra.mrb[0].mxu0 %v2124
        %v2163 = vpop.f32.mrb[0].mxu0
        %v2164 = vadd.f32 0.0, %v2163
        %v2165 = vpop.f32.mrb[0].mxu0
        %v2166 = vpop.f32.mrb[0].mxu0
        %v2167 = vadd.f32 0.0, %v2166
        %v2168 = vpop.f32.mrb[0].mxu0
        %2169 = vdwg.mxu0
        %v2170 = vsel %vm865, %v2113, -inf
        %2171 = vmax.xlane.f32.xlu0 %v2170
        %v2172 = vpop.xlane.xlu0 %2171
        %v2173 = vsel %vm865, %v2116, -inf
        %2174 = vmax.xlane.f32.xlu0 %v2173
        %v2175 = vpop.xlane.xlu0 %2174
        %v2176 = vsel %vm865, %v2164, -inf
        %2177 = vmax.xlane.f32.xlu0 %v2176
        %v2178 = vpop.xlane.xlu0 %2177
        %v2179 = vsel %vm865, %v2167, -inf
        %2180 = vmax.xlane.f32.xlu0 %v2179
        %v2181 = vpop.xlane.xlu0 %2180
        %v2182 = vsub.f32 %v2113, %v2172
        %v2183 = vsub.f32 %v2116, %v2175
        %v2184 = vsub.f32 %v2164, %v2178
        %v2185 = vsub.f32 %v2167, %v2181
        %v2186 = vmul.f32 %v2182, 1.442695
        %v2187 = vpow.pop %v2186
        %v2188 = vmul.f32 %v2183, 1.442695
        %v2189 = vpow.pop %v2188
        %v2190 = vmul.f32 %v2184, 1.442695
        %v2191 = vpow.pop %v2190
        %v2192 = vmul.f32 %v2185, 1.442695
        %v2193 = vpow.pop %v2192
        %v2194 = vsel %vm865, %v2187, 0.0
        %2195 = vadd.xlane.f32.xlu0 %v2194
        %v2196 = vpop.xlane.xlu0 %2195
        %v2197 = vsel %vm865, %v2189, 0.0
        %2198 = vadd.xlane.f32.xlu0 %v2197
        %v2199 = vpop.xlane.xlu0 %2198
        %v2200 = vsel %vm865, %v2191, 0.0
        %2201 = vadd.xlane.f32.xlu0 %v2200
        %v2202 = vpop.xlane.xlu0 %2201
        %v2203 = vsel %vm865, %v2193, 0.0
        %2204 = vadd.xlane.f32.xlu0 %v2203
        %v2205 = vpop.xlane.xlu0 %2204
        %v2206 = vrcp.pop %v2196
        %v2207 = vmul.f32 %v2187, %v2206
        %v2208 = vrcp.pop %v2199
        %v2209 = vmul.f32 %v2189, %v2208
        %v2210 = vrcp.pop %v2202
        %v2211 = vmul.f32 %v2191, %v2210
        %v2212 = vrcp.pop %v2205
        %v2213 = vmul.f32 %v2193, %v2212
        %v2214 = vpack.c.bf16 %v2209, %v2207
        %v2215 = vpack.c.bf16 %v2213, %v2211
        %2216 = vrot.lane.b32.xlu0 %v863, 48
        %v2217 = vpop.permute.xlu0 %2216
        %v2220 = vsel %vm865, %v2214, 0
        %2222 = vmatprep.subr.bf16.mxu0 0
        %2223 = vmatpush1.bf16.msra.mxu0 %v2217
        %2224 = vmatprep.subr.bf16.mxu0 0
        %2225 = vmatpush1.bf16.msra.mxu0 0
        %2226 = vmatprep.subr.bf16.mxu0 0
        %2227 = vmatpush1.bf16.msra.mxu0 0
        %2228 = vmatprep.subr.bf16.mxu0 0
        %2229 = vmatpush1.bf16.msra.mxu0 0
        %2230 = vmatprep.subr.bf16.mxu0 0
        %2231 = vmatpush1.bf16.msra.mxu0 0
        %2232 = vmatprep.subr.bf16.mxu0 0
        %2233 = vmatpush1.bf16.msra.mxu0 0
        %2234 = vmatprep.subr.bf16.mxu0 0
        %2235 = vmatpush1.bf16.msra.mxu0 0
        %2236 = vmatprep.subr.bf16.mxu0 0
        %2237 = vmatpush1.bf16.msra.mxu0 0
        %2238 = vmatprep.subr.bf16.mxu0 0
        %2239 = vmatpush1.bf16.msra.mxu0 0
        %2240 = vmatprep.subr.bf16.mxu0 0
        %2241 = vmatpush1.bf16.msra.mxu0 0
        %2242 = vmatprep.subr.bf16.mxu0 0
        %2243 = vmatpush1.bf16.msra.mxu0 0
        %2244 = vmatprep.subr.bf16.mxu0 0
        %2245 = vmatpush1.bf16.msra.mxu0 0
        %2246 = vmatprep.subr.bf16.mxu0 0
        %2247 = vmatpush1.bf16.msra.mxu0 0
        %2248 = vmatprep.subr.bf16.mxu0 0
        %2249 = vmatpush1.bf16.msra.mxu0 0
        %2250 = vmatprep.subr.bf16.mxu0 0
        %2251 = vmatpush1.bf16.msra.mxu0 0
        %2252 = vmatprep.subr.bf16.mxu0 0
        %2253 = vmatpush1.bf16.msra.mxu0 0
        %2254 = vmatprep.mubr.bf16.mxu0 0
        %2255 = vmatmul.mubr.bf16.gmra.mrb[0].mxu0 %v2220
        %v2256 = vpop.f32.mrb[0].mxu0
        %v2257 = vadd.f32 0.0, %v2256
        %v2258 = vpop.f32.mrb[0].mxu0
        %v2259 = vpop.f32.mrb[0].mxu0
        %v2260 = vadd.f32 0.0, %v2259
        %v2261 = vpop.f32.mrb[0].mxu0
        %2262 = vdwg.mxu0
        %2263 = vrot.lane.b32.xlu0 %v864, 48
        %v2264 = vpop.permute.xlu0 %2263
        %v2267 = vsel %vm865, %v2215, 0
        %2269 = vmatprep.subr.bf16.mxu0 0
        %2270 = vmatpush1.bf16.msra.mxu0 %v2264
        %2271 = vmatprep.subr.bf16.mxu0 0
        %2272 = vmatpush1.bf16.msra.mxu0 0
        %2273 = vmatprep.subr.bf16.mxu0 0
        %2274 = vmatpush1.bf16.msra.mxu0 0
        %2275 = vmatprep.subr.bf16.mxu0 0
        %2276 = vmatpush1.bf16.msra.mxu0 0
        %2277 = vmatprep.subr.bf16.mxu0 0
        %2278 = vmatpush1.bf16.msra.mxu0 0
        %2279 = vmatprep.subr.bf16.mxu0 0
        %2280 = vmatpush1.bf16.msra.mxu0 0
        %2281 = vmatprep.subr.bf16.mxu0 0
        %2282 = vmatpush1.bf16.msra.mxu0 0
        %2283 = vmatprep.subr.bf16.mxu0 0
        %2284 = vmatpush1.bf16.msra.mxu0 0
        %2285 = vmatprep.subr.bf16.mxu0 0
        %2286 = vmatpush1.bf16.msra.mxu0 0
        %2287 = vmatprep.subr.bf16.mxu0 0
        %2288 = vmatpush1.bf16.msra.mxu0 0
        %2289 = vmatprep.subr.bf16.mxu0 0
        %2290 = vmatpush1.bf16.msra.mxu0 0
        %2291 = vmatprep.subr.bf16.mxu0 0
        %2292 = vmatpush1.bf16.msra.mxu0 0
        %2293 = vmatprep.subr.bf16.mxu0 0
        %2294 = vmatpush1.bf16.msra.mxu0 0
        %2295 = vmatprep.subr.bf16.mxu0 0
        %2296 = vmatpush1.bf16.msra.mxu0 0
        %2297 = vmatprep.subr.bf16.mxu0 0
        %2298 = vmatpush1.bf16.msra.mxu0 0
        %2299 = vmatprep.subr.bf16.mxu0 0
        %2300 = vmatpush1.bf16.msra.mxu0 0
        %2301 = vmatprep.mubr.bf16.mxu0 0
        %2302 = vmatmul.mubr.bf16.gmra.mrb[0].mxu0 %v2267
        %v2303 = vpop.f32.mrb[0].mxu0
        %v2304 = vadd.f32 0.0, %v2303
        %v2305 = vpop.f32.mrb[0].mxu0
        %v2306 = vpop.f32.mrb[0].mxu0
        %v2307 = vadd.f32 0.0, %v2306
        %v2308 = vpop.f32.mrb[0].mxu0
        %2309 = vdwg.mxu0
        %2310 = vrot.lane.b32.xlu0 %v859, 32
        %v2311 = vpop.permute.xlu0 %2310
        %2312 = vrot.lane.b32.xlu0 %v861, 32
        %v2313 = vpop.permute.xlu0 %2312
        %v2315 = vsel %vm865, %v2311, 0
        %v2318 = vsel %vm865, %v2313, 0
        %2320 = vmatprep.subr.bf16.mxu0 0
        %2321 = vmatpush1.bf16.xpose.msra.mxu0 %v2318
        %2322 = vmatprep.subr.bf16.mxu0 0
        %2323 = vmatpush1.bf16.xpose.msra.mxu0 0
        %2324 = vmatprep.subr.bf16.mxu0 0
        %2325 = vmatpush1.bf16.xpose.msra.mxu0 0
        %2326 = vmatprep.subr.bf16.mxu0 0
        %2327 = vmatpush1.bf16.xpose.msra.mxu0 0
        %2328 = vmatprep.subr.bf16.mxu0 0
        %2329 = vmatpush1.bf16.xpose.msra.mxu0 0
        %2330 = vmatprep.subr.bf16.mxu0 0
        %2331 = vmatpush1.bf16.xpose.msra.mxu0 0
        %2332 = vmatprep.subr.bf16.mxu0 0
        %2333 = vmatpush1.bf16.xpose.msra.mxu0 0
        %2334 = vmatprep.subr.bf16.mxu0 0
        %2335 = vmatpush1.bf16.xpose.msra.mxu0 0
        %2336 = vmatprep.subr.bf16.mxu0 0
        %2337 = vmatpush1.bf16.xpose.msra.mxu0 0
        %2338 = vmatprep.subr.bf16.mxu0 0
        %2339 = vmatpush1.bf16.xpose.msra.mxu0 0
        %2340 = vmatprep.subr.bf16.mxu0 0
        %2341 = vmatpush1.bf16.xpose.msra.mxu0 0
        %2342 = vmatprep.subr.bf16.mxu0 0
        %2343 = vmatpush1.bf16.xpose.msra.mxu0 0
        %2344 = vmatprep.subr.bf16.mxu0 0
        %2345 = vmatpush1.bf16.xpose.msra.mxu0 0
        %2346 = vmatprep.subr.bf16.mxu0 0
        %2347 = vmatpush1.bf16.xpose.msra.mxu0 0
        %2348 = vmatprep.subr.bf16.mxu0 0
        %2349 = vmatpush1.bf16.xpose.msra.mxu0 0
        %2350 = vmatprep.subr.bf16.mxu0 0
        %2351 = vmatpush1.bf16.xpose.msra.mxu0 0
        %2352 = vmatprep.mubr.bf16.mxu0 0
        %2353 = vmatmul.mubr.bf16.gmra.mrb[0].mxu0 %v2315
        %v2354 = vpop.f32.mrb[0].mxu0
        %v2355 = vadd.f32 0.0, %v2354
        %v2356 = vpop.f32.mrb[0].mxu0
        %v2357 = vpop.f32.mrb[0].mxu0
        %v2358 = vadd.f32 0.0, %v2357
        %v2359 = vpop.f32.mrb[0].mxu0
        %2360 = vdwg.mxu0
        %2361 = vrot.lane.b32.xlu0 %v860, 32
        %v2362 = vpop.permute.xlu0 %2361
        %2363 = vrot.lane.b32.xlu0 %v862, 32
        %v2364 = vpop.permute.xlu0 %2363
        %v2366 = vsel %vm865, %v2362, 0
        %v2369 = vsel %vm865, %v2364, 0
        %2371 = vmatprep.subr.bf16.mxu0 0
        %2372 = vmatpush1.bf16.xpose.msra.mxu0 %v2369
        %2373 = vmatprep.subr.bf16.mxu0 0
        %2374 = vmatpush1.bf16.xpose.msra.mxu0 0
        %2375 = vmatprep.subr.bf16.mxu0 0
        %2376 = vmatpush1.bf16.xpose.msra.mxu0 0
        %2377 = vmatprep.subr.bf16.mxu0 0
        %2378 = vmatpush1.bf16.xpose.msra.mxu0 0
        %2379 = vmatprep.subr.bf16.mxu0 0
        %2380 = vmatpush1.bf16.xpose.msra.mxu0 0
        %2381 = vmatprep.subr.bf16.mxu0 0
        %2382 = vmatpush1.bf16.xpose.msra.mxu0 0
        %2383 = vmatprep.subr.bf16.mxu0 0
        %2384 = vmatpush1.bf16.xpose.msra.mxu0 0
        %2385 = vmatprep.subr.bf16.mxu0 0
        %2386 = vmatpush1.bf16.xpose.msra.mxu0 0
        %2387 = vmatprep.subr.bf16.mxu0 0
        %2388 = vmatpush1.bf16.xpose.msra.mxu0 0
        %2389 = vmatprep.subr.bf16.mxu0 0
        %2390 = vmatpush1.bf16.xpose.msra.mxu0 0
        %2391 = vmatprep.subr.bf16.mxu0 0
        %2392 = vmatpush1.bf16.xpose.msra.mxu0 0
        %2393 = vmatprep.subr.bf16.mxu0 0
        %2394 = vmatpush1.bf16.xpose.msra.mxu0 0
        %2395 = vmatprep.subr.bf16.mxu0 0
        %2396 = vmatpush1.bf16.xpose.msra.mxu0 0
        %2397 = vmatprep.subr.bf16.mxu0 0
        %2398 = vmatpush1.bf16.xpose.msra.mxu0 0
        %2399 = vmatprep.subr.bf16.mxu0 0
        %2400 = vmatpush1.bf16.xpose.msra.mxu0 0
        %2401 = vmatprep.subr.bf16.mxu0 0
        %2402 = vmatpush1.bf16.xpose.msra.mxu0 0
        %2403 = vmatprep.mubr.bf16.mxu0 0
        %2404 = vmatmul.mubr.bf16.gmra.mrb[0].mxu0 %v2366
        %v2405 = vpop.f32.mrb[0].mxu0
        %v2406 = vadd.f32 0.0, %v2405
        %v2407 = vpop.f32.mrb[0].mxu0
        %v2408 = vpop.f32.mrb[0].mxu0
        %v2409 = vadd.f32 0.0, %v2408
        %v2410 = vpop.f32.mrb[0].mxu0
        %2411 = vdwg.mxu0
        %v2412 = vsel %vm865, %v2355, -inf
        %2413 = vmax.xlane.f32.xlu0 %v2412
        %v2414 = vpop.xlane.xlu0 %2413
        %v2415 = vsel %vm865, %v2358, -inf
        %2416 = vmax.xlane.f32.xlu0 %v2415
        %v2417 = vpop.xlane.xlu0 %2416
        %v2418 = vsel %vm865, %v2406, -inf
        %2419 = vmax.xlane.f32.xlu0 %v2418
        %v2420 = vpop.xlane.xlu0 %2419
        %v2421 = vsel %vm865, %v2409, -inf
        %2422 = vmax.xlane.f32.xlu0 %v2421
        %v2423 = vpop.xlane.xlu0 %2422
        %v2424 = vsub.f32 %v2355, %v2414
        %v2425 = vsub.f32 %v2358, %v2417
        %v2426 = vsub.f32 %v2406, %v2420
        %v2427 = vsub.f32 %v2409, %v2423
        %v2428 = vmul.f32 %v2424, 1.442695
        %v2429 = vpow.pop %v2428
        %v2430 = vmul.f32 %v2425, 1.442695
        %v2431 = vpow.pop %v2430
        %v2432 = vmul.f32 %v2426, 1.442695
        %v2433 = vpow.pop %v2432
        %v2434 = vmul.f32 %v2427, 1.442695
        %v2435 = vpow.pop %v2434
        %v2436 = vsel %vm865, %v2429, 0.0
        %2437 = vadd.xlane.f32.xlu0 %v2436
        %v2438 = vpop.xlane.xlu0 %2437
        %v2439 = vsel %vm865, %v2431, 0.0
        %2440 = vadd.xlane.f32.xlu0 %v2439
        %v2441 = vpop.xlane.xlu0 %2440
        %v2442 = vsel %vm865, %v2433, 0.0
        %2443 = vadd.xlane.f32.xlu0 %v2442
        %v2444 = vpop.xlane.xlu0 %2443
        %v2445 = vsel %vm865, %v2435, 0.0
        %2446 = vadd.xlane.f32.xlu0 %v2445
        %v2447 = vpop.xlane.xlu0 %2446
        %v2448 = vrcp.pop %v2438
        %v2449 = vmul.f32 %v2429, %v2448
        %v2450 = vrcp.pop %v2441
        %v2451 = vmul.f32 %v2431, %v2450
        %v2452 = vrcp.pop %v2444
        %v2453 = vmul.f32 %v2433, %v2452
        %v2454 = vrcp.pop %v2447
        %v2455 = vmul.f32 %v2435, %v2454
        %v2456 = vpack.c.bf16 %v2451, %v2449
        %v2457 = vpack.c.bf16 %v2455, %v2453
        %2458 = vrot.lane.b32.xlu0 %v863, 32
        %v2459 = vpop.permute.xlu0 %2458
        %v2462 = vsel %vm865, %v2456, 0
        %2464 = vmatprep.subr.bf16.mxu0 0
        %2465 = vmatpush1.bf16.msra.mxu0 %v2459
        %2466 = vmatprep.subr.bf16.mxu0 0
        %2467 = vmatpush1.bf16.msra.mxu0 0
        %2468 = vmatprep.subr.bf16.mxu0 0
        %2469 = vmatpush1.bf16.msra.mxu0 0
        %2470 = vmatprep.subr.bf16.mxu0 0
        %2471 = vmatpush1.bf16.msra.mxu0 0
        %2472 = vmatprep.subr.bf16.mxu0 0
        %2473 = vmatpush1.bf16.msra.mxu0 0
        %2474 = vmatprep.subr.bf16.mxu0 0
        %2475 = vmatpush1.bf16.msra.mxu0 0
        %2476 = vmatprep.subr.bf16.mxu0 0
        %2477 = vmatpush1.bf16.msra.mxu0 0
        %2478 = vmatprep.subr.bf16.mxu0 0
        %2479 = vmatpush1.bf16.msra.mxu0 0
        %2480 = vmatprep.subr.bf16.mxu0 0
        %2481 = vmatpush1.bf16.msra.mxu0 0
        %2482 = vmatprep.subr.bf16.mxu0 0
        %2483 = vmatpush1.bf16.msra.mxu0 0
        %2484 = vmatprep.subr.bf16.mxu0 0
        %2485 = vmatpush1.bf16.msra.mxu0 0
        %2486 = vmatprep.subr.bf16.mxu0 0
        %2487 = vmatpush1.bf16.msra.mxu0 0
        %2488 = vmatprep.subr.bf16.mxu0 0
        %2489 = vmatpush1.bf16.msra.mxu0 0
        %2490 = vmatprep.subr.bf16.mxu0 0
        %2491 = vmatpush1.bf16.msra.mxu0 0
        %2492 = vmatprep.subr.bf16.mxu0 0
        %2493 = vmatpush1.bf16.msra.mxu0 0
        %2494 = vmatprep.subr.bf16.mxu0 0
        %2495 = vmatpush1.bf16.msra.mxu0 0
        %2496 = vmatprep.mubr.bf16.mxu0 0
        %2497 = vmatmul.mubr.bf16.gmra.mrb[0].mxu0 %v2462
        %v2498 = vpop.f32.mrb[0].mxu0
        %v2499 = vadd.f32 0.0, %v2498
        %v2500 = vpop.f32.mrb[0].mxu0
        %v2501 = vpop.f32.mrb[0].mxu0
        %v2502 = vadd.f32 0.0, %v2501
        %v2503 = vpop.f32.mrb[0].mxu0
        %2504 = vdwg.mxu0
        %2505 = vrot.lane.b32.xlu0 %v864, 32
        %v2506 = vpop.permute.xlu0 %2505
        %v2509 = vsel %vm865, %v2457, 0
        %2511 = vmatprep.subr.bf16.mxu0 0
        %2512 = vmatpush1.bf16.msra.mxu0 %v2506
        %2513 = vmatprep.subr.bf16.mxu0 0
        %2514 = vmatpush1.bf16.msra.mxu0 0
        %2515 = vmatprep.subr.bf16.mxu0 0
        %2516 = vmatpush1.bf16.msra.mxu0 0
        %2517 = vmatprep.subr.bf16.mxu0 0
        %2518 = vmatpush1.bf16.msra.mxu0 0
        %2519 = vmatprep.subr.bf16.mxu0 0
        %2520 = vmatpush1.bf16.msra.mxu0 0
        %2521 = vmatprep.subr.bf16.mxu0 0
        %2522 = vmatpush1.bf16.msra.mxu0 0
        %2523 = vmatprep.subr.bf16.mxu0 0
        %2524 = vmatpush1.bf16.msra.mxu0 0
        %2525 = vmatprep.subr.bf16.mxu0 0
        %2526 = vmatpush1.bf16.msra.mxu0 0
        %2527 = vmatprep.subr.bf16.mxu0 0
        %2528 = vmatpush1.bf16.msra.mxu0 0
        %2529 = vmatprep.subr.bf16.mxu0 0
        %2530 = vmatpush1.bf16.msra.mxu0 0
        %2531 = vmatprep.subr.bf16.mxu0 0
        %2532 = vmatpush1.bf16.msra.mxu0 0
        %2533 = vmatprep.subr.bf16.mxu0 0
        %2534 = vmatpush1.bf16.msra.mxu0 0
        %2535 = vmatprep.subr.bf16.mxu0 0
        %2536 = vmatpush1.bf16.msra.mxu0 0
        %2537 = vmatprep.subr.bf16.mxu0 0
        %2538 = vmatpush1.bf16.msra.mxu0 0
        %2539 = vmatprep.subr.bf16.mxu0 0
        %2540 = vmatpush1.bf16.msra.mxu0 0
        %2541 = vmatprep.subr.bf16.mxu0 0
        %2542 = vmatpush1.bf16.msra.mxu0 0
        %2543 = vmatprep.mubr.bf16.mxu0 0
        %2544 = vmatmul.mubr.bf16.gmra.mrb[0].mxu0 %v2509
        %v2545 = vpop.f32.mrb[0].mxu0
        %v2546 = vadd.f32 0.0, %v2545
        %v2547 = vpop.f32.mrb[0].mxu0
        %v2548 = vpop.f32.mrb[0].mxu0
        %v2549 = vadd.f32 0.0, %v2548
        %v2550 = vpop.f32.mrb[0].mxu0
        %2551 = vdwg.mxu0
        %2552 = vrot.lane.b32.xlu0 %v859, 16
        %v2553 = vpop.permute.xlu0 %2552
        %2554 = vrot.lane.b32.xlu0 %v861, 16
        %v2555 = vpop.permute.xlu0 %2554
        %v2557 = vsel %vm865, %v2553, 0
        %v2560 = vsel %vm865, %v2555, 0
        %2562 = vmatprep.subr.bf16.mxu0 0
        %2563 = vmatpush1.bf16.xpose.msra.mxu0 %v2560
        %2564 = vmatprep.subr.bf16.mxu0 0
        %2565 = vmatpush1.bf16.xpose.msra.mxu0 0
        %2566 = vmatprep.subr.bf16.mxu0 0
        %2567 = vmatpush1.bf16.xpose.msra.mxu0 0
        %2568 = vmatprep.subr.bf16.mxu0 0
        %2569 = vmatpush1.bf16.xpose.msra.mxu0 0
        %2570 = vmatprep.subr.bf16.mxu0 0
        %2571 = vmatpush1.bf16.xpose.msra.mxu0 0
        %2572 = vmatprep.subr.bf16.mxu0 0
        %2573 = vmatpush1.bf16.xpose.msra.mxu0 0
        %2574 = vmatprep.subr.bf16.mxu0 0
        %2575 = vmatpush1.bf16.xpose.msra.mxu0 0
        %2576 = vmatprep.subr.bf16.mxu0 0
        %2577 = vmatpush1.bf16.xpose.msra.mxu0 0
        %2578 = vmatprep.subr.bf16.mxu0 0
        %2579 = vmatpush1.bf16.xpose.msra.mxu0 0
        %2580 = vmatprep.subr.bf16.mxu0 0
        %2581 = vmatpush1.bf16.xpose.msra.mxu0 0
        %2582 = vmatprep.subr.bf16.mxu0 0
        %2583 = vmatpush1.bf16.xpose.msra.mxu0 0
        %2584 = vmatprep.subr.bf16.mxu0 0
        %2585 = vmatpush1.bf16.xpose.msra.mxu0 0
        %2586 = vmatprep.subr.bf16.mxu0 0
        %2587 = vmatpush1.bf16.xpose.msra.mxu0 0
        %2588 = vmatprep.subr.bf16.mxu0 0
        %2589 = vmatpush1.bf16.xpose.msra.mxu0 0
        %2590 = vmatprep.subr.bf16.mxu0 0
        %2591 = vmatpush1.bf16.xpose.msra.mxu0 0
        %2592 = vmatprep.subr.bf16.mxu0 0
        %2593 = vmatpush1.bf16.xpose.msra.mxu0 0
        %2594 = vmatprep.mubr.bf16.mxu0 0
        %2595 = vmatmul.mubr.bf16.gmra.mrb[0].mxu0 %v2557
        %v2596 = vpop.f32.mrb[0].mxu0
        %v2597 = vadd.f32 0.0, %v2596
        %v2598 = vpop.f32.mrb[0].mxu0
        %v2599 = vpop.f32.mrb[0].mxu0
        %v2600 = vadd.f32 0.0, %v2599
        %v2601 = vpop.f32.mrb[0].mxu0
        %2602 = vdwg.mxu0
        %2603 = vrot.lane.b32.xlu0 %v860, 16
        %v2604 = vpop.permute.xlu0 %2603
        %2605 = vrot.lane.b32.xlu0 %v862, 16
        %v2606 = vpop.permute.xlu0 %2605
        %v2608 = vsel %vm865, %v2604, 0
        %v2611 = vsel %vm865, %v2606, 0
        %2613 = vmatprep.subr.bf16.mxu0 0
        %2614 = vmatpush1.bf16.xpose.msra.mxu0 %v2611
        %2615 = vmatprep.subr.bf16.mxu0 0
        %2616 = vmatpush1.bf16.xpose.msra.mxu0 0
        %2617 = vmatprep.subr.bf16.mxu0 0
        %2618 = vmatpush1.bf16.xpose.msra.mxu0 0
        %2619 = vmatprep.subr.bf16.mxu0 0
        %2620 = vmatpush1.bf16.xpose.msra.mxu0 0
        %2621 = vmatprep.subr.bf16.mxu0 0
        %2622 = vmatpush1.bf16.xpose.msra.mxu0 0
        %2623 = vmatprep.subr.bf16.mxu0 0
        %2624 = vmatpush1.bf16.xpose.msra.mxu0 0
        %2625 = vmatprep.subr.bf16.mxu0 0
        %2626 = vmatpush1.bf16.xpose.msra.mxu0 0
        %2627 = vmatprep.subr.bf16.mxu0 0
        %2628 = vmatpush1.bf16.xpose.msra.mxu0 0
        %2629 = vmatprep.subr.bf16.mxu0 0
        %2630 = vmatpush1.bf16.xpose.msra.mxu0 0
        %2631 = vmatprep.subr.bf16.mxu0 0
        %2632 = vmatpush1.bf16.xpose.msra.mxu0 0
        %2633 = vmatprep.subr.bf16.mxu0 0
        %2634 = vmatpush1.bf16.xpose.msra.mxu0 0
        %2635 = vmatprep.subr.bf16.mxu0 0
        %2636 = vmatpush1.bf16.xpose.msra.mxu0 0
        %2637 = vmatprep.subr.bf16.mxu0 0
        %2638 = vmatpush1.bf16.xpose.msra.mxu0 0
        %2639 = vmatprep.subr.bf16.mxu0 0
        %2640 = vmatpush1.bf16.xpose.msra.mxu0 0
        %2641 = vmatprep.subr.bf16.mxu0 0
        %2642 = vmatpush1.bf16.xpose.msra.mxu0 0
        %2643 = vmatprep.subr.bf16.mxu0 0
        %2644 = vmatpush1.bf16.xpose.msra.mxu0 0
        %2645 = vmatprep.mubr.bf16.mxu0 0
        %2646 = vmatmul.mubr.bf16.gmra.mrb[0].mxu0 %v2608
        %v2647 = vpop.f32.mrb[0].mxu0
        %v2648 = vadd.f32 0.0, %v2647
        %v2649 = vpop.f32.mrb[0].mxu0
        %v2650 = vpop.f32.mrb[0].mxu0
        %v2651 = vadd.f32 0.0, %v2650
        %v2652 = vpop.f32.mrb[0].mxu0
        %2653 = vdwg.mxu0
        %v2654 = vsel %vm865, %v2597, -inf
        %2655 = vmax.xlane.f32.xlu0 %v2654
        %v2656 = vpop.xlane.xlu0 %2655
        %v2657 = vsel %vm865, %v2600, -inf
        %2658 = vmax.xlane.f32.xlu0 %v2657
        %v2659 = vpop.xlane.xlu0 %2658
        %v2660 = vsel %vm865, %v2648, -inf
        %2661 = vmax.xlane.f32.xlu0 %v2660
        %v2662 = vpop.xlane.xlu0 %2661
        %v2663 = vsel %vm865, %v2651, -inf
        %2664 = vmax.xlane.f32.xlu0 %v2663
        %v2665 = vpop.xlane.xlu0 %2664
        %v2666 = vsub.f32 %v2597, %v2656
        %v2667 = vsub.f32 %v2600, %v2659
        %v2668 = vsub.f32 %v2648, %v2662
        %v2669 = vsub.f32 %v2651, %v2665
        %v2670 = vmul.f32 %v2666, 1.442695
        %v2671 = vpow.pop %v2670
        %v2672 = vmul.f32 %v2667, 1.442695
        %v2673 = vpow.pop %v2672
        %v2674 = vmul.f32 %v2668, 1.442695
        %v2675 = vpow.pop %v2674
        %v2676 = vmul.f32 %v2669, 1.442695
        %v2677 = vpow.pop %v2676
        %v2678 = vsel %vm865, %v2671, 0.0
        %2679 = vadd.xlane.f32.xlu0 %v2678
        %v2680 = vpop.xlane.xlu0 %2679
        %v2681 = vsel %vm865, %v2673, 0.0
        %2682 = vadd.xlane.f32.xlu0 %v2681
        %v2683 = vpop.xlane.xlu0 %2682
        %v2684 = vsel %vm865, %v2675, 0.0
        %2685 = vadd.xlane.f32.xlu0 %v2684
        %v2686 = vpop.xlane.xlu0 %2685
        %v2687 = vsel %vm865, %v2677, 0.0
        %2688 = vadd.xlane.f32.xlu0 %v2687
        %v2689 = vpop.xlane.xlu0 %2688
        %v2690 = vrcp.pop %v2680
        %v2691 = vmul.f32 %v2671, %v2690
        %v2692 = vrcp.pop %v2683
        %v2693 = vmul.f32 %v2673, %v2692
        %v2694 = vrcp.pop %v2686
        %v2695 = vmul.f32 %v2675, %v2694
        %v2696 = vrcp.pop %v2689
        %v2697 = vmul.f32 %v2677, %v2696
        %v2698 = vpack.c.bf16 %v2693, %v2691
        %v2699 = vpack.c.bf16 %v2697, %v2695
        %2700 = vrot.lane.b32.xlu0 %v863, 16
        %v2701 = vpop.permute.xlu0 %2700
        %v2704 = vsel %vm865, %v2698, 0
        %2706 = vmatprep.subr.bf16.mxu0 0
        %2707 = vmatpush1.bf16.msra.mxu0 %v2701
        %2708 = vmatprep.subr.bf16.mxu0 0
        %2709 = vmatpush1.bf16.msra.mxu0 0
        %2710 = vmatprep.subr.bf16.mxu0 0
        %2711 = vmatpush1.bf16.msra.mxu0 0
        %2712 = vmatprep.subr.bf16.mxu0 0
        %2713 = vmatpush1.bf16.msra.mxu0 0
        %2714 = vmatprep.subr.bf16.mxu0 0
        %2715 = vmatpush1.bf16.msra.mxu0 0
        %2716 = vmatprep.subr.bf16.mxu0 0
        %2717 = vmatpush1.bf16.msra.mxu0 0
        %2718 = vmatprep.subr.bf16.mxu0 0
        %2719 = vmatpush1.bf16.msra.mxu0 0
        %2720 = vmatprep.subr.bf16.mxu0 0
        %2721 = vmatpush1.bf16.msra.mxu0 0
        %2722 = vmatprep.subr.bf16.mxu0 0
        %2723 = vmatpush1.bf16.msra.mxu0 0
        %2724 = vmatprep.subr.bf16.mxu0 0
        %2725 = vmatpush1.bf16.msra.mxu0 0
        %2726 = vmatprep.subr.bf16.mxu0 0
        %2727 = vmatpush1.bf16.msra.mxu0 0
        %2728 = vmatprep.subr.bf16.mxu0 0
        %2729 = vmatpush1.bf16.msra.mxu0 0
        %2730 = vmatprep.subr.bf16.mxu0 0
        %2731 = vmatpush1.bf16.msra.mxu0 0
        %2732 = vmatprep.subr.bf16.mxu0 0
        %2733 = vmatpush1.bf16.msra.mxu0 0
        %2734 = vmatprep.subr.bf16.mxu0 0
        %2735 = vmatpush1.bf16.msra.mxu0 0
        %2736 = vmatprep.subr.bf16.mxu0 0
        %2737 = vmatpush1.bf16.msra.mxu0 0
        %2738 = vmatprep.mubr.bf16.mxu0 0
        %2739 = vmatmul.mubr.bf16.gmra.mrb[0].mxu0 %v2704
        %v2740 = vpop.f32.mrb[0].mxu0
        %v2741 = vadd.f32 0.0, %v2740
        %v2742 = vpop.f32.mrb[0].mxu0
        %v2743 = vpop.f32.mrb[0].mxu0
        %v2744 = vadd.f32 0.0, %v2743
        %v2745 = vpop.f32.mrb[0].mxu0
        %2746 = vdwg.mxu0
        %2747 = vrot.lane.b32.xlu0 %v864, 16
        %v2748 = vpop.permute.xlu0 %2747
        %v2751 = vsel %vm865, %v2699, 0
        %2753 = vmatprep.subr.bf16.mxu0 0
        %2754 = vmatpush1.bf16.msra.mxu0 %v2748
        %2755 = vmatprep.subr.bf16.mxu0 0
        %2756 = vmatpush1.bf16.msra.mxu0 0
        %2757 = vmatprep.subr.bf16.mxu0 0
        %2758 = vmatpush1.bf16.msra.mxu0 0
        %2759 = vmatprep.subr.bf16.mxu0 0
        %2760 = vmatpush1.bf16.msra.mxu0 0
        %2761 = vmatprep.subr.bf16.mxu0 0
        %2762 = vmatpush1.bf16.msra.mxu0 0
        %2763 = vmatprep.subr.bf16.mxu0 0
        %2764 = vmatpush1.bf16.msra.mxu0 0
        %2765 = vmatprep.subr.bf16.mxu0 0
        %2766 = vmatpush1.bf16.msra.mxu0 0
        %2767 = vmatprep.subr.bf16.mxu0 0
        %2768 = vmatpush1.bf16.msra.mxu0 0
        %2769 = vmatprep.subr.bf16.mxu0 0
        %2770 = vmatpush1.bf16.msra.mxu0 0
        %2771 = vmatprep.subr.bf16.mxu0 0
        %2772 = vmatpush1.bf16.msra.mxu0 0
        %2773 = vmatprep.subr.bf16.mxu0 0
        %2774 = vmatpush1.bf16.msra.mxu0 0
        %2775 = vmatprep.subr.bf16.mxu0 0
        %2776 = vmatpush1.bf16.msra.mxu0 0
        %2777 = vmatprep.subr.bf16.mxu0 0
        %2778 = vmatpush1.bf16.msra.mxu0 0
        %2779 = vmatprep.subr.bf16.mxu0 0
        %2780 = vmatpush1.bf16.msra.mxu0 0
        %2781 = vmatprep.subr.bf16.mxu0 0
        %2782 = vmatpush1.bf16.msra.mxu0 0
        %2783 = vmatprep.subr.bf16.mxu0 0
        %2784 = vmatpush1.bf16.msra.mxu0 0
        %2785 = vmatprep.mubr.bf16.mxu0 0
        %2786 = vmatmul.mubr.bf16.gmra.mrb[0].mxu0 %v2751
        %v2787 = vpop.f32.mrb[0].mxu0
        %v2788 = vadd.f32 0.0, %v2787
        %v2789 = vpop.f32.mrb[0].mxu0
        %v2790 = vpop.f32.mrb[0].mxu0
        %v2791 = vadd.f32 0.0, %v2790
        %v2792 = vpop.f32.mrb[0].mxu0
        %2793 = vdwg.mxu0
        %2798 = vrot.lane.b32.xlu0 %v1288, 16
        %v2799 = vpop.permute.xlu0 %2798
        %2800 = vrot.lane.b32.xlu0 %v1291, 16
        %v2801 = vpop.permute.xlu0 %2800
        %2802 = vrot.lane.b32.xlu0 %v1336, 16
        %v2803 = vpop.permute.xlu0 %2802
        %2804 = vrot.lane.b32.xlu0 %v1339, 16
        %v2805 = vpop.permute.xlu0 %2804
        %2814 = vrot.lane.b32.xlu0 %v1531, 32
        %v2815 = vpop.permute.xlu0 %2814
        %2816 = vrot.lane.b32.xlu0 %v1534, 32
        %v2817 = vpop.permute.xlu0 %2816
        %2818 = vrot.lane.b32.xlu0 %v1578, 32
        %v2819 = vpop.permute.xlu0 %2818
        %2820 = vrot.lane.b32.xlu0 %v1581, 32
        %v2821 = vpop.permute.xlu0 %2820
        %2830 = vrot.lane.b32.xlu0 %v1773, 48
        %v2831 = vpop.permute.xlu0 %2830
        %2832 = vrot.lane.b32.xlu0 %v1776, 48
        %v2833 = vpop.permute.xlu0 %2832
        %2834 = vrot.lane.b32.xlu0 %v1820, 48
        %v2835 = vpop.permute.xlu0 %2834
        %2836 = vrot.lane.b32.xlu0 %v1823, 48
        %v2837 = vpop.permute.xlu0 %2836
        %2846 = vrot.lane.b32.xlu0 %v2015, 64
        %v2847 = vpop.permute.xlu0 %2846
        %2848 = vrot.lane.b32.xlu0 %v2018, 64
        %v2849 = vpop.permute.xlu0 %2848
        %2850 = vrot.lane.b32.xlu0 %v2062, 64
        %v2851 = vpop.permute.xlu0 %2850
        %2852 = vrot.lane.b32.xlu0 %v2065, 64
        %v2853 = vpop.permute.xlu0 %2852
        %2862 = vrot.lane.b32.xlu0 %v2257, 80
        %v2863 = vpop.permute.xlu0 %2862
        %2864 = vrot.lane.b32.xlu0 %v2260, 80
        %v2865 = vpop.permute.xlu0 %2864
        %2866 = vrot.lane.b32.xlu0 %v2304, 80
        %v2867 = vpop.permute.xlu0 %2866
        %2868 = vrot.lane.b32.xlu0 %v2307, 80
        %v2869 = vpop.permute.xlu0 %2868
        %2878 = vrot.lane.b32.xlu0 %v2499, 96
        %v2879 = vpop.permute.xlu0 %2878
        %2880 = vrot.lane.b32.xlu0 %v2502, 96
        %v2881 = vpop.permute.xlu0 %2880
        %2882 = vrot.lane.b32.xlu0 %v2546, 96
        %v2883 = vpop.permute.xlu0 %2882
        %2884 = vrot.lane.b32.xlu0 %v2549, 96
        %v2885 = vpop.permute.xlu0 %2884
        %2894 = vrot.lane.b32.xlu0 %v2741, 112
        %v2895 = vpop.permute.xlu0 %2894
        %2896 = vrot.lane.b32.xlu0 %v2744, 112
        %v2897 = vpop.permute.xlu0 %2896
        %2898 = vrot.lane.b32.xlu0 %v2788, 112
        %v2899 = vpop.permute.xlu0 %2898
        %2900 = vrot.lane.b32.xlu0 %v2791, 112
        %v2901 = vpop.permute.xlu0 %2900
        %v2906 = vsel %vm865, %v1044, %v2799
        %v2907 = vsel %vm865, %v1047, %v2801
        %v2908 = vsel %vm865, %v1088, %v2803
        %v2909 = vsel %vm865, %v1091, %v2805
        %vm2910 = vcmask 261120
        %v2911 = vsel %vm2910, %v2906, %v2815
        %v2912 = vsel %vm2910, %v2907, %v2817
        %v2913 = vsel %vm2910, %v2908, %v2819
        %v2914 = vsel %vm2910, %v2909, %v2821
        %vm2915 = vcmask 392192
        %v2916 = vsel %vm2915, %v2911, %v2831
        %v2917 = vsel %vm2915, %v2912, %v2833
        %v2918 = vsel %vm2915, %v2913, %v2835
        %v2919 = vsel %vm2915, %v2914, %v2837
        %vm2920 = vcmask 523264
        %v2921 = vsel %vm2920, %v2916, %v2847
        %v2922 = vsel %vm2920, %v2917, %v2849
        %v2923 = vsel %vm2920, %v2918, %v2851
        %v2924 = vsel %vm2920, %v2919, %v2853
        %vm2925 = vcmask 654336
        %v2926 = vsel %vm2925, %v2921, %v2863
        %v2927 = vsel %vm2925, %v2922, %v2865
        %v2928 = vsel %vm2925, %v2923, %v2867
        %v2929 = vsel %vm2925, %v2924, %v2869
        %vm2930 = vcmask 785408
        %v2931 = vsel %vm2930, %v2926, %v2879
        %v2932 = vsel %vm2930, %v2927, %v2881
        %v2933 = vsel %vm2930, %v2928, %v2883
        %v2934 = vsel %vm2930, %v2929, %v2885
        %vm2935 = vcmask 916480
        %v2936 = vsel %vm2935, %v2931, %v2895
        %v2937 = vsel %vm2935, %v2932, %v2897
        %v2938 = vsel %vm2935, %v2933, %v2899
        %v2939 = vsel %vm2935, %v2934, %v2901
        %v2940 = vpack.c.bf16 %v2937, %v2936
        %v2941 = vpack.c.bf16 %v2939, %v2938
        %v2942 = vlaneseq
        %v2943 = vshrl.u32 %v2942, 7
        %v2944 = vsub.s32 3, %v2943
        %v2945 = vrot.slane %v601, %v2944
        %v2962 = vunpack.c.l.b16 %v488
        %v2963 = vunpack.c.l.b16 %v489
        %v2964 = vunpack.c.l.b16 %v490
        %v2965 = vunpack.c.l.b16 %v491
        %v2966 = vunpack.c.l.b16 %v492
        %v2967 = vunpack.c.l.b16 %v493
        %v2968 = vunpack.c.l.b16 %v494
        %v2969 = vunpack.c.l.b16 %v495
        %v2970 = vunpack.c.l.b16 %v496
        %v2971 = vunpack.c.l.b16 %v497
        %v2972 = vunpack.c.l.b16 %v498
        %v2973 = vunpack.c.l.b16 %v499
        %v2974 = vunpack.c.l.b16 %v500
        %v2975 = vunpack.c.l.b16 %v501
        %v2976 = vunpack.c.l.b16 %v502
        %v2977 = vunpack.c.l.b16 %v503
        %v2978 = vpack.c.b16 %v2963, %v2962
        %v2979 = vpack.c.b16 %v2965, %v2964
        %v2980 = vpack.c.b16 %v2967, %v2966
        %v2981 = vpack.c.b16 %v2969, %v2968
        %v2982 = vpack.c.b16 %v2971, %v2970
        %v2983 = vpack.c.b16 %v2973, %v2972
        %v2984 = vpack.c.b16 %v2975, %v2974
        %v2985 = vpack.c.b16 %v2977, %v2976
        %2994 = vmatprep.subr.bf16.mxu0 0
        %2995 = vmatpush1.bf16.msra.mxu0 %v2978
        %2996 = vmatprep.subr.bf16.mxu0 0
        %2997 = vmatpush1.bf16.msra.mxu0 %v2979
        %2998 = vmatprep.subr.bf16.mxu0 0
        %2999 = vmatpush1.bf16.msra.mxu0 %v2980
        %3000 = vmatprep.subr.bf16.mxu0 0
        %3001 = vmatpush1.bf16.msra.mxu0 %v2981
        %3002 = vmatprep.subr.bf16.mxu0 0
        %3003 = vmatpush1.bf16.msra.mxu0 %v2982
        %3004 = vmatprep.subr.bf16.mxu0 0
        %3005 = vmatpush1.bf16.msra.mxu0 %v2983
        %3006 = vmatprep.subr.bf16.mxu0 0
        %3007 = vmatpush1.bf16.msra.mxu0 %v2984
        %3008 = vmatprep.subr.bf16.mxu0 0
        %3009 = vmatpush1.bf16.msra.mxu0 %v2985
        %3010 = vmatprep.subr.bf16.mxu0 0
        %3011 = vmatpush1.bf16.msra.mxu0 0
        %3012 = vmatprep.subr.bf16.mxu0 0
        %3013 = vmatpush1.bf16.msra.mxu0 0
        %3014 = vmatprep.subr.bf16.mxu0 0
        %3015 = vmatpush1.bf16.msra.mxu0 0
        %3016 = vmatprep.subr.bf16.mxu0 0
        %3017 = vmatpush1.bf16.msra.mxu0 0
        %3018 = vmatprep.subr.bf16.mxu0 0
        %3019 = vmatpush1.bf16.msra.mxu0 0
        %3020 = vmatprep.subr.bf16.mxu0 0
        %3021 = vmatpush1.bf16.msra.mxu0 0
        %3022 = vmatprep.subr.bf16.mxu0 0
        %3023 = vmatpush1.bf16.msra.mxu0 0
        %3024 = vmatprep.subr.bf16.mxu0 0
        %3025 = vmatpush1.bf16.msra.mxu0 0
        %3026 = vmatprep.mubr.bf16.mxu0 0
        %3027 = vmatmul.mubr.bf16.gmra.mrb[0].mxu0 %v2940
        %v3028 = vpop.f32.mrb[0].mxu0
        %v3029 = vadd.f32 %v2945, %v3028
        %v3030 = vpop.f32.mrb[0].mxu0
        %v3031 = vpop.f32.mrb[0].mxu0
        %v3032 = vadd.f32 %v2945, %v3031
        %v3033 = vpop.f32.mrb[0].mxu0
        %3034 = vmatprep.mubr.bf16.mxu0 0
        %3035 = vmatmul.mubr.bf16.gmra.mrb[0].mxu0 %v2941
        %v3036 = vpop.f32.mrb[0].mxu0
        %v3037 = vadd.f32 %v2945, %v3036
        %v3038 = vpop.f32.mrb[0].mxu0
        %v3039 = vpop.f32.mrb[0].mxu0
        %v3040 = vadd.f32 %v2945, %v3039
        %v3041 = vpop.f32.mrb[0].mxu0
        %3042 = vdwg.mxu0
        %v3043 = vadd.f32 %v452, %v3029
        %v3044 = vadd.f32 %v453, %v3032
        %v3045 = vadd.f32 %v454, %v3037
        %v3046 = vadd.f32 %v455, %v3040
        %3047 = vadd.xlane.f32.xlu0 %v3043
        %v3048 = vpop.xlane.xlu0 %3047
        %3049 = vadd.xlane.f32.xlu0 %v3044
        %v3050 = vpop.xlane.xlu0 %3049
        %3051 = vadd.xlane.f32.xlu0 %v3045
        %v3052 = vpop.xlane.xlu0 %3051
        %3053 = vadd.xlane.f32.xlu0 %v3046
        %v3054 = vpop.xlane.xlu0 %3053
        %v3055 = vrcp.pop 128.0
        %v3056 = vmul.f32 %v3048, %v3055
        %v3057 = vmul.f32 %v3050, %v3055
        %v3058 = vmul.f32 %v3052, %v3055
        %v3059 = vmul.f32 %v3054, %v3055
        %v3060 = vsub.f32 %v3043, %v3056
        %v3061 = vsub.f32 %v3044, %v3057
        %v3062 = vsub.f32 %v3045, %v3058
        %v3063 = vsub.f32 %v3046, %v3059
        %v3064 = vmul.f32 %v3060, %v3060
        %v3065 = vmul.f32 %v3061, %v3061
        %v3066 = vmul.f32 %v3062, %v3062
        %v3067 = vmul.f32 %v3063, %v3063
        %3068 = vadd.xlane.f32.xlu0 %v3064
        %v3069 = vpop.xlane.xlu0 %3068
        %3070 = vadd.xlane.f32.xlu0 %v3065
        %v3071 = vpop.xlane.xlu0 %3070
        %3072 = vadd.xlane.f32.xlu0 %v3066
        %v3073 = vpop.xlane.xlu0 %3072
        %3074 = vadd.xlane.f32.xlu0 %v3067
        %v3075 = vpop.xlane.xlu0 %3074
        %v3076 = vmul.f32 %v3069, %v3055
        %v3077 = vmul.f32 %v3071, %v3055
        %v3078 = vmul.f32 %v3073, %v3055
        %v3079 = vmul.f32 %v3075, %v3055
        %v3080 = vadd.f32 %v3076, 1e-05
        %v3081 = vadd.f32 %v3077, 1e-05
        %v3082 = vadd.f32 %v3078, 1e-05
        %v3083 = vadd.f32 %v3079, 1e-05
        %v3084 = vrsqrt.pop %v3080
        %v3085 = vrsqrt.pop %v3081
        %v3086 = vrsqrt.pop %v3082
        %v3087 = vrsqrt.pop %v3083
        %v3088 = vmul.f32 %v3060, %v3084
        %v3089 = vmul.f32 %v3061, %v3085
        %v3090 = vmul.f32 %v3062, %v3086
        %v3091 = vmul.f32 %v3063, %v3087
        %v3092 = vlaneseq
        %v3093 = vshrl.u32 %v3092, 7
        %v3094 = vsub.s32 5, %v3093
        %v3095 = vrot.slane %v601, %v3094
        %v3096 = vmul.f32 %v3088, %v3095
        %v3097 = vmul.f32 %v3089, %v3095
        %v3098 = vmul.f32 %v3090, %v3095
        %v3099 = vmul.f32 %v3091, %v3095
        %v3100 = vlaneseq
        %v3101 = vshrl.u32 %v3100, 7
        %v3102 = vsub.s32 6, %v3101
        %v3103 = vrot.slane %v601, %v3102
        %v3104 = vadd.f32 %v3096, %v3103
        %v3105 = vadd.f32 %v3097, %v3103
        %v3106 = vadd.f32 %v3098, %v3103
        %v3107 = vadd.f32 %v3099, %v3103
        %v3108 = vpack.c.bf16 %v3105, %v3104
        %v3109 = vpack.c.bf16 %v3107, %v3106
        %v3111 = vlaneseq
        %v3112 = vshrl.u32 %v3111, 7
        %v3113 = vsub.s32 0, %v3112
        %v3114 = vrot.slane %v600, %v3113
        %v3115 = vlaneseq
        %v3116 = vshrl.u32 %v3115, 7
        %v3117 = vsub.s32 1, %v3116
        %v3118 = vrot.slane %v600, %v3117
        %v3119 = vlaneseq
        %v3120 = vshrl.u32 %v3119, 7
        %v3121 = vsub.s32 2, %v3120
        %v3122 = vrot.slane %v600, %v3121
        %v3123 = vlaneseq
        %v3124 = vshrl.u32 %v3123, 7
        %v3125 = vsub.s32 3, %v3124
        %v3126 = vrot.slane %v600, %v3125
        %v3163 = vunpack.c.l.b16 %v504
        %v3164 = vunpack.c.h.b16 %v504
        %v3165 = vunpack.c.l.b16 %v505
        %v3166 = vunpack.c.h.b16 %v505
        %v3167 = vunpack.c.l.b16 %v506
        %v3168 = vunpack.c.h.b16 %v506
        %v3169 = vunpack.c.l.b16 %v507
        %v3170 = vunpack.c.h.b16 %v507
        %v3171 = vunpack.c.l.b16 %v508
        %v3172 = vunpack.c.h.b16 %v508
        %v3173 = vunpack.c.l.b16 %v509
        %v3174 = vunpack.c.h.b16 %v509
        %v3175 = vunpack.c.l.b16 %v510
        %v3176 = vunpack.c.h.b16 %v510
        %v3177 = vunpack.c.l.b16 %v511
        %v3178 = vunpack.c.h.b16 %v511
        %v3179 = vunpack.c.l.b16 %v512
        %v3180 = vunpack.c.h.b16 %v512
        %v3181 = vunpack.c.l.b16 %v513
        %v3182 = vunpack.c.h.b16 %v513
        %v3183 = vunpack.c.l.b16 %v514
        %v3184 = vunpack.c.h.b16 %v514
        %v3185 = vunpack.c.l.b16 %v515
        %v3186 = vunpack.c.h.b16 %v515
        %v3187 = vunpack.c.l.b16 %v516
        %v3188 = vunpack.c.h.b16 %v516
        %v3189 = vunpack.c.l.b16 %v517
        %v3190 = vunpack.c.h.b16 %v517
        %v3191 = vunpack.c.l.b16 %v518
        %v3192 = vunpack.c.h.b16 %v518
        %v3193 = vunpack.c.l.b16 %v519
        %v3194 = vunpack.c.h.b16 %v519
        %v3195 = vunpack.c.l.b16 %v520
        %v3196 = vunpack.c.h.b16 %v520
        %v3197 = vunpack.c.l.b16 %v521
        %v3198 = vunpack.c.h.b16 %v521
        %v3199 = vunpack.c.l.b16 %v522
        %v3200 = vunpack.c.h.b16 %v522
        %v3201 = vunpack.c.l.b16 %v523
        %v3202 = vunpack.c.h.b16 %v523
        %v3203 = vunpack.c.l.b16 %v524
        %v3204 = vunpack.c.h.b16 %v524
        %v3205 = vunpack.c.l.b16 %v525
        %v3206 = vunpack.c.h.b16 %v525
        %v3207 = vunpack.c.l.b16 %v526
        %v3208 = vunpack.c.h.b16 %v526
        %v3209 = vunpack.c.l.b16 %v527
        %v3210 = vunpack.c.h.b16 %v527
        %v3211 = vunpack.c.l.b16 %v528
        %v3212 = vunpack.c.h.b16 %v528
        %v3213 = vunpack.c.l.b16 %v529
        %v3214 = vunpack.c.h.b16 %v529
        %v3215 = vunpack.c.l.b16 %v530
        %v3216 = vunpack.c.h.b16 %v530
        %v3217 = vunpack.c.l.b16 %v531
        %v3218 = vunpack.c.h.b16 %v531
        %v3219 = vunpack.c.l.b16 %v532
        %v3220 = vunpack.c.h.b16 %v532
        %v3221 = vunpack.c.l.b16 %v533
        %v3222 = vunpack.c.h.b16 %v533
        %v3223 = vunpack.c.l.b16 %v534
        %v3224 = vunpack.c.h.b16 %v534
        %v3225 = vunpack.c.l.b16 %v535
        %v3226 = vunpack.c.h.b16 %v535
        %v3227 = vpack.c.b16 %v3167, %v3163
        %v3228 = vpack.c.b16 %v3168, %v3164
        %v3229 = vpack.c.b16 %v3169, %v3165
        %v3230 = vpack.c.b16 %v3170, %v3166
        %v3231 = vpack.c.b16 %v3175, %v3171
        %v3232 = vpack.c.b16 %v3176, %v3172
        %v3233 = vpack.c.b16 %v3177, %v3173
        %v3234 = vpack.c.b16 %v3178, %v3174
        %v3235 = vpack.c.b16 %v3183, %v3179
        %v3236 = vpack.c.b16 %v3184, %v3180
        %v3237 = vpack.c.b16 %v3185, %v3181
        %v3238 = vpack.c.b16 %v3186, %v3182
        %v3239 = vpack.c.b16 %v3191, %v3187
        %v3240 = vpack.c.b16 %v3192, %v3188
        %v3241 = vpack.c.b16 %v3193, %v3189
        %v3242 = vpack.c.b16 %v3194, %v3190
        %v3243 = vpack.c.b16 %v3199, %v3195
        %v3244 = vpack.c.b16 %v3200, %v3196
        %v3245 = vpack.c.b16 %v3201, %v3197
        %v3246 = vpack.c.b16 %v3202, %v3198
        %v3247 = vpack.c.b16 %v3207, %v3203
        %v3248 = vpack.c.b16 %v3208, %v3204
        %v3249 = vpack.c.b16 %v3209, %v3205
        %v3250 = vpack.c.b16 %v3210, %v3206
        %v3251 = vpack.c.b16 %v3215, %v3211
        %v3252 = vpack.c.b16 %v3216, %v3212
        %v3253 = vpack.c.b16 %v3217, %v3213
        %v3254 = vpack.c.b16 %v3218, %v3214
        %v3255 = vpack.c.b16 %v3223, %v3219
        %v3256 = vpack.c.b16 %v3224, %v3220
        %v3257 = vpack.c.b16 %v3225, %v3221
        %v3258 = vpack.c.b16 %v3226, %v3222
        %3291 = vmatprep.subr.bf16.mxu0 %v3228
        %3292 = vmatpush1.bf16.msra.mxu0 %v3227
        %3293 = vmatprep.subr.bf16.mxu0 %v3232
        %3294 = vmatpush1.bf16.msra.mxu0 %v3231
        %3295 = vmatprep.subr.bf16.mxu0 %v3236
        %3296 = vmatpush1.bf16.msra.mxu0 %v3235
        %3297 = vmatprep.subr.bf16.mxu0 %v3240
        %3298 = vmatpush1.bf16.msra.mxu0 %v3239
        %3299 = vmatprep.subr.bf16.mxu0 %v3244
        %3300 = vmatpush1.bf16.msra.mxu0 %v3243
        %3301 = vmatprep.subr.bf16.mxu0 %v3248
        %3302 = vmatpush1.bf16.msra.mxu0 %v3247
        %3303 = vmatprep.subr.bf16.mxu0 %v3252
        %3304 = vmatpush1.bf16.msra.mxu0 %v3251
        %3305 = vmatprep.subr.bf16.mxu0 %v3256
        %3306 = vmatpush1.bf16.msra.mxu0 %v3255
        %3307 = vmatprep.subr.bf16.mxu0 0
        %3308 = vmatpush1.bf16.msra.mxu0 0
        %3309 = vmatprep.subr.bf16.mxu0 0
        %3310 = vmatpush1.bf16.msra.mxu0 0
        %3311 = vmatprep.subr.bf16.mxu0 0
        %3312 = vmatpush1.bf16.msra.mxu0 0
        %3313 = vmatprep.subr.bf16.mxu0 0
        %3314 = vmatpush1.bf16.msra.mxu0 0
        %3315 = vmatprep.subr.bf16.mxu0 0
        %3316 = vmatpush1.bf16.msra.mxu0 0
        %3317 = vmatprep.subr.bf16.mxu0 0
        %3318 = vmatpush1.bf16.msra.mxu0 0
        %3319 = vmatprep.subr.bf16.mxu0 0
        %3320 = vmatpush1.bf16.msra.mxu0 0
        %3321 = vmatprep.subr.bf16.mxu0 0
        %3322 = vmatpush1.bf16.msra.mxu0 0
        %3323 = vmatprep.mubr.bf16.mxu0 0
        %3324 = vmatmul.mubr.bf16.gmra.mrb[0].mxu0 %v3108
        %v3325 = vpop.f32.mrb[0].mxu0
        %v3326 = vadd.f32 %v3114, %v3325
        %v3327 = vpop.f32.mrb[0].mxu0
        %v3328 = vadd.f32 %v3118, %v3327
        %v3329 = vpop.f32.mrb[0].mxu0
        %v3330 = vadd.f32 %v3114, %v3329
        %v3331 = vpop.f32.mrb[0].mxu0
        %v3332 = vadd.f32 %v3118, %v3331
        %3333 = vmatprep.mubr.bf16.mxu0 0
        %3334 = vmatmul.mubr.bf16.gmra.mrb[0].mxu0 %v3109
        %v3335 = vpop.f32.mrb[0].mxu0
        %v3336 = vadd.f32 %v3114, %v3335
        %v3337 = vpop.f32.mrb[0].mxu0
        %v3338 = vadd.f32 %v3118, %v3337
        %v3339 = vpop.f32.mrb[0].mxu0
        %v3340 = vadd.f32 %v3114, %v3339
        %v3341 = vpop.f32.mrb[0].mxu0
        %v3342 = vadd.f32 %v3118, %v3341
        %3343 = vdwg.mxu0
        %3344 = vmatprep.subr.bf16.mxu0 %v3230
        %3345 = vmatpush1.bf16.msra.mxu0 %v3229
        %3346 = vmatprep.subr.bf16.mxu0 %v3234
        %3347 = vmatpush1.bf16.msra.mxu0 %v3233
        %3348 = vmatprep.subr.bf16.mxu0 %v3238
        %3349 = vmatpush1.bf16.msra.mxu0 %v3237
        %3350 = vmatprep.subr.bf16.mxu0 %v3242
        %3351 = vmatpush1.bf16.msra.mxu0 %v3241
        %3352 = vmatprep.subr.bf16.mxu0 %v3246
        %3353 = vmatpush1.bf16.msra.mxu0 %v3245
        %3354 = vmatprep.subr.bf16.mxu0 %v3250
        %3355 = vmatpush1.bf16.msra.mxu0 %v3249
        %3356 = vmatprep.subr.bf16.mxu0 %v3254
        %3357 = vmatpush1.bf16.msra.mxu0 %v3253
        %3358 = vmatprep.subr.bf16.mxu0 %v3258
        %3359 = vmatpush1.bf16.msra.mxu0 %v3257
        %3360 = vmatprep.subr.bf16.mxu0 0
        %3361 = vmatpush1.bf16.msra.mxu0 0
        %3362 = vmatprep.subr.bf16.mxu0 0
        %3363 = vmatpush1.bf16.msra.mxu0 0
        %3364 = vmatprep.subr.bf16.mxu0 0
        %3365 = vmatpush1.bf16.msra.mxu0 0
        %3366 = vmatprep.subr.bf16.mxu0 0
        %3367 = vmatpush1.bf16.msra.mxu0 0
        %3368 = vmatprep.subr.bf16.mxu0 0
        %3369 = vmatpush1.bf16.msra.mxu0 0
        %3370 = vmatprep.subr.bf16.mxu0 0
        %3371 = vmatpush1.bf16.msra.mxu0 0
        %3372 = vmatprep.subr.bf16.mxu0 0
        %3373 = vmatpush1.bf16.msra.mxu0 0
        %3374 = vmatprep.subr.bf16.mxu0 0
        %3375 = vmatpush1.bf16.msra.mxu0 0
        %3376 = vmatprep.mubr.bf16.mxu0 0
        %3377 = vmatmul.mubr.bf16.gmra.mrb[0].mxu0 %v3108
        %v3378 = vpop.f32.mrb[0].mxu0
        %v3379 = vadd.f32 %v3122, %v3378
        %v3380 = vpop.f32.mrb[0].mxu0
        %v3381 = vadd.f32 %v3126, %v3380
        %v3382 = vpop.f32.mrb[0].mxu0
        %v3383 = vadd.f32 %v3122, %v3382
        %v3384 = vpop.f32.mrb[0].mxu0
        %v3385 = vadd.f32 %v3126, %v3384
        %3386 = vmatprep.mubr.bf16.mxu0 0
        %3387 = vmatmul.mubr.bf16.gmra.mrb[0].mxu0 %v3109
        %v3388 = vpop.f32.mrb[0].mxu0
        %v3389 = vadd.f32 %v3122, %v3388
        %v3390 = vpop.f32.mrb[0].mxu0
        %v3391 = vadd.f32 %v3126, %v3390
        %v3392 = vpop.f32.mrb[0].mxu0
        %v3393 = vadd.f32 %v3122, %v3392
        %v3394 = vpop.f32.mrb[0].mxu0
        %v3395 = vadd.f32 %v3126, %v3394
        %3396 = vdwg.mxu0
        %v3397 = vmax.f32 %v3326, 0.0
        %v3398 = vmax.f32 %v3328, 0.0
        %v3399 = vmax.f32 %v3379, 0.0
        %v3400 = vmax.f32 %v3381, 0.0
        %v3401 = vmax.f32 %v3330, 0.0
        %v3402 = vmax.f32 %v3332, 0.0
        %v3403 = vmax.f32 %v3383, 0.0
        %v3404 = vmax.f32 %v3385, 0.0
        %v3405 = vmax.f32 %v3336, 0.0
        %v3406 = vmax.f32 %v3338, 0.0
        %v3407 = vmax.f32 %v3389, 0.0
        %v3408 = vmax.f32 %v3391, 0.0
        %v3409 = vmax.f32 %v3340, 0.0
        %v3410 = vmax.f32 %v3342, 0.0
        %v3411 = vmax.f32 %v3393, 0.0
        %v3412 = vmax.f32 %v3395, 0.0
        %v3413 = vpack.c.bf16 %v3401, %v3397
        %v3414 = vpack.c.bf16 %v3402, %v3398
        %v3415 = vpack.c.bf16 %v3403, %v3399
        %v3416 = vpack.c.bf16 %v3404, %v3400
        %v3417 = vpack.c.bf16 %v3409, %v3405
        %v3418 = vpack.c.bf16 %v3410, %v3406
        %v3419 = vpack.c.bf16 %v3411, %v3407
        %v3420 = vpack.c.bf16 %v3412, %v3408
        %v3421 = vlaneseq
        %v3422 = vshrl.u32 %v3421, 7
        %v3423 = vsub.s32 4, %v3422
        %v3424 = vrot.slane %v601, %v3423
        %v3489 = vunpack.c.l.b16 %v536
        %v3490 = vunpack.c.l.b16 %v537
        %v3491 = vunpack.c.l.b16 %v538
        %v3492 = vunpack.c.l.b16 %v539
        %v3493 = vunpack.c.l.b16 %v540
        %v3494 = vunpack.c.l.b16 %v541
        %v3495 = vunpack.c.l.b16 %v542
        %v3496 = vunpack.c.l.b16 %v543
        %v3497 = vunpack.c.l.b16 %v544
        %v3498 = vunpack.c.l.b16 %v545
        %v3499 = vunpack.c.l.b16 %v546
        %v3500 = vunpack.c.l.b16 %v547
        %v3501 = vunpack.c.l.b16 %v548
        %v3502 = vunpack.c.l.b16 %v549
        %v3503 = vunpack.c.l.b16 %v550
        %v3504 = vunpack.c.l.b16 %v551
        %v3505 = vunpack.c.l.b16 %v552
        %v3506 = vunpack.c.l.b16 %v553
        %v3507 = vunpack.c.l.b16 %v554
        %v3508 = vunpack.c.l.b16 %v555
        %v3509 = vunpack.c.l.b16 %v556
        %v3510 = vunpack.c.l.b16 %v557
        %v3511 = vunpack.c.l.b16 %v558
        %v3512 = vunpack.c.l.b16 %v559
        %v3513 = vunpack.c.l.b16 %v560
        %v3514 = vunpack.c.l.b16 %v561
        %v3515 = vunpack.c.l.b16 %v562
        %v3516 = vunpack.c.l.b16 %v563
        %v3517 = vunpack.c.l.b16 %v564
        %v3518 = vunpack.c.l.b16 %v565
        %v3519 = vunpack.c.l.b16 %v566
        %v3520 = vunpack.c.l.b16 %v567
        %v3521 = vunpack.c.l.b16 %v568
        %v3522 = vunpack.c.l.b16 %v569
        %v3523 = vunpack.c.l.b16 %v570
        %v3524 = vunpack.c.l.b16 %v571
        %v3525 = vunpack.c.l.b16 %v572
        %v3526 = vunpack.c.l.b16 %v573
        %v3527 = vunpack.c.l.b16 %v574
        %v3528 = vunpack.c.l.b16 %v575
        %v3529 = vunpack.c.l.b16 %v576
        %v3530 = vunpack.c.l.b16 %v577
        %v3531 = vunpack.c.l.b16 %v578
        %v3532 = vunpack.c.l.b16 %v579
        %v3533 = vunpack.c.l.b16 %v580
        %v3534 = vunpack.c.l.b16 %v581
        %v3535 = vunpack.c.l.b16 %v582
        %v3536 = vunpack.c.l.b16 %v583
        %v3537 = vunpack.c.l.b16 %v584
        %v3538 = vunpack.c.l.b16 %v585
        %v3539 = vunpack.c.l.b16 %v586
        %v3540 = vunpack.c.l.b16 %v587
        %v3541 = vunpack.c.l.b16 %v588
        %v3542 = vunpack.c.l.b16 %v589
        %v3543 = vunpack.c.l.b16 %v590
        %v3544 = vunpack.c.l.b16 %v591
        %v3545 = vunpack.c.l.b16 %v592
        %v3546 = vunpack.c.l.b16 %v593
        %v3547 = vunpack.c.l.b16 %v594
        %v3548 = vunpack.c.l.b16 %v595
        %v3549 = vunpack.c.l.b16 %v596
        %v3550 = vunpack.c.l.b16 %v597
        %v3551 = vunpack.c.l.b16 %v598
        %v3552 = vunpack.c.l.b16 %v599
        %v3553 = vpack.c.b16 %v3490, %v3489
        %v3554 = vpack.c.b16 %v3492, %v3491
        %v3555 = vpack.c.b16 %v3494, %v3493
        %v3556 = vpack.c.b16 %v3496, %v3495
        %v3557 = vpack.c.b16 %v3498, %v3497
        %v3558 = vpack.c.b16 %v3500, %v3499
        %v3559 = vpack.c.b16 %v3502, %v3501
        %v3560 = vpack.c.b16 %v3504, %v3503
        %v3561 = vpack.c.b16 %v3506, %v3505
        %v3562 = vpack.c.b16 %v3508, %v3507
        %v3563 = vpack.c.b16 %v3510, %v3509
        %v3564 = vpack.c.b16 %v3512, %v3511
        %v3565 = vpack.c.b16 %v3514, %v3513
        %v3566 = vpack.c.b16 %v3516, %v3515
        %v3567 = vpack.c.b16 %v3518, %v3517
        %v3568 = vpack.c.b16 %v3520, %v3519
        %v3569 = vpack.c.b16 %v3522, %v3521
        %v3570 = vpack.c.b16 %v3524, %v3523
        %v3571 = vpack.c.b16 %v3526, %v3525
        %v3572 = vpack.c.b16 %v3528, %v3527
        %v3573 = vpack.c.b16 %v3530, %v3529
        %v3574 = vpack.c.b16 %v3532, %v3531
        %v3575 = vpack.c.b16 %v3534, %v3533
        %v3576 = vpack.c.b16 %v3536, %v3535
        %v3577 = vpack.c.b16 %v3538, %v3537
        %v3578 = vpack.c.b16 %v3540, %v3539
        %v3579 = vpack.c.b16 %v3542, %v3541
        %v3580 = vpack.c.b16 %v3544, %v3543
        %v3581 = vpack.c.b16 %v3546, %v3545
        %v3582 = vpack.c.b16 %v3548, %v3547
        %v3583 = vpack.c.b16 %v3550, %v3549
        %v3584 = vpack.c.b16 %v3552, %v3551
        %3617 = vmatprep.subr.bf16.mxu0 0
        %3618 = vmatpush1.bf16.msra.mxu0 %v3553
        %3619 = vmatprep.subr.bf16.mxu0 0
        %3620 = vmatpush1.bf16.msra.mxu0 %v3554
        %3621 = vmatprep.subr.bf16.mxu0 0
        %3622 = vmatpush1.bf16.msra.mxu0 %v3555
        %3623 = vmatprep.subr.bf16.mxu0 0
        %3624 = vmatpush1.bf16.msra.mxu0 %v3556
        %3625 = vmatprep.subr.bf16.mxu0 0
        %3626 = vmatpush1.bf16.msra.mxu0 %v3557
        %3627 = vmatprep.subr.bf16.mxu0 0
        %3628 = vmatpush1.bf16.msra.mxu0 %v3558
        %3629 = vmatprep.subr.bf16.mxu0 0
        %3630 = vmatpush1.bf16.msra.mxu0 %v3559
        %3631 = vmatprep.subr.bf16.mxu0 0
        %3632 = vmatpush1.bf16.msra.mxu0 %v3560
        %3633 = vmatprep.subr.bf16.mxu0 0
        %3634 = vmatpush1.bf16.msra.mxu0 %v3561
        %3635 = vmatprep.subr.bf16.mxu0 0
        %3636 = vmatpush1.bf16.msra.mxu0 %v3562
        %3637 = vmatprep.subr.bf16.mxu0 0
        %3638 = vmatpush1.bf16.msra.mxu0 %v3563
        %3639 = vmatprep.subr.bf16.mxu0 0
        %3640 = vmatpush1.bf16.msra.mxu0 %v3564
        %3641 = vmatprep.subr.bf16.mxu0 0
        %3642 = vmatpush1.bf16.msra.mxu0 %v3565
        %3643 = vmatprep.subr.bf16.mxu0 0
        %3644 = vmatpush1.bf16.msra.mxu0 %v3566
        %3645 = vmatprep.subr.bf16.mxu0 0
        %3646 = vmatpush1.bf16.msra.mxu0 %v3567
        %3647 = vmatprep.subr.bf16.mxu0 0
        %3648 = vmatpush1.bf16.msra.mxu0 %v3568
        %3649 = vmatprep.mubr.bf16.mxu0 %v3414
        %3650 = vmatmul.mubr.bf16.gmra.mrb[0].mxu0 %v3413
        %v3651 = vpop.f32.mrb[0].mxu0
        %v3652 = vadd.f32 %v3424, %v3651
        %v3653 = vpop.f32.mrb[0].mxu0
        %v3654 = vpop.f32.mrb[0].mxu0
        %v3655 = vadd.f32 %v3424, %v3654
        %v3656 = vpop.f32.mrb[0].mxu0
        %3657 = vmatprep.mubr.bf16.mxu0 %v3418
        %3658 = vmatmul.mubr.bf16.gmra.mrb[0].mxu0 %v3417
        %v3659 = vpop.f32.mrb[0].mxu0
        %v3660 = vadd.f32 %v3424, %v3659
        %v3661 = vpop.f32.mrb[0].mxu0
        %v3662 = vpop.f32.mrb[0].mxu0
        %v3663 = vadd.f32 %v3424, %v3662
        %v3664 = vpop.f32.mrb[0].mxu0
        %3665 = vdwg.mxu0
        %3666 = vmatprep.subr.bf16.mxu0 0
        %3667 = vmatpush1.bf16.msra.mxu0 %v3569
        %3668 = vmatprep.subr.bf16.mxu0 0
        %3669 = vmatpush1.bf16.msra.mxu0 %v3570
        %3670 = vmatprep.subr.bf16.mxu0 0
        %3671 = vmatpush1.bf16.msra.mxu0 %v3571
        %3672 = vmatprep.subr.bf16.mxu0 0
        %3673 = vmatpush1.bf16.msra.mxu0 %v3572
        %3674 = vmatprep.subr.bf16.mxu0 0
        %3675 = vmatpush1.bf16.msra.mxu0 %v3573
        %3676 = vmatprep.subr.bf16.mxu0 0
        %3677 = vmatpush1.bf16.msra.mxu0 %v3574
        %3678 = vmatprep.subr.bf16.mxu0 0
        %3679 = vmatpush1.bf16.msra.mxu0 %v3575
        %3680 = vmatprep.subr.bf16.mxu0 0
        %3681 = vmatpush1.bf16.msra.mxu0 %v3576
        %3682 = vmatprep.subr.bf16.mxu0 0
        %3683 = vmatpush1.bf16.msra.mxu0 %v3577
        %3684 = vmatprep.subr.bf16.mxu0 0
        %3685 = vmatpush1.bf16.msra.mxu0 %v3578
        %3686 = vmatprep.subr.bf16.mxu0 0
        %3687 = vmatpush1.bf16.msra.mxu0 %v3579
        %3688 = vmatprep.subr.bf16.mxu0 0
        %3689 = vmatpush1.bf16.msra.mxu0 %v3580
        %3690 = vmatprep.subr.bf16.mxu0 0
        %3691 = vmatpush1.bf16.msra.mxu0 %v3581
        %3692 = vmatprep.subr.bf16.mxu0 0
        %3693 = vmatpush1.bf16.msra.mxu0 %v3582
        %3694 = vmatprep.subr.bf16.mxu0 0
        %3695 = vmatpush1.bf16.msra.mxu0 %v3583
        %3696 = vmatprep.subr.bf16.mxu0 0
        %3697 = vmatpush1.bf16.msra.mxu0 %v3584
        %3698 = vmatprep.mubr.bf16.mxu0 %v3416
        %3699 = vmatmul.mubr.bf16.gmra.mrb[0].mxu0 %v3415
        %v3700 = vpop.f32.mrb[0].mxu0
        %v3701 = vadd.f32 %v3652, %v3700
        %v3702 = vpop.f32.mrb[0].mxu0
        %v3703 = vpop.f32.mrb[0].mxu0
        %v3704 = vadd.f32 %v3655, %v3703
        %v3705 = vpop.f32.mrb[0].mxu0
        %3706 = vmatprep.mubr.bf16.mxu0 %v3420
        %3707 = vmatmul.mubr.bf16.gmra.mrb[0].mxu0 %v3419
        %v3708 = vpop.f32.mrb[0].mxu0
        %v3709 = vadd.f32 %v3660, %v3708
        %v3710 = vpop.f32.mrb[0].mxu0
        %v3711 = vpop.f32.mrb[0].mxu0
        %v3712 = vadd.f32 %v3663, %v3711
        %v3713 = vpop.f32.mrb[0].mxu0
        %3714 = vdwg.mxu0
        %v3715 = vadd.f32 %v3104, %v3701
        %v3716 = vadd.f32 %v3105, %v3704
        %v3717 = vadd.f32 %v3106, %v3709
        %v3718 = vadd.f32 %v3107, %v3712
        %3719 = vadd.xlane.f32.xlu0 %v3715
        %v3720 = vpop.xlane.xlu0 %3719
        %3721 = vadd.xlane.f32.xlu0 %v3716
        %v3722 = vpop.xlane.xlu0 %3721
        %3723 = vadd.xlane.f32.xlu0 %v3717
        %v3724 = vpop.xlane.xlu0 %3723
        %3725 = vadd.xlane.f32.xlu0 %v3718
        %v3726 = vpop.xlane.xlu0 %3725
        %v3727 = vmul.f32 %v3720, %v3055
        %v3728 = vmul.f32 %v3722, %v3055
        %v3729 = vmul.f32 %v3724, %v3055
        %v3730 = vmul.f32 %v3726, %v3055
        %v3731 = vsub.f32 %v3715, %v3727
        %v3732 = vsub.f32 %v3716, %v3728
        %v3733 = vsub.f32 %v3717, %v3729
        %v3734 = vsub.f32 %v3718, %v3730
        %v3735 = vmul.f32 %v3731, %v3731
        %v3736 = vmul.f32 %v3732, %v3732
        %v3737 = vmul.f32 %v3733, %v3733
        %v3738 = vmul.f32 %v3734, %v3734
        %3739 = vadd.xlane.f32.xlu0 %v3735
        %v3740 = vpop.xlane.xlu0 %3739
        %3741 = vadd.xlane.f32.xlu0 %v3736
        %v3742 = vpop.xlane.xlu0 %3741
        %3743 = vadd.xlane.f32.xlu0 %v3737
        %v3744 = vpop.xlane.xlu0 %3743
        %3745 = vadd.xlane.f32.xlu0 %v3738
        %v3746 = vpop.xlane.xlu0 %3745
        %v3747 = vmul.f32 %v3740, %v3055
        %v3748 = vmul.f32 %v3742, %v3055
        %v3749 = vmul.f32 %v3744, %v3055
        %v3750 = vmul.f32 %v3746, %v3055
        %v3751 = vadd.f32 %v3747, 1e-05
        %v3752 = vadd.f32 %v3748, 1e-05
        %v3753 = vadd.f32 %v3749, 1e-05
        %v3754 = vadd.f32 %v3750, 1e-05
        %v3755 = vrsqrt.pop %v3751
        %v3756 = vrsqrt.pop %v3752
        %v3757 = vrsqrt.pop %v3753
        %v3758 = vrsqrt.pop %v3754
        %v3759 = vmul.f32 %v3731, %v3755
        %v3760 = vmul.f32 %v3732, %v3756
        %v3761 = vmul.f32 %v3733, %v3757
        %v3762 = vmul.f32 %v3734, %v3758
        %v3763 = vlaneseq
        %v3764 = vshrl.u32 %v3763, 7
        %v3765 = vsub.s32 7, %v3764
        %v3766 = vrot.slane %v601, %v3765
        %v3767 = vmul.f32 %v3759, %v3766
        %v3768 = vmul.f32 %v3760, %v3766
        %v3769 = vmul.f32 %v3761, %v3766
        %v3770 = vmul.f32 %v3762, %v3766
        %v3771 = vlaneseq
        %v3772 = vshrl.u32 %v3771, 7
        %v3773 = vsub.s32 0, %v3772
        %v3774 = vrot.slane %v602, %v3773
        %v3775 = vadd.f32 %v3767, %v3774
        %v3776 = vadd.f32 %v3768, %v3774
        %v3777 = vadd.f32 %v3769, %v3774
        %v3778 = vadd.f32 %v3770, %v3774
        %3779 = vst [vmem:[#allocation2] sm:$0xff] %v3775
        %3780 = vst [vmem:[#allocation2 + $0x8] sm:$0xff] %v3776
        %3781 = vst [vmem:[#allocation2 + $0x10] sm:$0xff] %v3777
        %3782 = vst [vmem:[#allocation2 + $0x18] sm:$0xff] %v3778
        %3783 = vst [vmem:[#allocation11] sm:$0xff] %v3775
        %3784 = vst [vmem:[#allocation11 + $0x8] sm:$0xff] %v3776
        %3785 = vst [vmem:[#allocation11 + $0x10] sm:$0xff] %v3777
        %3786 = vst [vmem:[#allocation11 + $0x18] sm:$0xff] %v3778
        // Predicated region
        $region69: #{transformer_encoder.1} parent=47 // pred_check
          %p3787 = pneg %p218
        $region70: #{transformer_encoder.1} parent=47 // pred_check_branch
          %3789 = sbr.rel (%p3787) target = $region72
        $region71: #{transformer_encoder.1} parent=47 // pred_region
          %s3791 = ssub.s32 512, 512
          %3792 = vsyncadd [#allocation5], %s3791
          %s3793 = sshll.u32 [#allocation11], 4
          %s3794 = int_to_ptr.vmem [resolvable:$true] %s3793
          %3799 = dma.vmem_to_hbm [thread:$0]  %s3794, 512, %s7, [#allocation5], 128, 128, 8
        $region72: #{transformer_encoder.1} parent=47 // pred_fallthru
          _
        // Predicated region
        $region73: #{transformer_encoder.1} parent=47 // pred_check
          %p3800 = pneg %p218
        $region74: #{transformer_encoder.1} parent=47 // pred_check_branch
          %3802 = sbr.rel (%p3800) target = $region76
        $region75: #{transformer_encoder.1} parent=47 // pred_region
          %3803 = dma.done [#allocation5], 512
        $region76: #{transformer_encoder.1} parent=47 // pred_fallthru
          _
      $region48: #{transformer_encoder.1} parent=5 // pred_fallthru
        _
      %p3804 = scmp.le.s32.totalorder 2, %s23
      // Predicated region
      $region77: #{transformer_encoder.1} parent=5 // pred_check
        %p3805 = pneg %p3804
      $region78: #{transformer_encoder.1} parent=5 // pred_check_branch
        %3807 = sbr.rel (%p3805) target = $region80
      $region79: #{transformer_encoder.1} parent=5 // pred_region
        %s3808 = ssub.s32 %s23, 2
      $region80: #{transformer_encoder.1} parent=5 // pred_fallthru
        _
    $region6: #{transformer_encoder.1} parent=1 // loop_footer
      %s27 = sadd.s32 1, %s23
    $region7: #{transformer_encoder.1} parent=1 // loop_footer_branch
      %22 = sbr.rel target = $region3
    $region8: #{transformer_encoder.1} parent=1 // loop_exit
      _
    %3809 = vsyncpa [#allocation4], 1
    %s3810 = scalar_lea.sflag [#allocation4], 1
    %3811 = vsyncpa %s3810, 1
    %3812 = vsyncpa [#allocation7], 1
    %s3813 = scalar_lea.sflag [#allocation7], 1
    %3814 = vsyncpa %s3813, 1
    %3815 = vsyncpa [#allocation10], 1
    %s3816 = scalar_lea.sflag [#allocation10], 1
    %3817 = vsyncpa %s3816, 1
    %3818 = vsyncpa [#allocation5], 1
    %s3819 = scalar_lea.sflag [#allocation5], 1
    %3820 = vsyncpa %s3819, 1

</llo_original>
